<compile_context>
chip_gen: v6e
topology: v6e:2x2x1
jax: 0.10.0
libtpu: 0.0.40
codegen_flags: <defaults>
</compile_context>

<pallas_src>
import functools

import jax
import jax.numpy as jnp
from jax.experimental import pallas as pl
from jax.experimental.pallas import tpu as pltpu


def _shift_m1(x, axis):
    """out[..., p, ...] = x[..., p-1, ...], zero-padded (conv tap k=0)."""
    n = x.shape[axis]
    zero = jnp.zeros_like(jax.lax.slice_in_dim(x, 0, 1, axis=axis))
    return jnp.concatenate(
        [zero, jax.lax.slice_in_dim(x, 0, n - 1, axis=axis)], axis=axis)


def _shift_p1(x, axis):
    """out[..., p, ...] = x[..., p+1, ...], zero-padded (conv tap k=2)."""
    n = x.shape[axis]
    zero = jnp.zeros_like(jax.lax.slice_in_dim(x, 0, 1, axis=axis))
    return jnp.concatenate(
        [jax.lax.slice_in_dim(x, 1, n, axis=axis), zero], axis=axis)


def _spatial_features_kernel(feat_ref, mask_ref, prm_ref, out_ref, *, conv_num):
    C, H, W = feat_ref.shape            # batch dim squeezed out by the BlockSpec

    # ---- packed-parameter layout (constant offsets into one SMEM vector) ----
    n12 = 12 * conv_num
    OFF_W1 = 0                          # (conv_num, 2, 2, 3) conv1 (3,1) weights
    OFF_W2 = OFF_W1 + n12               # (conv_num, 2, 2, 3) conv2 (1,3) weights
    OFF_B2 = OFF_W2 + n12               # (conv_num, 2)       conv2 bias
    OFF_A = OFF_B2 + 2 * conv_num       # (conv_num,)         PReLU slope
    OFF_WO1 = OFF_A + conv_num          # (1, 2, 3)           conv_out conv1
    OFF_WO2 = OFF_WO1 + 6               # (1, 2, 3)           conv_out conv2
    OFF_BO2 = OFF_WO2 + 6               # (1,)                conv_out conv2 bias
    OFF_WSC = OFF_BO2 + 1               # (1, 2)              conv_out 1x1 shortcut
    OFF_AO = OFF_WSC + 2                # (1,)                conv_out PReLU slope
    p = lambda i: prm_ref[i]

    # ---- adaptive avg / max pooling over W (f32 math) -----------------------
    f = feat_ref[...].astype(jnp.float32)             # (C, H, W)
    x0 = jnp.sum(f, axis=-1) * jnp.float32(1.0 / W)   # avg-pool channel (C, H)
    x1 = jnp.max(f, axis=-1)                          # max-pool channel (C, H)

    mask = mask_ref[...].astype(jnp.float32)          # (C, H)

    def asym_conv(xs, gw1, gw2, gb2, alpha, n_out, shortcuts):
        # conv1: 3 taps along C (axis 0), no bias; conv2: 3 taps along H, bias.
        taps_c = [(_shift_m1(x, 0), x, _shift_p1(x, 0)) for x in xs]
        taps_h = [(_shift_m1(x, 1), x, _shift_p1(x, 1)) for x in xs]
        outs = []
        for o in range(n_out):
            acc = None
            for i in range(len(xs)):
                for t in range(3):
                    term = (gw1(o, i, t) * taps_c[i][t]
                            + gw2(o, i, t) * taps_h[i][t])
                    acc = term if acc is None else acc + term
            acc = acc + gb2(o)                         # conv2 bias only
            y = jnp.where(acc > 0, acc, alpha * acc) * mask   # PReLU * mask
            outs.append(y + shortcuts[o])              # residual / 1x1 shortcut
        return outs

    # ---- conv_num stacked AsymmetricConvolution(2 -> 2) layers --------------
    for k in range(conv_num):
        base = k * 12
        gw1 = lambda o, i, t, b=base: p(OFF_W1 + b + o * 6 + i * 3 + t)
        gw2 = lambda o, i, t, b=base: p(OFF_W2 + b + o * 6 + i * 3 + t)
        gb2 = lambda o, kk=k: p(OFF_B2 + kk * 2 + o)
        x0, x1 = asym_conv([x0, x1], gw1, gw2, gb2, p(OFF_A + k), 2, [x0, x1])
        # F.dropout(..., p=0.0) is the identity.

    # ---- conv_out: AsymmetricConvolution(2 -> 1), 1x1-conv shortcut ---------
    gw1o = lambda o, i, t: p(OFF_WO1 + i * 3 + t)
    gw2o = lambda o, i, t: p(OFF_WO2 + i * 3 + t)
    gb2o = lambda o: p(OFF_BO2)
    shortcut = [p(OFF_WSC) * x0 + p(OFF_WSC + 1) * x1]
    (s,) = asym_conv([x0, x1], gw1o, gw2o, gb2o, p(OFF_AO), 1, shortcut)

    # ---- sigmoid scores, gate the features block in its native dtype --------
    scores = jax.nn.sigmoid(s)                         # (C, H) f32, exp on EUP
    feats = feat_ref[...]                              # re-read: short live range
    gate = scores[..., None].astype(feats.dtype)       # (C, H, 1)
    out_ref[...] = (feats * gate).astype(out_ref.dtype)


def spatial_features_forward(features, mask, params, *, conv_num):
    """JAX/Pallas equivalent of SpatialFeatures.forward (dropout p=0)."""
    B, C, H, W = features.shape
    flat_params = jnp.concatenate(
        [jnp.asarray(x, jnp.float32).reshape(-1) for x in params])

    kernel = functools.partial(_spatial_features_kernel, conv_num=conv_num)

    itemsize = jnp.dtype(features.dtype).itemsize
    block_bytes = C * H * W * itemsize
    # in + out blocks double-buffered, mask blocks, f32 working set; 2x headroom.
    vmem_need = 2 * (4 * block_bytes + 4 * C * H * itemsize + 64 * C * H * 4)
    vmem_limit = int(max(32 * 1024 * 1024, min(vmem_need, 100 * 1024 * 1024)))

    nelem = B * C * H * W
    cost = pl.CostEstimate(
        flops=int(6 * nelem + 80 * (conv_num + 1) * B * C * H),
        transcendentals=int(B * C * H),
        bytes_accessed=int(2 * nelem * itemsize
                           + B * C * H * jnp.dtype(mask.dtype).itemsize),
    )

    return pl.pallas_call(
        kernel,
        out_shape=jax.ShapeDtypeStruct((B, C, H, W), features.dtype),
        grid=(B,),
        in_specs=[
            pl.BlockSpec((None, C, H, W), lambda b: (b, 0, 0, 0)),
            pl.BlockSpec((None, C, H), lambda b: (b, 0, 0)),
            pl.BlockSpec(memory_space=pltpu.MemorySpace.SMEM),
        ],
        out_specs=pl.BlockSpec((None, C, H, W), lambda b: (b, 0, 0, 0)),
        compiler_params=pltpu.CompilerParams(
            dimension_semantics=("parallel",),
            vmem_limit_bytes=vmem_limit),
        cost_estimate=cost,
    )(features, mask, flat_params)


def _reference(features, mask, params, conv_num):
    """Pure-JAX reference (lax.conv) mirroring the PyTorch module."""
    (w1, w2, b2, alpha, wo1, wo2, bo2, wsc, alpha_o) = params
    avg = jnp.mean(features, axis=-1)
    mx = jnp.max(features, axis=-1)
    x = jnp.stack([avg, mx], axis=1)            # (B, 2, C, H)
    m = mask[:, None]                           # (B, 1, C, H)

    def conv2d(v, w, b=None):
        kh, kw = w.shape[2], w.shape[3]
        out = jax.lax.conv_general_dilated(
            v, w, window_strides=(1, 1),
            padding=((kh // 2, kh // 2), (kw // 2, kw // 2)),
            dimension_numbers=("NCHW", "OIHW", "NCHW"),
            precision=jax.lax.Precision.HIGHEST)
        if b is not None:
            out = out + b[None, :, None, None]
        return out

    def prelu(v, a):
        return jnp.where(v > 0, v, a * v)

    def asym(v, cw1, cw2, cb2, a, csc=None):
        shortcut = v if csc is None else conv2d(v, csc)
        o1 = conv2d(v, cw1)
        o2 = conv2d(v, cw2, cb2)
        return prelu(o2 + o1, a) * m + shortcut

    for k in range(conv_num):
        x = asym(x, w1[k][:, :, :, None], w2[k][:, :, None, :], b2[k], alpha[k])
    s = asym(x, wo1[:, :, :, None], wo2[:, :, None, :], bo2, alpha_o[0],
             csc=wsc[:, :, None, None])          # (B, 1, C, H)
    scores = jax.nn.sigmoid(jnp.transpose(s, (0, 2, 3, 1)))   # (B, C, H, 1)
    return scores * features


if __name__ == "__main__":
    # Small shapes consistent with the module: internal dims=2, conv_num=7.
    # W is a multiple of 128 so the dominant output store is lane-dense.
    B, C, H, W = 2, 8, 16, 128
    CONV_NUM = 7

    key = jax.random.PRNGKey(0)
    ks = jax.random.split(key, 10)

    features = jax.random.normal(ks[0], (B, C, H, W), dtype=jnp.float32)
    mask = (jax.random.uniform(ks[1], (B, C, H)) > 0.3).astype(jnp.float32)

    # Conv weight layouts: (layer, out_ch, in_ch, 3 taps). conv1 = (3,1) kernel
    # (no bias), conv2 = (1,3) kernel (with bias), wsc = 1x1 shortcut of conv_out.
    w1 = jax.random.normal(ks[2], (CONV_NUM, 2, 2, 3), dtype=jnp.float32) * 0.2
    w2 = jax.random.normal(ks[3], (CONV_NUM, 2, 2, 3), dtype=jnp.float32) * 0.2
    b2 = jax.random.normal(ks[4], (CONV_NUM, 2), dtype=jnp.float32) * 0.1
    alpha = jnp.full((CONV_NUM,), 0.25, dtype=jnp.float32)   # PReLU default init
    wo1 = jax.random.normal(ks[5], (1, 2, 3), dtype=jnp.float32) * 0.2
    wo2 = jax.random.normal(ks[6], (1, 2, 3), dtype=jnp.float32) * 0.2
    bo2 = jax.random.normal(ks[7], (1,), dtype=jnp.float32) * 0.1
    wsc = jax.random.normal(ks[8], (1, 2), dtype=jnp.float32) * 0.2
    alpha_o = jnp.full((1,), 0.25, dtype=jnp.float32)

    params = (w1, w2, b2, alpha, wo1, wo2, bo2, wsc, alpha_o)

    out = spatial_features_forward(features, mask, params, conv_num=CONV_NUM)
    jax.block_until_ready(out)

    ref = _reference(features, mask, params, CONV_NUM)
    assert out.shape == (B, C, H, W)
    assert out.dtype == features.dtype
    assert jnp.allclose(out, ref, atol=1e-4, rtol=1e-4), \
        float(jnp.max(jnp.abs(out - ref)))

    print("KERNEL_OK")
</pallas_src>

<mosaic_0001>
module attributes {stable_mosaic.version = 11 : i64} {
  func.func @_spatial_features_kernel(%arg0: i32, %arg1: memref<1x8x16x128xf32, #tpu.memory_space<vmem>>, %arg2: memref<1x8x16xf32, #tpu.memory_space<vmem>>, %arg3: memref<205xf32, #tpu.memory_space<smem>>, %arg4: memref<1x8x16x128xf32, #tpu.memory_space<vmem>>) attributes {dimension_semantics = [#tpu.dimension_semantics<parallel>], iteration_bounds = array<i64: 2>, scalar_prefetch = 0 : i64, scratch_operands = 0 : i64, tpu.core_type = #tpu.core_type<tc>, window_params = [{transform_indices = @transform_0, window_bounds = array<i64: 1, 8, 16, 128>}, {transform_indices = @transform_1, window_bounds = array<i64: 1, 8, 16>}, {transform_indices = @transform_2, window_bounds = array<i64: 205>}, {transform_indices = @transform_3, window_bounds = array<i64: 1, 8, 16, 128>}]} {
    %c0 = arith.constant 0 : index
    %c0_0 = arith.constant 0 : index
    %c0_1 = arith.constant 0 : index
    %c0_2 = arith.constant 0 : index
    %0 = vector.load %arg1[%c0, %c0_0, %c0_1, %c0_2] : memref<1x8x16x128xf32, #tpu.memory_space<vmem>>, vector<1x8x16x128xf32>
    %1 = vector.shape_cast %0 : vector<1x8x16x128xf32> to vector<8x16x128xf32>
    %cst = arith.constant dense<0.000000e+00> : vector<8x16xf32>
    %2 = vector.multi_reduction <add>, %1, %cst [2] : vector<8x16x128xf32> to vector<8x16xf32>
    %cst_3 = arith.constant 7.812500e-03 : f32
    %3 = vector.broadcast %cst_3 : f32 to vector<8x16xf32>
    %4 = arith.mulf %2, %3 : vector<8x16xf32>
    %cst_4 = arith.constant dense<0xFF800000> : vector<8x16xf32>
    %5 = vector.multi_reduction <maximumf>, %1, %cst_4 [2] : vector<8x16x128xf32> to vector<8x16xf32>
    %c0_5 = arith.constant 0 : index
    %c0_6 = arith.constant 0 : index
    %c0_7 = arith.constant 0 : index
    %6 = vector.load %arg2[%c0_5, %c0_6, %c0_7] : memref<1x8x16xf32, #tpu.memory_space<vmem>>, vector<1x8x16xf32>
    %7 = vector.shape_cast %6 : vector<1x8x16xf32> to vector<8x16xf32>
    %c182 = arith.constant 182 : index
    %8 = memref.load %arg3[%c182] : memref<205xf32, #tpu.memory_space<smem>>
    %cst_8 = arith.constant 0.000000e+00 : f32
    %9 = vector.broadcast %cst_8 : f32 to vector<1x16xf32>
    %10 = vector.extract_strided_slice %4 {offsets = [0, 0], sizes = [7, 16], strides = [1, 1]} : vector<8x16xf32> to vector<7x16xf32>
    %11 = tpu.concatenate %9, %10 in 0 : vector<1x16xf32>, vector<7x16xf32> -> vector<8x16xf32>
    %cst_9 = arith.constant 0.000000e+00 : f32
    %12 = vector.broadcast %cst_9 : f32 to vector<1x16xf32>
    %13 = vector.extract_strided_slice %4 {offsets = [1, 0], sizes = [7, 16], strides = [1, 1]} : vector<8x16xf32> to vector<7x16xf32>
    %14 = tpu.concatenate %13, %12 in 0 : vector<7x16xf32>, vector<1x16xf32> -> vector<8x16xf32>
    %cst_10 = arith.constant 0.000000e+00 : f32
    %15 = vector.broadcast %cst_10 : f32 to vector<1x16xf32>
    %16 = vector.extract_strided_slice %5 {offsets = [0, 0], sizes = [7, 16], strides = [1, 1]} : vector<8x16xf32> to vector<7x16xf32>
    %17 = tpu.concatenate %15, %16 in 0 : vector<1x16xf32>, vector<7x16xf32> -> vector<8x16xf32>
    %cst_11 = arith.constant 0.000000e+00 : f32
    %18 = vector.broadcast %cst_11 : f32 to vector<1x16xf32>
    %19 = vector.extract_strided_slice %5 {offsets = [1, 0], sizes = [7, 16], strides = [1, 1]} : vector<8x16xf32> to vector<7x16xf32>
    %20 = tpu.concatenate %19, %18 in 0 : vector<7x16xf32>, vector<1x16xf32> -> vector<8x16xf32>
    %cst_12 = arith.constant 0.000000e+00 : f32
    %21 = vector.broadcast %cst_12 : f32 to vector<8x1xf32>
    %22 = vector.extract_strided_slice %4 {offsets = [0, 0], sizes = [8, 15], strides = [1, 1]} : vector<8x16xf32> to vector<8x15xf32>
    %23 = tpu.concatenate %21, %22 in 1 : vector<8x1xf32>, vector<8x15xf32> -> vector<8x16xf32>
    %cst_13 = arith.constant 0.000000e+00 : f32
    %24 = vector.broadcast %cst_13 : f32 to vector<8x1xf32>
    %25 = vector.extract_strided_slice %4 {offsets = [0, 1], sizes = [8, 15], strides = [1, 1]} : vector<8x16xf32> to vector<8x15xf32>
    %26 = tpu.concatenate %25, %24 in 1 : vector<8x15xf32>, vector<8x1xf32> -> vector<8x16xf32>
    %cst_14 = arith.constant 0.000000e+00 : f32
    %27 = vector.broadcast %cst_14 : f32 to vector<8x1xf32>
    %28 = vector.extract_strided_slice %5 {offsets = [0, 0], sizes = [8, 15], strides = [1, 1]} : vector<8x16xf32> to vector<8x15xf32>
    %29 = tpu.concatenate %27, %28 in 1 : vector<8x1xf32>, vector<8x15xf32> -> vector<8x16xf32>
    %cst_15 = arith.constant 0.000000e+00 : f32
    %30 = vector.broadcast %cst_15 : f32 to vector<8x1xf32>
    %31 = vector.extract_strided_slice %5 {offsets = [0, 1], sizes = [8, 15], strides = [1, 1]} : vector<8x16xf32> to vector<8x15xf32>
    %32 = tpu.concatenate %31, %30 in 1 : vector<8x15xf32>, vector<8x1xf32> -> vector<8x16xf32>
    %c0_16 = arith.constant 0 : index
    %33 = memref.load %arg3[%c0_16] : memref<205xf32, #tpu.memory_space<smem>>
    %34 = vector.broadcast %33 : f32 to vector<8x16xf32>
    %35 = arith.mulf %34, %11 : vector<8x16xf32>
    %c84 = arith.constant 84 : index
    %36 = memref.load %arg3[%c84] : memref<205xf32, #tpu.memory_space<smem>>
    %37 = vector.broadcast %36 : f32 to vector<8x16xf32>
    %38 = arith.mulf %37, %23 : vector<8x16xf32>
    %39 = arith.addf %35, %38 : vector<8x16xf32>
    %c1 = arith.constant 1 : index
    %40 = memref.load %arg3[%c1] : memref<205xf32, #tpu.memory_space<smem>>
    %41 = vector.broadcast %40 : f32 to vector<8x16xf32>
    %42 = arith.mulf %41, %4 : vector<8x16xf32>
    %c85 = arith.constant 85 : index
    %43 = memref.load %arg3[%c85] : memref<205xf32, #tpu.memory_space<smem>>
    %44 = vector.broadcast %43 : f32 to vector<8x16xf32>
    %45 = arith.mulf %44, %4 : vector<8x16xf32>
    %46 = arith.addf %42, %45 : vector<8x16xf32>
    %47 = arith.addf %39, %46 : vector<8x16xf32>
    %c2 = arith.constant 2 : index
    %48 = memref.load %arg3[%c2] : memref<205xf32, #tpu.memory_space<smem>>
    %49 = vector.broadcast %48 : f32 to vector<8x16xf32>
    %50 = arith.mulf %49, %14 : vector<8x16xf32>
    %c86 = arith.constant 86 : index
    %51 = memref.load %arg3[%c86] : memref<205xf32, #tpu.memory_space<smem>>
    %52 = vector.broadcast %51 : f32 to vector<8x16xf32>
    %53 = arith.mulf %52, %26 : vector<8x16xf32>
    %54 = arith.addf %50, %53 : vector<8x16xf32>
    %55 = arith.addf %47, %54 : vector<8x16xf32>
    %c3 = arith.constant 3 : index
    %56 = memref.load %arg3[%c3] : memref<205xf32, #tpu.memory_space<smem>>
    %57 = vector.broadcast %56 : f32 to vector<8x16xf32>
    %58 = arith.mulf %57, %17 : vector<8x16xf32>
    %c87 = arith.constant 87 : index
    %59 = memref.load %arg3[%c87] : memref<205xf32, #tpu.memory_space<smem>>
    %60 = vector.broadcast %59 : f32 to vector<8x16xf32>
    %61 = arith.mulf %60, %29 : vector<8x16xf32>
    %62 = arith.addf %58, %61 : vector<8x16xf32>
    %63 = arith.addf %55, %62 : vector<8x16xf32>
    %c4 = arith.constant 4 : index
    %64 = memref.load %arg3[%c4] : memref<205xf32, #tpu.memory_space<smem>>
    %65 = vector.broadcast %64 : f32 to vector<8x16xf32>
    %66 = arith.mulf %65, %5 : vector<8x16xf32>
    %c88 = arith.constant 88 : index
    %67 = memref.load %arg3[%c88] : memref<205xf32, #tpu.memory_space<smem>>
    %68 = vector.broadcast %67 : f32 to vector<8x16xf32>
    %69 = arith.mulf %68, %5 : vector<8x16xf32>
    %70 = arith.addf %66, %69 : vector<8x16xf32>
    %71 = arith.addf %63, %70 : vector<8x16xf32>
    %c5 = arith.constant 5 : index
    %72 = memref.load %arg3[%c5] : memref<205xf32, #tpu.memory_space<smem>>
    %73 = vector.broadcast %72 : f32 to vector<8x16xf32>
    %74 = arith.mulf %73, %20 : vector<8x16xf32>
    %c89 = arith.constant 89 : index
    %75 = memref.load %arg3[%c89] : memref<205xf32, #tpu.memory_space<smem>>
    %76 = vector.broadcast %75 : f32 to vector<8x16xf32>
    %77 = arith.mulf %76, %32 : vector<8x16xf32>
    %78 = arith.addf %74, %77 : vector<8x16xf32>
    %79 = arith.addf %71, %78 : vector<8x16xf32>
    %c168 = arith.constant 168 : index
    %80 = memref.load %arg3[%c168] : memref<205xf32, #tpu.memory_space<smem>>
    %81 = vector.broadcast %80 : f32 to vector<8x16xf32>
    %82 = arith.addf %79, %81 : vector<8x16xf32>
    %cst_17 = arith.constant 0.000000e+00 : f32
    %83 = vector.broadcast %cst_17 : f32 to vector<8x16xf32>
    %84 = arith.cmpf ogt, %82, %83 : vector<8x16xf32>
    %85 = vector.broadcast %8 : f32 to vector<8x16xf32>
    %86 = arith.mulf %85, %82 : vector<8x16xf32>
    %87 = arith.select %84, %82, %86 : vector<8x16xi1>, vector<8x16xf32>
    %88 = arith.mulf %87, %7 : vector<8x16xf32>
    %89 = arith.addf %88, %4 : vector<8x16xf32>
    %c6 = arith.constant 6 : index
    %90 = memref.load %arg3[%c6] : memref<205xf32, #tpu.memory_space<smem>>
    %91 = vector.broadcast %90 : f32 to vector<8x16xf32>
    %92 = arith.mulf %91, %11 : vector<8x16xf32>
    %c90 = arith.constant 90 : index
    %93 = memref.load %arg3[%c90] : memref<205xf32, #tpu.memory_space<smem>>
    %94 = vector.broadcast %93 : f32 to vector<8x16xf32>
    %95 = arith.mulf %94, %23 : vector<8x16xf32>
    %96 = arith.addf %92, %95 : vector<8x16xf32>
    %c7 = arith.constant 7 : index
    %97 = memref.load %arg3[%c7] : memref<205xf32, #tpu.memory_space<smem>>
    %98 = vector.broadcast %97 : f32 to vector<8x16xf32>
    %99 = arith.mulf %98, %4 : vector<8x16xf32>
    %c91 = arith.constant 91 : index
    %100 = memref.load %arg3[%c91] : memref<205xf32, #tpu.memory_space<smem>>
    %101 = vector.broadcast %100 : f32 to vector<8x16xf32>
    %102 = arith.mulf %101, %4 : vector<8x16xf32>
    %103 = arith.addf %99, %102 : vector<8x16xf32>
    %104 = arith.addf %96, %103 : vector<8x16xf32>
    %c8 = arith.constant 8 : index
    %105 = memref.load %arg3[%c8] : memref<205xf32, #tpu.memory_space<smem>>
    %106 = vector.broadcast %105 : f32 to vector<8x16xf32>
    %107 = arith.mulf %106, %14 : vector<8x16xf32>
    %c92 = arith.constant 92 : index
    %108 = memref.load %arg3[%c92] : memref<205xf32, #tpu.memory_space<smem>>
    %109 = vector.broadcast %108 : f32 to vector<8x16xf32>
    %110 = arith.mulf %109, %26 : vector<8x16xf32>
    %111 = arith.addf %107, %110 : vector<8x16xf32>
    %112 = arith.addf %104, %111 : vector<8x16xf32>
    %c9 = arith.constant 9 : index
    %113 = memref.load %arg3[%c9] : memref<205xf32, #tpu.memory_space<smem>>
    %114 = vector.broadcast %113 : f32 to vector<8x16xf32>
    %115 = arith.mulf %114, %17 : vector<8x16xf32>
    %c93 = arith.constant 93 : index
    %116 = memref.load %arg3[%c93] : memref<205xf32, #tpu.memory_space<smem>>
    %117 = vector.broadcast %116 : f32 to vector<8x16xf32>
    %118 = arith.mulf %117, %29 : vector<8x16xf32>
    %119 = arith.addf %115, %118 : vector<8x16xf32>
    %120 = arith.addf %112, %119 : vector<8x16xf32>
    %c10 = arith.constant 10 : index
    %121 = memref.load %arg3[%c10] : memref<205xf32, #tpu.memory_space<smem>>
    %122 = vector.broadcast %121 : f32 to vector<8x16xf32>
    %123 = arith.mulf %122, %5 : vector<8x16xf32>
    %c94 = arith.constant 94 : index
    %124 = memref.load %arg3[%c94] : memref<205xf32, #tpu.memory_space<smem>>
    %125 = vector.broadcast %124 : f32 to vector<8x16xf32>
    %126 = arith.mulf %125, %5 : vector<8x16xf32>
    %127 = arith.addf %123, %126 : vector<8x16xf32>
    %128 = arith.addf %120, %127 : vector<8x16xf32>
    %c11 = arith.constant 11 : index
    %129 = memref.load %arg3[%c11] : memref<205xf32, #tpu.memory_space<smem>>
    %130 = vector.broadcast %129 : f32 to vector<8x16xf32>
    %131 = arith.mulf %130, %20 : vector<8x16xf32>
    %c95 = arith.constant 95 : index
    %132 = memref.load %arg3[%c95] : memref<205xf32, #tpu.memory_space<smem>>
    %133 = vector.broadcast %132 : f32 to vector<8x16xf32>
    %134 = arith.mulf %133, %32 : vector<8x16xf32>
    %135 = arith.addf %131, %134 : vector<8x16xf32>
    %136 = arith.addf %128, %135 : vector<8x16xf32>
    %c169 = arith.constant 169 : index
    %137 = memref.load %arg3[%c169] : memref<205xf32, #tpu.memory_space<smem>>
    %138 = vector.broadcast %137 : f32 to vector<8x16xf32>
    %139 = arith.addf %136, %138 : vector<8x16xf32>
    %cst_18 = arith.constant 0.000000e+00 : f32
    %140 = vector.broadcast %cst_18 : f32 to vector<8x16xf32>
    %141 = arith.cmpf ogt, %139, %140 : vector<8x16xf32>
    %142 = vector.broadcast %8 : f32 to vector<8x16xf32>
    %143 = arith.mulf %142, %139 : vector<8x16xf32>
    %144 = arith.select %141, %139, %143 : vector<8x16xi1>, vector<8x16xf32>
    %145 = arith.mulf %144, %7 : vector<8x16xf32>
    %146 = arith.addf %145, %5 : vector<8x16xf32>
    %c183 = arith.constant 183 : index
    %147 = memref.load %arg3[%c183] : memref<205xf32, #tpu.memory_space<smem>>
    %cst_19 = arith.constant 0.000000e+00 : f32
    %148 = vector.broadcast %cst_19 : f32 to vector<1x16xf32>
    %149 = vector.extract_strided_slice %89 {offsets = [0, 0], sizes = [7, 16], strides = [1, 1]} : vector<8x16xf32> to vector<7x16xf32>
    %150 = tpu.concatenate %148, %149 in 0 : vector<1x16xf32>, vector<7x16xf32> -> vector<8x16xf32>
    %cst_20 = arith.constant 0.000000e+00 : f32
    %151 = vector.broadcast %cst_20 : f32 to vector<1x16xf32>
    %152 = vector.extract_strided_slice %89 {offsets = [1, 0], sizes = [7, 16], strides = [1, 1]} : vector<8x16xf32> to vector<7x16xf32>
    %153 = tpu.concatenate %152, %151 in 0 : vector<7x16xf32>, vector<1x16xf32> -> vector<8x16xf32>
    %cst_21 = arith.constant 0.000000e+00 : f32
    %154 = vector.broadcast %cst_21 : f32 to vector<1x16xf32>
    %155 = vector.extract_strided_slice %146 {offsets = [0, 0], sizes = [7, 16], strides = [1, 1]} : vector<8x16xf32> to vector<7x16xf32>
    %156 = tpu.concatenate %154, %155 in 0 : vector<1x16xf32>, vector<7x16xf32> -> vector<8x16xf32>
    %cst_22 = arith.constant 0.000000e+00 : f32
    %157 = vector.broadcast %cst_22 : f32 to vector<1x16xf32>
    %158 = vector.extract_strided_slice %146 {offsets = [1, 0], sizes = [7, 16], strides = [1, 1]} : vector<8x16xf32> to vector<7x16xf32>
    %159 = tpu.concatenate %158, %157 in 0 : vector<7x16xf32>, vector<1x16xf32> -> vector<8x16xf32>
    %cst_23 = arith.constant 0.000000e+00 : f32
    %160 = vector.broadcast %cst_23 : f32 to vector<8x1xf32>
    %161 = vector.extract_strided_slice %89 {offsets = [0, 0], sizes = [8, 15], strides = [1, 1]} : vector<8x16xf32> to vector<8x15xf32>
    %162 = tpu.concatenate %160, %161 in 1 : vector<8x1xf32>, vector<8x15xf32> -> vector<8x16xf32>
    %cst_24 = arith.constant 0.000000e+00 : f32
    %163 = vector.broadcast %cst_24 : f32 to vector<8x1xf32>
    %164 = vector.extract_strided_slice %89 {offsets = [0, 1], sizes = [8, 15], strides = [1, 1]} : vector<8x16xf32> to vector<8x15xf32>
    %165 = tpu.concatenate %164, %163 in 1 : vector<8x15xf32>, vector<8x1xf32> -> vector<8x16xf32>
    %cst_25 = arith.constant 0.000000e+00 : f32
    %166 = vector.broadcast %cst_25 : f32 to vector<8x1xf32>
    %167 = vector.extract_strided_slice %146 {offsets = [0, 0], sizes = [8, 15], strides = [1, 1]} : vector<8x16xf32> to vector<8x15xf32>
    %168 = tpu.concatenate %166, %167 in 1 : vector<8x1xf32>, vector<8x15xf32> -> vector<8x16xf32>
    %cst_26 = arith.constant 0.000000e+00 : f32
    %169 = vector.broadcast %cst_26 : f32 to vector<8x1xf32>
    %170 = vector.extract_strided_slice %146 {offsets = [0, 1], sizes = [8, 15], strides = [1, 1]} : vector<8x16xf32> to vector<8x15xf32>
    %171 = tpu.concatenate %170, %169 in 1 : vector<8x15xf32>, vector<8x1xf32> -> vector<8x16xf32>
    %c12 = arith.constant 12 : index
    %172 = memref.load %arg3[%c12] : memref<205xf32, #tpu.memory_space<smem>>
    %173 = vector.broadcast %172 : f32 to vector<8x16xf32>
    %174 = arith.mulf %173, %150 : vector<8x16xf32>
    %c96 = arith.constant 96 : index
    %175 = memref.load %arg3[%c96] : memref<205xf32, #tpu.memory_space<smem>>
    %176 = vector.broadcast %175 : f32 to vector<8x16xf32>
    %177 = arith.mulf %176, %162 : vector<8x16xf32>
    %178 = arith.addf %174, %177 : vector<8x16xf32>
    %c13 = arith.constant 13 : index
    %179 = memref.load %arg3[%c13] : memref<205xf32, #tpu.memory_space<smem>>
    %180 = vector.broadcast %179 : f32 to vector<8x16xf32>
    %181 = arith.mulf %180, %89 : vector<8x16xf32>
    %c97 = arith.constant 97 : index
    %182 = memref.load %arg3[%c97] : memref<205xf32, #tpu.memory_space<smem>>
    %183 = vector.broadcast %182 : f32 to vector<8x16xf32>
    %184 = arith.mulf %183, %89 : vector<8x16xf32>
    %185 = arith.addf %181, %184 : vector<8x16xf32>
    %186 = arith.addf %178, %185 : vector<8x16xf32>
    %c14 = arith.constant 14 : index
    %187 = memref.load %arg3[%c14] : memref<205xf32, #tpu.memory_space<smem>>
    %188 = vector.broadcast %187 : f32 to vector<8x16xf32>
    %189 = arith.mulf %188, %153 : vector<8x16xf32>
    %c98 = arith.constant 98 : index
    %190 = memref.load %arg3[%c98] : memref<205xf32, #tpu.memory_space<smem>>
    %191 = vector.broadcast %190 : f32 to vector<8x16xf32>
    %192 = arith.mulf %191, %165 : vector<8x16xf32>
    %193 = arith.addf %189, %192 : vector<8x16xf32>
    %194 = arith.addf %186, %193 : vector<8x16xf32>
    %c15 = arith.constant 15 : index
    %195 = memref.load %arg3[%c15] : memref<205xf32, #tpu.memory_space<smem>>
    %196 = vector.broadcast %195 : f32 to vector<8x16xf32>
    %197 = arith.mulf %196, %156 : vector<8x16xf32>
    %c99 = arith.constant 99 : index
    %198 = memref.load %arg3[%c99] : memref<205xf32, #tpu.memory_space<smem>>
    %199 = vector.broadcast %198 : f32 to vector<8x16xf32>
    %200 = arith.mulf %199, %168 : vector<8x16xf32>
    %201 = arith.addf %197, %200 : vector<8x16xf32>
    %202 = arith.addf %194, %201 : vector<8x16xf32>
    %c16 = arith.constant 16 : index
    %203 = memref.load %arg3[%c16] : memref<205xf32, #tpu.memory_space<smem>>
    %204 = vector.broadcast %203 : f32 to vector<8x16xf32>
    %205 = arith.mulf %204, %146 : vector<8x16xf32>
    %c100 = arith.constant 100 : index
    %206 = memref.load %arg3[%c100] : memref<205xf32, #tpu.memory_space<smem>>
    %207 = vector.broadcast %206 : f32 to vector<8x16xf32>
    %208 = arith.mulf %207, %146 : vector<8x16xf32>
    %209 = arith.addf %205, %208 : vector<8x16xf32>
    %210 = arith.addf %202, %209 : vector<8x16xf32>
    %c17 = arith.constant 17 : index
    %211 = memref.load %arg3[%c17] : memref<205xf32, #tpu.memory_space<smem>>
    %212 = vector.broadcast %211 : f32 to vector<8x16xf32>
    %213 = arith.mulf %212, %159 : vector<8x16xf32>
    %c101 = arith.constant 101 : index
    %214 = memref.load %arg3[%c101] : memref<205xf32, #tpu.memory_space<smem>>
    %215 = vector.broadcast %214 : f32 to vector<8x16xf32>
    %216 = arith.mulf %215, %171 : vector<8x16xf32>
    %217 = arith.addf %213, %216 : vector<8x16xf32>
    %218 = arith.addf %210, %217 : vector<8x16xf32>
    %c170 = arith.constant 170 : index
    %219 = memref.load %arg3[%c170] : memref<205xf32, #tpu.memory_space<smem>>
    %220 = vector.broadcast %219 : f32 to vector<8x16xf32>
    %221 = arith.addf %218, %220 : vector<8x16xf32>
    %cst_27 = arith.constant 0.000000e+00 : f32
    %222 = vector.broadcast %cst_27 : f32 to vector<8x16xf32>
    %223 = arith.cmpf ogt, %221, %222 : vector<8x16xf32>
    %224 = vector.broadcast %147 : f32 to vector<8x16xf32>
    %225 = arith.mulf %224, %221 : vector<8x16xf32>
    %226 = arith.select %223, %221, %225 : vector<8x16xi1>, vector<8x16xf32>
    %227 = arith.mulf %226, %7 : vector<8x16xf32>
    %228 = arith.addf %227, %89 : vector<8x16xf32>
    %c18 = arith.constant 18 : index
    %229 = memref.load %arg3[%c18] : memref<205xf32, #tpu.memory_space<smem>>
    %230 = vector.broadcast %229 : f32 to vector<8x16xf32>
    %231 = arith.mulf %230, %150 : vector<8x16xf32>
    %c102 = arith.constant 102 : index
    %232 = memref.load %arg3[%c102] : memref<205xf32, #tpu.memory_space<smem>>
    %233 = vector.broadcast %232 : f32 to vector<8x16xf32>
    %234 = arith.mulf %233, %162 : vector<8x16xf32>
    %235 = arith.addf %231, %234 : vector<8x16xf32>
    %c19 = arith.constant 19 : index
    %236 = memref.load %arg3[%c19] : memref<205xf32, #tpu.memory_space<smem>>
    %237 = vector.broadcast %236 : f32 to vector<8x16xf32>
    %238 = arith.mulf %237, %89 : vector<8x16xf32>
    %c103 = arith.constant 103 : index
    %239 = memref.load %arg3[%c103] : memref<205xf32, #tpu.memory_space<smem>>
    %240 = vector.broadcast %239 : f32 to vector<8x16xf32>
    %241 = arith.mulf %240, %89 : vector<8x16xf32>
    %242 = arith.addf %238, %241 : vector<8x16xf32>
    %243 = arith.addf %235, %242 : vector<8x16xf32>
    %c20 = arith.constant 20 : index
    %244 = memref.load %arg3[%c20] : memref<205xf32, #tpu.memory_space<smem>>
    %245 = vector.broadcast %244 : f32 to vector<8x16xf32>
    %246 = arith.mulf %245, %153 : vector<8x16xf32>
    %c104 = arith.constant 104 : index
    %247 = memref.load %arg3[%c104] : memref<205xf32, #tpu.memory_space<smem>>
    %248 = vector.broadcast %247 : f32 to vector<8x16xf32>
    %249 = arith.mulf %248, %165 : vector<8x16xf32>
    %250 = arith.addf %246, %249 : vector<8x16xf32>
    %251 = arith.addf %243, %250 : vector<8x16xf32>
    %c21 = arith.constant 21 : index
    %252 = memref.load %arg3[%c21] : memref<205xf32, #tpu.memory_space<smem>>
    %253 = vector.broadcast %252 : f32 to vector<8x16xf32>
    %254 = arith.mulf %253, %156 : vector<8x16xf32>
    %c105 = arith.constant 105 : index
    %255 = memref.load %arg3[%c105] : memref<205xf32, #tpu.memory_space<smem>>
    %256 = vector.broadcast %255 : f32 to vector<8x16xf32>
    %257 = arith.mulf %256, %168 : vector<8x16xf32>
    %258 = arith.addf %254, %257 : vector<8x16xf32>
    %259 = arith.addf %251, %258 : vector<8x16xf32>
    %c22 = arith.constant 22 : index
    %260 = memref.load %arg3[%c22] : memref<205xf32, #tpu.memory_space<smem>>
    %261 = vector.broadcast %260 : f32 to vector<8x16xf32>
    %262 = arith.mulf %261, %146 : vector<8x16xf32>
    %c106 = arith.constant 106 : index
    %263 = memref.load %arg3[%c106] : memref<205xf32, #tpu.memory_space<smem>>
    %264 = vector.broadcast %263 : f32 to vector<8x16xf32>
    %265 = arith.mulf %264, %146 : vector<8x16xf32>
    %266 = arith.addf %262, %265 : vector<8x16xf32>
    %267 = arith.addf %259, %266 : vector<8x16xf32>
    %c23 = arith.constant 23 : index
    %268 = memref.load %arg3[%c23] : memref<205xf32, #tpu.memory_space<smem>>
    %269 = vector.broadcast %268 : f32 to vector<8x16xf32>
    %270 = arith.mulf %269, %159 : vector<8x16xf32>
    %c107 = arith.constant 107 : index
    %271 = memref.load %arg3[%c107] : memref<205xf32, #tpu.memory_space<smem>>
    %272 = vector.broadcast %271 : f32 to vector<8x16xf32>
    %273 = arith.mulf %272, %171 : vector<8x16xf32>
    %274 = arith.addf %270, %273 : vector<8x16xf32>
    %275 = arith.addf %267, %274 : vector<8x16xf32>
    %c171 = arith.constant 171 : index
    %276 = memref.load %arg3[%c171] : memref<205xf32, #tpu.memory_space<smem>>
    %277 = vector.broadcast %276 : f32 to vector<8x16xf32>
    %278 = arith.addf %275, %277 : vector<8x16xf32>
    %cst_28 = arith.constant 0.000000e+00 : f32
    %279 = vector.broadcast %cst_28 : f32 to vector<8x16xf32>
    %280 = arith.cmpf ogt, %278, %279 : vector<8x16xf32>
    %281 = vector.broadcast %147 : f32 to vector<8x16xf32>
    %282 = arith.mulf %281, %278 : vector<8x16xf32>
    %283 = arith.select %280, %278, %282 : vector<8x16xi1>, vector<8x16xf32>
    %284 = arith.mulf %283, %7 : vector<8x16xf32>
    %285 = arith.addf %284, %146 : vector<8x16xf32>
    %c184 = arith.constant 184 : index
    %286 = memref.load %arg3[%c184] : memref<205xf32, #tpu.memory_space<smem>>
    %cst_29 = arith.constant 0.000000e+00 : f32
    %287 = vector.broadcast %cst_29 : f32 to vector<1x16xf32>
    %288 = vector.extract_strided_slice %228 {offsets = [0, 0], sizes = [7, 16], strides = [1, 1]} : vector<8x16xf32> to vector<7x16xf32>
    %289 = tpu.concatenate %287, %288 in 0 : vector<1x16xf32>, vector<7x16xf32> -> vector<8x16xf32>
    %cst_30 = arith.constant 0.000000e+00 : f32
    %290 = vector.broadcast %cst_30 : f32 to vector<1x16xf32>
    %291 = vector.extract_strided_slice %228 {offsets = [1, 0], sizes = [7, 16], strides = [1, 1]} : vector<8x16xf32> to vector<7x16xf32>
    %292 = tpu.concatenate %291, %290 in 0 : vector<7x16xf32>, vector<1x16xf32> -> vector<8x16xf32>
    %cst_31 = arith.constant 0.000000e+00 : f32
    %293 = vector.broadcast %cst_31 : f32 to vector<1x16xf32>
    %294 = vector.extract_strided_slice %285 {offsets = [0, 0], sizes = [7, 16], strides = [1, 1]} : vector<8x16xf32> to vector<7x16xf32>
    %295 = tpu.concatenate %293, %294 in 0 : vector<1x16xf32>, vector<7x16xf32> -> vector<8x16xf32>
    %cst_32 = arith.constant 0.000000e+00 : f32
    %296 = vector.broadcast %cst_32 : f32 to vector<1x16xf32>
    %297 = vector.extract_strided_slice %285 {offsets = [1, 0], sizes = [7, 16], strides = [1, 1]} : vector<8x16xf32> to vector<7x16xf32>
    %298 = tpu.concatenate %297, %296 in 0 : vector<7x16xf32>, vector<1x16xf32> -> vector<8x16xf32>
    %cst_33 = arith.constant 0.000000e+00 : f32
    %299 = vector.broadcast %cst_33 : f32 to vector<8x1xf32>
    %300 = vector.extract_strided_slice %228 {offsets = [0, 0], sizes = [8, 15], strides = [1, 1]} : vector<8x16xf32> to vector<8x15xf32>
    %301 = tpu.concatenate %299, %300 in 1 : vector<8x1xf32>, vector<8x15xf32> -> vector<8x16xf32>
    %cst_34 = arith.constant 0.000000e+00 : f32
    %302 = vector.broadcast %cst_34 : f32 to vector<8x1xf32>
    %303 = vector.extract_strided_slice %228 {offsets = [0, 1], sizes = [8, 15], strides = [1, 1]} : vector<8x16xf32> to vector<8x15xf32>
    %304 = tpu.concatenate %303, %302 in 1 : vector<8x15xf32>, vector<8x1xf32> -> vector<8x16xf32>
    %cst_35 = arith.constant 0.000000e+00 : f32
    %305 = vector.broadcast %cst_35 : f32 to vector<8x1xf32>
    %306 = vector.extract_strided_slice %285 {offsets = [0, 0], sizes = [8, 15], strides = [1, 1]} : vector<8x16xf32> to vector<8x15xf32>
    %307 = tpu.concatenate %305, %306 in 1 : vector<8x1xf32>, vector<8x15xf32> -> vector<8x16xf32>
    %cst_36 = arith.constant 0.000000e+00 : f32
    %308 = vector.broadcast %cst_36 : f32 to vector<8x1xf32>
    %309 = vector.extract_strided_slice %285 {offsets = [0, 1], sizes = [8, 15], strides = [1, 1]} : vector<8x16xf32> to vector<8x15xf32>
    %310 = tpu.concatenate %309, %308 in 1 : vector<8x15xf32>, vector<8x1xf32> -> vector<8x16xf32>
    %c24 = arith.constant 24 : index
    %311 = memref.load %arg3[%c24] : memref<205xf32, #tpu.memory_space<smem>>
    %312 = vector.broadcast %311 : f32 to vector<8x16xf32>
    %313 = arith.mulf %312, %289 : vector<8x16xf32>
    %c108 = arith.constant 108 : index
    %314 = memref.load %arg3[%c108] : memref<205xf32, #tpu.memory_space<smem>>
    %315 = vector.broadcast %314 : f32 to vector<8x16xf32>
    %316 = arith.mulf %315, %301 : vector<8x16xf32>
    %317 = arith.addf %313, %316 : vector<8x16xf32>
    %c25 = arith.constant 25 : index
    %318 = memref.load %arg3[%c25] : memref<205xf32, #tpu.memory_space<smem>>
    %319 = vector.broadcast %318 : f32 to vector<8x16xf32>
    %320 = arith.mulf %319, %228 : vector<8x16xf32>
    %c109 = arith.constant 109 : index
    %321 = memref.load %arg3[%c109] : memref<205xf32, #tpu.memory_space<smem>>
    %322 = vector.broadcast %321 : f32 to vector<8x16xf32>
    %323 = arith.mulf %322, %228 : vector<8x16xf32>
    %324 = arith.addf %320, %323 : vector<8x16xf32>
    %325 = arith.addf %317, %324 : vector<8x16xf32>
    %c26 = arith.constant 26 : index
    %326 = memref.load %arg3[%c26] : memref<205xf32, #tpu.memory_space<smem>>
    %327 = vector.broadcast %326 : f32 to vector<8x16xf32>
    %328 = arith.mulf %327, %292 : vector<8x16xf32>
    %c110 = arith.constant 110 : index
    %329 = memref.load %arg3[%c110] : memref<205xf32, #tpu.memory_space<smem>>
    %330 = vector.broadcast %329 : f32 to vector<8x16xf32>
    %331 = arith.mulf %330, %304 : vector<8x16xf32>
    %332 = arith.addf %328, %331 : vector<8x16xf32>
    %333 = arith.addf %325, %332 : vector<8x16xf32>
    %c27 = arith.constant 27 : index
    %334 = memref.load %arg3[%c27] : memref<205xf32, #tpu.memory_space<smem>>
    %335 = vector.broadcast %334 : f32 to vector<8x16xf32>
    %336 = arith.mulf %335, %295 : vector<8x16xf32>
    %c111 = arith.constant 111 : index
    %337 = memref.load %arg3[%c111] : memref<205xf32, #tpu.memory_space<smem>>
    %338 = vector.broadcast %337 : f32 to vector<8x16xf32>
    %339 = arith.mulf %338, %307 : vector<8x16xf32>
    %340 = arith.addf %336, %339 : vector<8x16xf32>
    %341 = arith.addf %333, %340 : vector<8x16xf32>
    %c28 = arith.constant 28 : index
    %342 = memref.load %arg3[%c28] : memref<205xf32, #tpu.memory_space<smem>>
    %343 = vector.broadcast %342 : f32 to vector<8x16xf32>
    %344 = arith.mulf %343, %285 : vector<8x16xf32>
    %c112 = arith.constant 112 : index
    %345 = memref.load %arg3[%c112] : memref<205xf32, #tpu.memory_space<smem>>
    %346 = vector.broadcast %345 : f32 to vector<8x16xf32>
    %347 = arith.mulf %346, %285 : vector<8x16xf32>
    %348 = arith.addf %344, %347 : vector<8x16xf32>
    %349 = arith.addf %341, %348 : vector<8x16xf32>
    %c29 = arith.constant 29 : index
    %350 = memref.load %arg3[%c29] : memref<205xf32, #tpu.memory_space<smem>>
    %351 = vector.broadcast %350 : f32 to vector<8x16xf32>
    %352 = arith.mulf %351, %298 : vector<8x16xf32>
    %c113 = arith.constant 113 : index
    %353 = memref.load %arg3[%c113] : memref<205xf32, #tpu.memory_space<smem>>
    %354 = vector.broadcast %353 : f32 to vector<8x16xf32>
    %355 = arith.mulf %354, %310 : vector<8x16xf32>
    %356 = arith.addf %352, %355 : vector<8x16xf32>
    %357 = arith.addf %349, %356 : vector<8x16xf32>
    %c172 = arith.constant 172 : index
    %358 = memref.load %arg3[%c172] : memref<205xf32, #tpu.memory_space<smem>>
    %359 = vector.broadcast %358 : f32 to vector<8x16xf32>
    %360 = arith.addf %357, %359 : vector<8x16xf32>
    %cst_37 = arith.constant 0.000000e+00 : f32
    %361 = vector.broadcast %cst_37 : f32 to vector<8x16xf32>
    %362 = arith.cmpf ogt, %360, %361 : vector<8x16xf32>
    %363 = vector.broadcast %286 : f32 to vector<8x16xf32>
    %364 = arith.mulf %363, %360 : vector<8x16xf32>
    %365 = arith.select %362, %360, %364 : vector<8x16xi1>, vector<8x16xf32>
    %366 = arith.mulf %365, %7 : vector<8x16xf32>
    %367 = arith.addf %366, %228 : vector<8x16xf32>
    %c30 = arith.constant 30 : index
    %368 = memref.load %arg3[%c30] : memref<205xf32, #tpu.memory_space<smem>>
    %369 = vector.broadcast %368 : f32 to vector<8x16xf32>
    %370 = arith.mulf %369, %289 : vector<8x16xf32>
    %c114 = arith.constant 114 : index
    %371 = memref.load %arg3[%c114] : memref<205xf32, #tpu.memory_space<smem>>
    %372 = vector.broadcast %371 : f32 to vector<8x16xf32>
    %373 = arith.mulf %372, %301 : vector<8x16xf32>
    %374 = arith.addf %370, %373 : vector<8x16xf32>
    %c31 = arith.constant 31 : index
    %375 = memref.load %arg3[%c31] : memref<205xf32, #tpu.memory_space<smem>>
    %376 = vector.broadcast %375 : f32 to vector<8x16xf32>
    %377 = arith.mulf %376, %228 : vector<8x16xf32>
    %c115 = arith.constant 115 : index
    %378 = memref.load %arg3[%c115] : memref<205xf32, #tpu.memory_space<smem>>
    %379 = vector.broadcast %378 : f32 to vector<8x16xf32>
    %380 = arith.mulf %379, %228 : vector<8x16xf32>
    %381 = arith.addf %377, %380 : vector<8x16xf32>
    %382 = arith.addf %374, %381 : vector<8x16xf32>
    %c32 = arith.constant 32 : index
    %383 = memref.load %arg3[%c32] : memref<205xf32, #tpu.memory_space<smem>>
    %384 = vector.broadcast %383 : f32 to vector<8x16xf32>
    %385 = arith.mulf %384, %292 : vector<8x16xf32>
    %c116 = arith.constant 116 : index
    %386 = memref.load %arg3[%c116] : memref<205xf32, #tpu.memory_space<smem>>
    %387 = vector.broadcast %386 : f32 to vector<8x16xf32>
    %388 = arith.mulf %387, %304 : vector<8x16xf32>
    %389 = arith.addf %385, %388 : vector<8x16xf32>
    %390 = arith.addf %382, %389 : vector<8x16xf32>
    %c33 = arith.constant 33 : index
    %391 = memref.load %arg3[%c33] : memref<205xf32, #tpu.memory_space<smem>>
    %392 = vector.broadcast %391 : f32 to vector<8x16xf32>
    %393 = arith.mulf %392, %295 : vector<8x16xf32>
    %c117 = arith.constant 117 : index
    %394 = memref.load %arg3[%c117] : memref<205xf32, #tpu.memory_space<smem>>
    %395 = vector.broadcast %394 : f32 to vector<8x16xf32>
    %396 = arith.mulf %395, %307 : vector<8x16xf32>
    %397 = arith.addf %393, %396 : vector<8x16xf32>
    %398 = arith.addf %390, %397 : vector<8x16xf32>
    %c34 = arith.constant 34 : index
    %399 = memref.load %arg3[%c34] : memref<205xf32, #tpu.memory_space<smem>>
    %400 = vector.broadcast %399 : f32 to vector<8x16xf32>
    %401 = arith.mulf %400, %285 : vector<8x16xf32>
    %c118 = arith.constant 118 : index
    %402 = memref.load %arg3[%c118] : memref<205xf32, #tpu.memory_space<smem>>
    %403 = vector.broadcast %402 : f32 to vector<8x16xf32>
    %404 = arith.mulf %403, %285 : vector<8x16xf32>
    %405 = arith.addf %401, %404 : vector<8x16xf32>
    %406 = arith.addf %398, %405 : vector<8x16xf32>
    %c35 = arith.constant 35 : index
    %407 = memref.load %arg3[%c35] : memref<205xf32, #tpu.memory_space<smem>>
    %408 = vector.broadcast %407 : f32 to vector<8x16xf32>
    %409 = arith.mulf %408, %298 : vector<8x16xf32>
    %c119 = arith.constant 119 : index
    %410 = memref.load %arg3[%c119] : memref<205xf32, #tpu.memory_space<smem>>
    %411 = vector.broadcast %410 : f32 to vector<8x16xf32>
    %412 = arith.mulf %411, %310 : vector<8x16xf32>
    %413 = arith.addf %409, %412 : vector<8x16xf32>
    %414 = arith.addf %406, %413 : vector<8x16xf32>
    %c173 = arith.constant 173 : index
    %415 = memref.load %arg3[%c173] : memref<205xf32, #tpu.memory_space<smem>>
    %416 = vector.broadcast %415 : f32 to vector<8x16xf32>
    %417 = arith.addf %414, %416 : vector<8x16xf32>
    %cst_38 = arith.constant 0.000000e+00 : f32
    %418 = vector.broadcast %cst_38 : f32 to vector<8x16xf32>
    %419 = arith.cmpf ogt, %417, %418 : vector<8x16xf32>
    %420 = vector.broadcast %286 : f32 to vector<8x16xf32>
    %421 = arith.mulf %420, %417 : vector<8x16xf32>
    %422 = arith.select %419, %417, %421 : vector<8x16xi1>, vector<8x16xf32>
    %423 = arith.mulf %422, %7 : vector<8x16xf32>
    %424 = arith.addf %423, %285 : vector<8x16xf32>
    %c185 = arith.constant 185 : index
    %425 = memref.load %arg3[%c185] : memref<205xf32, #tpu.memory_space<smem>>
    %cst_39 = arith.constant 0.000000e+00 : f32
    %426 = vector.broadcast %cst_39 : f32 to vector<1x16xf32>
    %427 = vector.extract_strided_slice %367 {offsets = [0, 0], sizes = [7, 16], strides = [1, 1]} : vector<8x16xf32> to vector<7x16xf32>
    %428 = tpu.concatenate %426, %427 in 0 : vector<1x16xf32>, vector<7x16xf32> -> vector<8x16xf32>
    %cst_40 = arith.constant 0.000000e+00 : f32
    %429 = vector.broadcast %cst_40 : f32 to vector<1x16xf32>
    %430 = vector.extract_strided_slice %367 {offsets = [1, 0], sizes = [7, 16], strides = [1, 1]} : vector<8x16xf32> to vector<7x16xf32>
    %431 = tpu.concatenate %430, %429 in 0 : vector<7x16xf32>, vector<1x16xf32> -> vector<8x16xf32>
    %cst_41 = arith.constant 0.000000e+00 : f32
    %432 = vector.broadcast %cst_41 : f32 to vector<1x16xf32>
    %433 = vector.extract_strided_slice %424 {offsets = [0, 0], sizes = [7, 16], strides = [1, 1]} : vector<8x16xf32> to vector<7x16xf32>
    %434 = tpu.concatenate %432, %433 in 0 : vector<1x16xf32>, vector<7x16xf32> -> vector<8x16xf32>
    %cst_42 = arith.constant 0.000000e+00 : f32
    %435 = vector.broadcast %cst_42 : f32 to vector<1x16xf32>
    %436 = vector.extract_strided_slice %424 {offsets = [1, 0], sizes = [7, 16], strides = [1, 1]} : vector<8x16xf32> to vector<7x16xf32>
    %437 = tpu.concatenate %436, %435 in 0 : vector<7x16xf32>, vector<1x16xf32> -> vector<8x16xf32>
    %cst_43 = arith.constant 0.000000e+00 : f32
    %438 = vector.broadcast %cst_43 : f32 to vector<8x1xf32>
    %439 = vector.extract_strided_slice %367 {offsets = [0, 0], sizes = [8, 15], strides = [1, 1]} : vector<8x16xf32> to vector<8x15xf32>
    %440 = tpu.concatenate %438, %439 in 1 : vector<8x1xf32>, vector<8x15xf32> -> vector<8x16xf32>
    %cst_44 = arith.constant 0.000000e+00 : f32
    %441 = vector.broadcast %cst_44 : f32 to vector<8x1xf32>
    %442 = vector.extract_strided_slice %367 {offsets = [0, 1], sizes = [8, 15], strides = [1, 1]} : vector<8x16xf32> to vector<8x15xf32>
    %443 = tpu.concatenate %442, %441 in 1 : vector<8x15xf32>, vector<8x1xf32> -> vector<8x16xf32>
    %cst_45 = arith.constant 0.000000e+00 : f32
    %444 = vector.broadcast %cst_45 : f32 to vector<8x1xf32>
    %445 = vector.extract_strided_slice %424 {offsets = [0, 0], sizes = [8, 15], strides = [1, 1]} : vector<8x16xf32> to vector<8x15xf32>
    %446 = tpu.concatenate %444, %445 in 1 : vector<8x1xf32>, vector<8x15xf32> -> vector<8x16xf32>
    %cst_46 = arith.constant 0.000000e+00 : f32
    %447 = vector.broadcast %cst_46 : f32 to vector<8x1xf32>
    %448 = vector.extract_strided_slice %424 {offsets = [0, 1], sizes = [8, 15], strides = [1, 1]} : vector<8x16xf32> to vector<8x15xf32>
    %449 = tpu.concatenate %448, %447 in 1 : vector<8x15xf32>, vector<8x1xf32> -> vector<8x16xf32>
    %c36 = arith.constant 36 : index
    %450 = memref.load %arg3[%c36] : memref<205xf32, #tpu.memory_space<smem>>
    %451 = vector.broadcast %450 : f32 to vector<8x16xf32>
    %452 = arith.mulf %451, %428 : vector<8x16xf32>
    %c120 = arith.constant 120 : index
    %453 = memref.load %arg3[%c120] : memref<205xf32, #tpu.memory_space<smem>>
    %454 = vector.broadcast %453 : f32 to vector<8x16xf32>
    %455 = arith.mulf %454, %440 : vector<8x16xf32>
    %456 = arith.addf %452, %455 : vector<8x16xf32>
    %c37 = arith.constant 37 : index
    %457 = memref.load %arg3[%c37] : memref<205xf32, #tpu.memory_space<smem>>
    %458 = vector.broadcast %457 : f32 to vector<8x16xf32>
    %459 = arith.mulf %458, %367 : vector<8x16xf32>
    %c121 = arith.constant 121 : index
    %460 = memref.load %arg3[%c121] : memref<205xf32, #tpu.memory_space<smem>>
    %461 = vector.broadcast %460 : f32 to vector<8x16xf32>
    %462 = arith.mulf %461, %367 : vector<8x16xf32>
    %463 = arith.addf %459, %462 : vector<8x16xf32>
    %464 = arith.addf %456, %463 : vector<8x16xf32>
    %c38 = arith.constant 38 : index
    %465 = memref.load %arg3[%c38] : memref<205xf32, #tpu.memory_space<smem>>
    %466 = vector.broadcast %465 : f32 to vector<8x16xf32>
    %467 = arith.mulf %466, %431 : vector<8x16xf32>
    %c122 = arith.constant 122 : index
    %468 = memref.load %arg3[%c122] : memref<205xf32, #tpu.memory_space<smem>>
    %469 = vector.broadcast %468 : f32 to vector<8x16xf32>
    %470 = arith.mulf %469, %443 : vector<8x16xf32>
    %471 = arith.addf %467, %470 : vector<8x16xf32>
    %472 = arith.addf %464, %471 : vector<8x16xf32>
    %c39 = arith.constant 39 : index
    %473 = memref.load %arg3[%c39] : memref<205xf32, #tpu.memory_space<smem>>
    %474 = vector.broadcast %473 : f32 to vector<8x16xf32>
    %475 = arith.mulf %474, %434 : vector<8x16xf32>
    %c123 = arith.constant 123 : index
    %476 = memref.load %arg3[%c123] : memref<205xf32, #tpu.memory_space<smem>>
    %477 = vector.broadcast %476 : f32 to vector<8x16xf32>
    %478 = arith.mulf %477, %446 : vector<8x16xf32>
    %479 = arith.addf %475, %478 : vector<8x16xf32>
    %480 = arith.addf %472, %479 : vector<8x16xf32>
    %c40 = arith.constant 40 : index
    %481 = memref.load %arg3[%c40] : memref<205xf32, #tpu.memory_space<smem>>
    %482 = vector.broadcast %481 : f32 to vector<8x16xf32>
    %483 = arith.mulf %482, %424 : vector<8x16xf32>
    %c124 = arith.constant 124 : index
    %484 = memref.load %arg3[%c124] : memref<205xf32, #tpu.memory_space<smem>>
    %485 = vector.broadcast %484 : f32 to vector<8x16xf32>
    %486 = arith.mulf %485, %424 : vector<8x16xf32>
    %487 = arith.addf %483, %486 : vector<8x16xf32>
    %488 = arith.addf %480, %487 : vector<8x16xf32>
    %c41 = arith.constant 41 : index
    %489 = memref.load %arg3[%c41] : memref<205xf32, #tpu.memory_space<smem>>
    %490 = vector.broadcast %489 : f32 to vector<8x16xf32>
    %491 = arith.mulf %490, %437 : vector<8x16xf32>
    %c125 = arith.constant 125 : index
    %492 = memref.load %arg3[%c125] : memref<205xf32, #tpu.memory_space<smem>>
    %493 = vector.broadcast %492 : f32 to vector<8x16xf32>
    %494 = arith.mulf %493, %449 : vector<8x16xf32>
    %495 = arith.addf %491, %494 : vector<8x16xf32>
    %496 = arith.addf %488, %495 : vector<8x16xf32>
    %c174 = arith.constant 174 : index
    %497 = memref.load %arg3[%c174] : memref<205xf32, #tpu.memory_space<smem>>
    %498 = vector.broadcast %497 : f32 to vector<8x16xf32>
    %499 = arith.addf %496, %498 : vector<8x16xf32>
    %cst_47 = arith.constant 0.000000e+00 : f32
    %500 = vector.broadcast %cst_47 : f32 to vector<8x16xf32>
    %501 = arith.cmpf ogt, %499, %500 : vector<8x16xf32>
    %502 = vector.broadcast %425 : f32 to vector<8x16xf32>
    %503 = arith.mulf %502, %499 : vector<8x16xf32>
    %504 = arith.select %501, %499, %503 : vector<8x16xi1>, vector<8x16xf32>
    %505 = arith.mulf %504, %7 : vector<8x16xf32>
    %506 = arith.addf %505, %367 : vector<8x16xf32>
    %c42 = arith.constant 42 : index
    %507 = memref.load %arg3[%c42] : memref<205xf32, #tpu.memory_space<smem>>
    %508 = vector.broadcast %507 : f32 to vector<8x16xf32>
    %509 = arith.mulf %508, %428 : vector<8x16xf32>
    %c126 = arith.constant 126 : index
    %510 = memref.load %arg3[%c126] : memref<205xf32, #tpu.memory_space<smem>>
    %511 = vector.broadcast %510 : f32 to vector<8x16xf32>
    %512 = arith.mulf %511, %440 : vector<8x16xf32>
    %513 = arith.addf %509, %512 : vector<8x16xf32>
    %c43 = arith.constant 43 : index
    %514 = memref.load %arg3[%c43] : memref<205xf32, #tpu.memory_space<smem>>
    %515 = vector.broadcast %514 : f32 to vector<8x16xf32>
    %516 = arith.mulf %515, %367 : vector<8x16xf32>
    %c127 = arith.constant 127 : index
    %517 = memref.load %arg3[%c127] : memref<205xf32, #tpu.memory_space<smem>>
    %518 = vector.broadcast %517 : f32 to vector<8x16xf32>
    %519 = arith.mulf %518, %367 : vector<8x16xf32>
    %520 = arith.addf %516, %519 : vector<8x16xf32>
    %521 = arith.addf %513, %520 : vector<8x16xf32>
    %c44 = arith.constant 44 : index
    %522 = memref.load %arg3[%c44] : memref<205xf32, #tpu.memory_space<smem>>
    %523 = vector.broadcast %522 : f32 to vector<8x16xf32>
    %524 = arith.mulf %523, %431 : vector<8x16xf32>
    %c128 = arith.constant 128 : index
    %525 = memref.load %arg3[%c128] : memref<205xf32, #tpu.memory_space<smem>>
    %526 = vector.broadcast %525 : f32 to vector<8x16xf32>
    %527 = arith.mulf %526, %443 : vector<8x16xf32>
    %528 = arith.addf %524, %527 : vector<8x16xf32>
    %529 = arith.addf %521, %528 : vector<8x16xf32>
    %c45 = arith.constant 45 : index
    %530 = memref.load %arg3[%c45] : memref<205xf32, #tpu.memory_space<smem>>
    %531 = vector.broadcast %530 : f32 to vector<8x16xf32>
    %532 = arith.mulf %531, %434 : vector<8x16xf32>
    %c129 = arith.constant 129 : index
    %533 = memref.load %arg3[%c129] : memref<205xf32, #tpu.memory_space<smem>>
    %534 = vector.broadcast %533 : f32 to vector<8x16xf32>
    %535 = arith.mulf %534, %446 : vector<8x16xf32>
    %536 = arith.addf %532, %535 : vector<8x16xf32>
    %537 = arith.addf %529, %536 : vector<8x16xf32>
    %c46 = arith.constant 46 : index
    %538 = memref.load %arg3[%c46] : memref<205xf32, #tpu.memory_space<smem>>
    %539 = vector.broadcast %538 : f32 to vector<8x16xf32>
    %540 = arith.mulf %539, %424 : vector<8x16xf32>
    %c130 = arith.constant 130 : index
    %541 = memref.load %arg3[%c130] : memref<205xf32, #tpu.memory_space<smem>>
    %542 = vector.broadcast %541 : f32 to vector<8x16xf32>
    %543 = arith.mulf %542, %424 : vector<8x16xf32>
    %544 = arith.addf %540, %543 : vector<8x16xf32>
    %545 = arith.addf %537, %544 : vector<8x16xf32>
    %c47 = arith.constant 47 : index
    %546 = memref.load %arg3[%c47] : memref<205xf32, #tpu.memory_space<smem>>
    %547 = vector.broadcast %546 : f32 to vector<8x16xf32>
    %548 = arith.mulf %547, %437 : vector<8x16xf32>
    %c131 = arith.constant 131 : index
    %549 = memref.load %arg3[%c131] : memref<205xf32, #tpu.memory_space<smem>>
    %550 = vector.broadcast %549 : f32 to vector<8x16xf32>
    %551 = arith.mulf %550, %449 : vector<8x16xf32>
    %552 = arith.addf %548, %551 : vector<8x16xf32>
    %553 = arith.addf %545, %552 : vector<8x16xf32>
    %c175 = arith.constant 175 : index
    %554 = memref.load %arg3[%c175] : memref<205xf32, #tpu.memory_space<smem>>
    %555 = vector.broadcast %554 : f32 to vector<8x16xf32>
    %556 = arith.addf %553, %555 : vector<8x16xf32>
    %cst_48 = arith.constant 0.000000e+00 : f32
    %557 = vector.broadcast %cst_48 : f32 to vector<8x16xf32>
    %558 = arith.cmpf ogt, %556, %557 : vector<8x16xf32>
    %559 = vector.broadcast %425 : f32 to vector<8x16xf32>
    %560 = arith.mulf %559, %556 : vector<8x16xf32>
    %561 = arith.select %558, %556, %560 : vector<8x16xi1>, vector<8x16xf32>
    %562 = arith.mulf %561, %7 : vector<8x16xf32>
    %563 = arith.addf %562, %424 : vector<8x16xf32>
    %c186 = arith.constant 186 : index
    %564 = memref.load %arg3[%c186] : memref<205xf32, #tpu.memory_space<smem>>
    %cst_49 = arith.constant 0.000000e+00 : f32
    %565 = vector.broadcast %cst_49 : f32 to vector<1x16xf32>
    %566 = vector.extract_strided_slice %506 {offsets = [0, 0], sizes = [7, 16], strides = [1, 1]} : vector<8x16xf32> to vector<7x16xf32>
    %567 = tpu.concatenate %565, %566 in 0 : vector<1x16xf32>, vector<7x16xf32> -> vector<8x16xf32>
    %cst_50 = arith.constant 0.000000e+00 : f32
    %568 = vector.broadcast %cst_50 : f32 to vector<1x16xf32>
    %569 = vector.extract_strided_slice %506 {offsets = [1, 0], sizes = [7, 16], strides = [1, 1]} : vector<8x16xf32> to vector<7x16xf32>
    %570 = tpu.concatenate %569, %568 in 0 : vector<7x16xf32>, vector<1x16xf32> -> vector<8x16xf32>
    %cst_51 = arith.constant 0.000000e+00 : f32
    %571 = vector.broadcast %cst_51 : f32 to vector<1x16xf32>
    %572 = vector.extract_strided_slice %563 {offsets = [0, 0], sizes = [7, 16], strides = [1, 1]} : vector<8x16xf32> to vector<7x16xf32>
    %573 = tpu.concatenate %571, %572 in 0 : vector<1x16xf32>, vector<7x16xf32> -> vector<8x16xf32>
    %cst_52 = arith.constant 0.000000e+00 : f32
    %574 = vector.broadcast %cst_52 : f32 to vector<1x16xf32>
    %575 = vector.extract_strided_slice %563 {offsets = [1, 0], sizes = [7, 16], strides = [1, 1]} : vector<8x16xf32> to vector<7x16xf32>
    %576 = tpu.concatenate %575, %574 in 0 : vector<7x16xf32>, vector<1x16xf32> -> vector<8x16xf32>
    %cst_53 = arith.constant 0.000000e+00 : f32
    %577 = vector.broadcast %cst_53 : f32 to vector<8x1xf32>
    %578 = vector.extract_strided_slice %506 {offsets = [0, 0], sizes = [8, 15], strides = [1, 1]} : vector<8x16xf32> to vector<8x15xf32>
    %579 = tpu.concatenate %577, %578 in 1 : vector<8x1xf32>, vector<8x15xf32> -> vector<8x16xf32>
    %cst_54 = arith.constant 0.000000e+00 : f32
    %580 = vector.broadcast %cst_54 : f32 to vector<8x1xf32>
    %581 = vector.extract_strided_slice %506 {offsets = [0, 1], sizes = [8, 15], strides = [1, 1]} : vector<8x16xf32> to vector<8x15xf32>
    %582 = tpu.concatenate %581, %580 in 1 : vector<8x15xf32>, vector<8x1xf32> -> vector<8x16xf32>
    %cst_55 = arith.constant 0.000000e+00 : f32
    %583 = vector.broadcast %cst_55 : f32 to vector<8x1xf32>
    %584 = vector.extract_strided_slice %563 {offsets = [0, 0], sizes = [8, 15], strides = [1, 1]} : vector<8x16xf32> to vector<8x15xf32>
    %585 = tpu.concatenate %583, %584 in 1 : vector<8x1xf32>, vector<8x15xf32> -> vector<8x16xf32>
    %cst_56 = arith.constant 0.000000e+00 : f32
    %586 = vector.broadcast %cst_56 : f32 to vector<8x1xf32>
    %587 = vector.extract_strided_slice %563 {offsets = [0, 1], sizes = [8, 15], strides = [1, 1]} : vector<8x16xf32> to vector<8x15xf32>
    %588 = tpu.concatenate %587, %586 in 1 : vector<8x15xf32>, vector<8x1xf32> -> vector<8x16xf32>
    %c48 = arith.constant 48 : index
    %589 = memref.load %arg3[%c48] : memref<205xf32, #tpu.memory_space<smem>>
    %590 = vector.broadcast %589 : f32 to vector<8x16xf32>
    %591 = arith.mulf %590, %567 : vector<8x16xf32>
    %c132 = arith.constant 132 : index
    %592 = memref.load %arg3[%c132] : memref<205xf32, #tpu.memory_space<smem>>
    %593 = vector.broadcast %592 : f32 to vector<8x16xf32>
    %594 = arith.mulf %593, %579 : vector<8x16xf32>
    %595 = arith.addf %591, %594 : vector<8x16xf32>
    %c49 = arith.constant 49 : index
    %596 = memref.load %arg3[%c49] : memref<205xf32, #tpu.memory_space<smem>>
    %597 = vector.broadcast %596 : f32 to vector<8x16xf32>
    %598 = arith.mulf %597, %506 : vector<8x16xf32>
    %c133 = arith.constant 133 : index
    %599 = memref.load %arg3[%c133] : memref<205xf32, #tpu.memory_space<smem>>
    %600 = vector.broadcast %599 : f32 to vector<8x16xf32>
    %601 = arith.mulf %600, %506 : vector<8x16xf32>
    %602 = arith.addf %598, %601 : vector<8x16xf32>
    %603 = arith.addf %595, %602 : vector<8x16xf32>
    %c50 = arith.constant 50 : index
    %604 = memref.load %arg3[%c50] : memref<205xf32, #tpu.memory_space<smem>>
    %605 = vector.broadcast %604 : f32 to vector<8x16xf32>
    %606 = arith.mulf %605, %570 : vector<8x16xf32>
    %c134 = arith.constant 134 : index
    %607 = memref.load %arg3[%c134] : memref<205xf32, #tpu.memory_space<smem>>
    %608 = vector.broadcast %607 : f32 to vector<8x16xf32>
    %609 = arith.mulf %608, %582 : vector<8x16xf32>
    %610 = arith.addf %606, %609 : vector<8x16xf32>
    %611 = arith.addf %603, %610 : vector<8x16xf32>
    %c51 = arith.constant 51 : index
    %612 = memref.load %arg3[%c51] : memref<205xf32, #tpu.memory_space<smem>>
    %613 = vector.broadcast %612 : f32 to vector<8x16xf32>
    %614 = arith.mulf %613, %573 : vector<8x16xf32>
    %c135 = arith.constant 135 : index
    %615 = memref.load %arg3[%c135] : memref<205xf32, #tpu.memory_space<smem>>
    %616 = vector.broadcast %615 : f32 to vector<8x16xf32>
    %617 = arith.mulf %616, %585 : vector<8x16xf32>
    %618 = arith.addf %614, %617 : vector<8x16xf32>
    %619 = arith.addf %611, %618 : vector<8x16xf32>
    %c52 = arith.constant 52 : index
    %620 = memref.load %arg3[%c52] : memref<205xf32, #tpu.memory_space<smem>>
    %621 = vector.broadcast %620 : f32 to vector<8x16xf32>
    %622 = arith.mulf %621, %563 : vector<8x16xf32>
    %c136 = arith.constant 136 : index
    %623 = memref.load %arg3[%c136] : memref<205xf32, #tpu.memory_space<smem>>
    %624 = vector.broadcast %623 : f32 to vector<8x16xf32>
    %625 = arith.mulf %624, %563 : vector<8x16xf32>
    %626 = arith.addf %622, %625 : vector<8x16xf32>
    %627 = arith.addf %619, %626 : vector<8x16xf32>
    %c53 = arith.constant 53 : index
    %628 = memref.load %arg3[%c53] : memref<205xf32, #tpu.memory_space<smem>>
    %629 = vector.broadcast %628 : f32 to vector<8x16xf32>
    %630 = arith.mulf %629, %576 : vector<8x16xf32>
    %c137 = arith.constant 137 : index
    %631 = memref.load %arg3[%c137] : memref<205xf32, #tpu.memory_space<smem>>
    %632 = vector.broadcast %631 : f32 to vector<8x16xf32>
    %633 = arith.mulf %632, %588 : vector<8x16xf32>
    %634 = arith.addf %630, %633 : vector<8x16xf32>
    %635 = arith.addf %627, %634 : vector<8x16xf32>
    %c176 = arith.constant 176 : index
    %636 = memref.load %arg3[%c176] : memref<205xf32, #tpu.memory_space<smem>>
    %637 = vector.broadcast %636 : f32 to vector<8x16xf32>
    %638 = arith.addf %635, %637 : vector<8x16xf32>
    %cst_57 = arith.constant 0.000000e+00 : f32
    %639 = vector.broadcast %cst_57 : f32 to vector<8x16xf32>
    %640 = arith.cmpf ogt, %638, %639 : vector<8x16xf32>
    %641 = vector.broadcast %564 : f32 to vector<8x16xf32>
    %642 = arith.mulf %641, %638 : vector<8x16xf32>
    %643 = arith.select %640, %638, %642 : vector<8x16xi1>, vector<8x16xf32>
    %644 = arith.mulf %643, %7 : vector<8x16xf32>
    %645 = arith.addf %644, %506 : vector<8x16xf32>
    %c54 = arith.constant 54 : index
    %646 = memref.load %arg3[%c54] : memref<205xf32, #tpu.memory_space<smem>>
    %647 = vector.broadcast %646 : f32 to vector<8x16xf32>
    %648 = arith.mulf %647, %567 : vector<8x16xf32>
    %c138 = arith.constant 138 : index
    %649 = memref.load %arg3[%c138] : memref<205xf32, #tpu.memory_space<smem>>
    %650 = vector.broadcast %649 : f32 to vector<8x16xf32>
    %651 = arith.mulf %650, %579 : vector<8x16xf32>
    %652 = arith.addf %648, %651 : vector<8x16xf32>
    %c55 = arith.constant 55 : index
    %653 = memref.load %arg3[%c55] : memref<205xf32, #tpu.memory_space<smem>>
    %654 = vector.broadcast %653 : f32 to vector<8x16xf32>
    %655 = arith.mulf %654, %506 : vector<8x16xf32>
    %c139 = arith.constant 139 : index
    %656 = memref.load %arg3[%c139] : memref<205xf32, #tpu.memory_space<smem>>
    %657 = vector.broadcast %656 : f32 to vector<8x16xf32>
    %658 = arith.mulf %657, %506 : vector<8x16xf32>
    %659 = arith.addf %655, %658 : vector<8x16xf32>
    %660 = arith.addf %652, %659 : vector<8x16xf32>
    %c56 = arith.constant 56 : index
    %661 = memref.load %arg3[%c56] : memref<205xf32, #tpu.memory_space<smem>>
    %662 = vector.broadcast %661 : f32 to vector<8x16xf32>
    %663 = arith.mulf %662, %570 : vector<8x16xf32>
    %c140 = arith.constant 140 : index
    %664 = memref.load %arg3[%c140] : memref<205xf32, #tpu.memory_space<smem>>
    %665 = vector.broadcast %664 : f32 to vector<8x16xf32>
    %666 = arith.mulf %665, %582 : vector<8x16xf32>
    %667 = arith.addf %663, %666 : vector<8x16xf32>
    %668 = arith.addf %660, %667 : vector<8x16xf32>
    %c57 = arith.constant 57 : index
    %669 = memref.load %arg3[%c57] : memref<205xf32, #tpu.memory_space<smem>>
    %670 = vector.broadcast %669 : f32 to vector<8x16xf32>
    %671 = arith.mulf %670, %573 : vector<8x16xf32>
    %c141 = arith.constant 141 : index
    %672 = memref.load %arg3[%c141] : memref<205xf32, #tpu.memory_space<smem>>
    %673 = vector.broadcast %672 : f32 to vector<8x16xf32>
    %674 = arith.mulf %673, %585 : vector<8x16xf32>
    %675 = arith.addf %671, %674 : vector<8x16xf32>
    %676 = arith.addf %668, %675 : vector<8x16xf32>
    %c58 = arith.constant 58 : index
    %677 = memref.load %arg3[%c58] : memref<205xf32, #tpu.memory_space<smem>>
    %678 = vector.broadcast %677 : f32 to vector<8x16xf32>
    %679 = arith.mulf %678, %563 : vector<8x16xf32>
    %c142 = arith.constant 142 : index
    %680 = memref.load %arg3[%c142] : memref<205xf32, #tpu.memory_space<smem>>
    %681 = vector.broadcast %680 : f32 to vector<8x16xf32>
    %682 = arith.mulf %681, %563 : vector<8x16xf32>
    %683 = arith.addf %679, %682 : vector<8x16xf32>
    %684 = arith.addf %676, %683 : vector<8x16xf32>
    %c59 = arith.constant 59 : index
    %685 = memref.load %arg3[%c59] : memref<205xf32, #tpu.memory_space<smem>>
    %686 = vector.broadcast %685 : f32 to vector<8x16xf32>
    %687 = arith.mulf %686, %576 : vector<8x16xf32>
    %c143 = arith.constant 143 : index
    %688 = memref.load %arg3[%c143] : memref<205xf32, #tpu.memory_space<smem>>
    %689 = vector.broadcast %688 : f32 to vector<8x16xf32>
    %690 = arith.mulf %689, %588 : vector<8x16xf32>
    %691 = arith.addf %687, %690 : vector<8x16xf32>
    %692 = arith.addf %684, %691 : vector<8x16xf32>
    %c177 = arith.constant 177 : index
    %693 = memref.load %arg3[%c177] : memref<205xf32, #tpu.memory_space<smem>>
    %694 = vector.broadcast %693 : f32 to vector<8x16xf32>
    %695 = arith.addf %692, %694 : vector<8x16xf32>
    %cst_58 = arith.constant 0.000000e+00 : f32
    %696 = vector.broadcast %cst_58 : f32 to vector<8x16xf32>
    %697 = arith.cmpf ogt, %695, %696 : vector<8x16xf32>
    %698 = vector.broadcast %564 : f32 to vector<8x16xf32>
    %699 = arith.mulf %698, %695 : vector<8x16xf32>
    %700 = arith.select %697, %695, %699 : vector<8x16xi1>, vector<8x16xf32>
    %701 = arith.mulf %700, %7 : vector<8x16xf32>
    %702 = arith.addf %701, %563 : vector<8x16xf32>
    %c187 = arith.constant 187 : index
    %703 = memref.load %arg3[%c187] : memref<205xf32, #tpu.memory_space<smem>>
    %cst_59 = arith.constant 0.000000e+00 : f32
    %704 = vector.broadcast %cst_59 : f32 to vector<1x16xf32>
    %705 = vector.extract_strided_slice %645 {offsets = [0, 0], sizes = [7, 16], strides = [1, 1]} : vector<8x16xf32> to vector<7x16xf32>
    %706 = tpu.concatenate %704, %705 in 0 : vector<1x16xf32>, vector<7x16xf32> -> vector<8x16xf32>
    %cst_60 = arith.constant 0.000000e+00 : f32
    %707 = vector.broadcast %cst_60 : f32 to vector<1x16xf32>
    %708 = vector.extract_strided_slice %645 {offsets = [1, 0], sizes = [7, 16], strides = [1, 1]} : vector<8x16xf32> to vector<7x16xf32>
    %709 = tpu.concatenate %708, %707 in 0 : vector<7x16xf32>, vector<1x16xf32> -> vector<8x16xf32>
    %cst_61 = arith.constant 0.000000e+00 : f32
    %710 = vector.broadcast %cst_61 : f32 to vector<1x16xf32>
    %711 = vector.extract_strided_slice %702 {offsets = [0, 0], sizes = [7, 16], strides = [1, 1]} : vector<8x16xf32> to vector<7x16xf32>
    %712 = tpu.concatenate %710, %711 in 0 : vector<1x16xf32>, vector<7x16xf32> -> vector<8x16xf32>
    %cst_62 = arith.constant 0.000000e+00 : f32
    %713 = vector.broadcast %cst_62 : f32 to vector<1x16xf32>
    %714 = vector.extract_strided_slice %702 {offsets = [1, 0], sizes = [7, 16], strides = [1, 1]} : vector<8x16xf32> to vector<7x16xf32>
    %715 = tpu.concatenate %714, %713 in 0 : vector<7x16xf32>, vector<1x16xf32> -> vector<8x16xf32>
    %cst_63 = arith.constant 0.000000e+00 : f32
    %716 = vector.broadcast %cst_63 : f32 to vector<8x1xf32>
    %717 = vector.extract_strided_slice %645 {offsets = [0, 0], sizes = [8, 15], strides = [1, 1]} : vector<8x16xf32> to vector<8x15xf32>
    %718 = tpu.concatenate %716, %717 in 1 : vector<8x1xf32>, vector<8x15xf32> -> vector<8x16xf32>
    %cst_64 = arith.constant 0.000000e+00 : f32
    %719 = vector.broadcast %cst_64 : f32 to vector<8x1xf32>
    %720 = vector.extract_strided_slice %645 {offsets = [0, 1], sizes = [8, 15], strides = [1, 1]} : vector<8x16xf32> to vector<8x15xf32>
    %721 = tpu.concatenate %720, %719 in 1 : vector<8x15xf32>, vector<8x1xf32> -> vector<8x16xf32>
    %cst_65 = arith.constant 0.000000e+00 : f32
    %722 = vector.broadcast %cst_65 : f32 to vector<8x1xf32>
    %723 = vector.extract_strided_slice %702 {offsets = [0, 0], sizes = [8, 15], strides = [1, 1]} : vector<8x16xf32> to vector<8x15xf32>
    %724 = tpu.concatenate %722, %723 in 1 : vector<8x1xf32>, vector<8x15xf32> -> vector<8x16xf32>
    %cst_66 = arith.constant 0.000000e+00 : f32
    %725 = vector.broadcast %cst_66 : f32 to vector<8x1xf32>
    %726 = vector.extract_strided_slice %702 {offsets = [0, 1], sizes = [8, 15], strides = [1, 1]} : vector<8x16xf32> to vector<8x15xf32>
    %727 = tpu.concatenate %726, %725 in 1 : vector<8x15xf32>, vector<8x1xf32> -> vector<8x16xf32>
    %c60 = arith.constant 60 : index
    %728 = memref.load %arg3[%c60] : memref<205xf32, #tpu.memory_space<smem>>
    %729 = vector.broadcast %728 : f32 to vector<8x16xf32>
    %730 = arith.mulf %729, %706 : vector<8x16xf32>
    %c144 = arith.constant 144 : index
    %731 = memref.load %arg3[%c144] : memref<205xf32, #tpu.memory_space<smem>>
    %732 = vector.broadcast %731 : f32 to vector<8x16xf32>
    %733 = arith.mulf %732, %718 : vector<8x16xf32>
    %734 = arith.addf %730, %733 : vector<8x16xf32>
    %c61 = arith.constant 61 : index
    %735 = memref.load %arg3[%c61] : memref<205xf32, #tpu.memory_space<smem>>
    %736 = vector.broadcast %735 : f32 to vector<8x16xf32>
    %737 = arith.mulf %736, %645 : vector<8x16xf32>
    %c145 = arith.constant 145 : index
    %738 = memref.load %arg3[%c145] : memref<205xf32, #tpu.memory_space<smem>>
    %739 = vector.broadcast %738 : f32 to vector<8x16xf32>
    %740 = arith.mulf %739, %645 : vector<8x16xf32>
    %741 = arith.addf %737, %740 : vector<8x16xf32>
    %742 = arith.addf %734, %741 : vector<8x16xf32>
    %c62 = arith.constant 62 : index
    %743 = memref.load %arg3[%c62] : memref<205xf32, #tpu.memory_space<smem>>
    %744 = vector.broadcast %743 : f32 to vector<8x16xf32>
    %745 = arith.mulf %744, %709 : vector<8x16xf32>
    %c146 = arith.constant 146 : index
    %746 = memref.load %arg3[%c146] : memref<205xf32, #tpu.memory_space<smem>>
    %747 = vector.broadcast %746 : f32 to vector<8x16xf32>
    %748 = arith.mulf %747, %721 : vector<8x16xf32>
    %749 = arith.addf %745, %748 : vector<8x16xf32>
    %750 = arith.addf %742, %749 : vector<8x16xf32>
    %c63 = arith.constant 63 : index
    %751 = memref.load %arg3[%c63] : memref<205xf32, #tpu.memory_space<smem>>
    %752 = vector.broadcast %751 : f32 to vector<8x16xf32>
    %753 = arith.mulf %752, %712 : vector<8x16xf32>
    %c147 = arith.constant 147 : index
    %754 = memref.load %arg3[%c147] : memref<205xf32, #tpu.memory_space<smem>>
    %755 = vector.broadcast %754 : f32 to vector<8x16xf32>
    %756 = arith.mulf %755, %724 : vector<8x16xf32>
    %757 = arith.addf %753, %756 : vector<8x16xf32>
    %758 = arith.addf %750, %757 : vector<8x16xf32>
    %c64 = arith.constant 64 : index
    %759 = memref.load %arg3[%c64] : memref<205xf32, #tpu.memory_space<smem>>
    %760 = vector.broadcast %759 : f32 to vector<8x16xf32>
    %761 = arith.mulf %760, %702 : vector<8x16xf32>
    %c148 = arith.constant 148 : index
    %762 = memref.load %arg3[%c148] : memref<205xf32, #tpu.memory_space<smem>>
    %763 = vector.broadcast %762 : f32 to vector<8x16xf32>
    %764 = arith.mulf %763, %702 : vector<8x16xf32>
    %765 = arith.addf %761, %764 : vector<8x16xf32>
    %766 = arith.addf %758, %765 : vector<8x16xf32>
    %c65 = arith.constant 65 : index
    %767 = memref.load %arg3[%c65] : memref<205xf32, #tpu.memory_space<smem>>
    %768 = vector.broadcast %767 : f32 to vector<8x16xf32>
    %769 = arith.mulf %768, %715 : vector<8x16xf32>
    %c149 = arith.constant 149 : index
    %770 = memref.load %arg3[%c149] : memref<205xf32, #tpu.memory_space<smem>>
    %771 = vector.broadcast %770 : f32 to vector<8x16xf32>
    %772 = arith.mulf %771, %727 : vector<8x16xf32>
    %773 = arith.addf %769, %772 : vector<8x16xf32>
    %774 = arith.addf %766, %773 : vector<8x16xf32>
    %c178 = arith.constant 178 : index
    %775 = memref.load %arg3[%c178] : memref<205xf32, #tpu.memory_space<smem>>
    %776 = vector.broadcast %775 : f32 to vector<8x16xf32>
    %777 = arith.addf %774, %776 : vector<8x16xf32>
    %cst_67 = arith.constant 0.000000e+00 : f32
    %778 = vector.broadcast %cst_67 : f32 to vector<8x16xf32>
    %779 = arith.cmpf ogt, %777, %778 : vector<8x16xf32>
    %780 = vector.broadcast %703 : f32 to vector<8x16xf32>
    %781 = arith.mulf %780, %777 : vector<8x16xf32>
    %782 = arith.select %779, %777, %781 : vector<8x16xi1>, vector<8x16xf32>
    %783 = arith.mulf %782, %7 : vector<8x16xf32>
    %784 = arith.addf %783, %645 : vector<8x16xf32>
    %c66 = arith.constant 66 : index
    %785 = memref.load %arg3[%c66] : memref<205xf32, #tpu.memory_space<smem>>
    %786 = vector.broadcast %785 : f32 to vector<8x16xf32>
    %787 = arith.mulf %786, %706 : vector<8x16xf32>
    %c150 = arith.constant 150 : index
    %788 = memref.load %arg3[%c150] : memref<205xf32, #tpu.memory_space<smem>>
    %789 = vector.broadcast %788 : f32 to vector<8x16xf32>
    %790 = arith.mulf %789, %718 : vector<8x16xf32>
    %791 = arith.addf %787, %790 : vector<8x16xf32>
    %c67 = arith.constant 67 : index
    %792 = memref.load %arg3[%c67] : memref<205xf32, #tpu.memory_space<smem>>
    %793 = vector.broadcast %792 : f32 to vector<8x16xf32>
    %794 = arith.mulf %793, %645 : vector<8x16xf32>
    %c151 = arith.constant 151 : index
    %795 = memref.load %arg3[%c151] : memref<205xf32, #tpu.memory_space<smem>>
    %796 = vector.broadcast %795 : f32 to vector<8x16xf32>
    %797 = arith.mulf %796, %645 : vector<8x16xf32>
    %798 = arith.addf %794, %797 : vector<8x16xf32>
    %799 = arith.addf %791, %798 : vector<8x16xf32>
    %c68 = arith.constant 68 : index
    %800 = memref.load %arg3[%c68] : memref<205xf32, #tpu.memory_space<smem>>
    %801 = vector.broadcast %800 : f32 to vector<8x16xf32>
    %802 = arith.mulf %801, %709 : vector<8x16xf32>
    %c152 = arith.constant 152 : index
    %803 = memref.load %arg3[%c152] : memref<205xf32, #tpu.memory_space<smem>>
    %804 = vector.broadcast %803 : f32 to vector<8x16xf32>
    %805 = arith.mulf %804, %721 : vector<8x16xf32>
    %806 = arith.addf %802, %805 : vector<8x16xf32>
    %807 = arith.addf %799, %806 : vector<8x16xf32>
    %c69 = arith.constant 69 : index
    %808 = memref.load %arg3[%c69] : memref<205xf32, #tpu.memory_space<smem>>
    %809 = vector.broadcast %808 : f32 to vector<8x16xf32>
    %810 = arith.mulf %809, %712 : vector<8x16xf32>
    %c153 = arith.constant 153 : index
    %811 = memref.load %arg3[%c153] : memref<205xf32, #tpu.memory_space<smem>>
    %812 = vector.broadcast %811 : f32 to vector<8x16xf32>
    %813 = arith.mulf %812, %724 : vector<8x16xf32>
    %814 = arith.addf %810, %813 : vector<8x16xf32>
    %815 = arith.addf %807, %814 : vector<8x16xf32>
    %c70 = arith.constant 70 : index
    %816 = memref.load %arg3[%c70] : memref<205xf32, #tpu.memory_space<smem>>
    %817 = vector.broadcast %816 : f32 to vector<8x16xf32>
    %818 = arith.mulf %817, %702 : vector<8x16xf32>
    %c154 = arith.constant 154 : index
    %819 = memref.load %arg3[%c154] : memref<205xf32, #tpu.memory_space<smem>>
    %820 = vector.broadcast %819 : f32 to vector<8x16xf32>
    %821 = arith.mulf %820, %702 : vector<8x16xf32>
    %822 = arith.addf %818, %821 : vector<8x16xf32>
    %823 = arith.addf %815, %822 : vector<8x16xf32>
    %c71 = arith.constant 71 : index
    %824 = memref.load %arg3[%c71] : memref<205xf32, #tpu.memory_space<smem>>
    %825 = vector.broadcast %824 : f32 to vector<8x16xf32>
    %826 = arith.mulf %825, %715 : vector<8x16xf32>
    %c155 = arith.constant 155 : index
    %827 = memref.load %arg3[%c155] : memref<205xf32, #tpu.memory_space<smem>>
    %828 = vector.broadcast %827 : f32 to vector<8x16xf32>
    %829 = arith.mulf %828, %727 : vector<8x16xf32>
    %830 = arith.addf %826, %829 : vector<8x16xf32>
    %831 = arith.addf %823, %830 : vector<8x16xf32>
    %c179 = arith.constant 179 : index
    %832 = memref.load %arg3[%c179] : memref<205xf32, #tpu.memory_space<smem>>
    %833 = vector.broadcast %832 : f32 to vector<8x16xf32>
    %834 = arith.addf %831, %833 : vector<8x16xf32>
    %cst_68 = arith.constant 0.000000e+00 : f32
    %835 = vector.broadcast %cst_68 : f32 to vector<8x16xf32>
    %836 = arith.cmpf ogt, %834, %835 : vector<8x16xf32>
    %837 = vector.broadcast %703 : f32 to vector<8x16xf32>
    %838 = arith.mulf %837, %834 : vector<8x16xf32>
    %839 = arith.select %836, %834, %838 : vector<8x16xi1>, vector<8x16xf32>
    %840 = arith.mulf %839, %7 : vector<8x16xf32>
    %841 = arith.addf %840, %702 : vector<8x16xf32>
    %c188 = arith.constant 188 : index
    %842 = memref.load %arg3[%c188] : memref<205xf32, #tpu.memory_space<smem>>
    %cst_69 = arith.constant 0.000000e+00 : f32
    %843 = vector.broadcast %cst_69 : f32 to vector<1x16xf32>
    %844 = vector.extract_strided_slice %784 {offsets = [0, 0], sizes = [7, 16], strides = [1, 1]} : vector<8x16xf32> to vector<7x16xf32>
    %845 = tpu.concatenate %843, %844 in 0 : vector<1x16xf32>, vector<7x16xf32> -> vector<8x16xf32>
    %cst_70 = arith.constant 0.000000e+00 : f32
    %846 = vector.broadcast %cst_70 : f32 to vector<1x16xf32>
    %847 = vector.extract_strided_slice %784 {offsets = [1, 0], sizes = [7, 16], strides = [1, 1]} : vector<8x16xf32> to vector<7x16xf32>
    %848 = tpu.concatenate %847, %846 in 0 : vector<7x16xf32>, vector<1x16xf32> -> vector<8x16xf32>
    %cst_71 = arith.constant 0.000000e+00 : f32
    %849 = vector.broadcast %cst_71 : f32 to vector<1x16xf32>
    %850 = vector.extract_strided_slice %841 {offsets = [0, 0], sizes = [7, 16], strides = [1, 1]} : vector<8x16xf32> to vector<7x16xf32>
    %851 = tpu.concatenate %849, %850 in 0 : vector<1x16xf32>, vector<7x16xf32> -> vector<8x16xf32>
    %cst_72 = arith.constant 0.000000e+00 : f32
    %852 = vector.broadcast %cst_72 : f32 to vector<1x16xf32>
    %853 = vector.extract_strided_slice %841 {offsets = [1, 0], sizes = [7, 16], strides = [1, 1]} : vector<8x16xf32> to vector<7x16xf32>
    %854 = tpu.concatenate %853, %852 in 0 : vector<7x16xf32>, vector<1x16xf32> -> vector<8x16xf32>
    %cst_73 = arith.constant 0.000000e+00 : f32
    %855 = vector.broadcast %cst_73 : f32 to vector<8x1xf32>
    %856 = vector.extract_strided_slice %784 {offsets = [0, 0], sizes = [8, 15], strides = [1, 1]} : vector<8x16xf32> to vector<8x15xf32>
    %857 = tpu.concatenate %855, %856 in 1 : vector<8x1xf32>, vector<8x15xf32> -> vector<8x16xf32>
    %cst_74 = arith.constant 0.000000e+00 : f32
    %858 = vector.broadcast %cst_74 : f32 to vector<8x1xf32>
    %859 = vector.extract_strided_slice %784 {offsets = [0, 1], sizes = [8, 15], strides = [1, 1]} : vector<8x16xf32> to vector<8x15xf32>
    %860 = tpu.concatenate %859, %858 in 1 : vector<8x15xf32>, vector<8x1xf32> -> vector<8x16xf32>
    %cst_75 = arith.constant 0.000000e+00 : f32
    %861 = vector.broadcast %cst_75 : f32 to vector<8x1xf32>
    %862 = vector.extract_strided_slice %841 {offsets = [0, 0], sizes = [8, 15], strides = [1, 1]} : vector<8x16xf32> to vector<8x15xf32>
    %863 = tpu.concatenate %861, %862 in 1 : vector<8x1xf32>, vector<8x15xf32> -> vector<8x16xf32>
    %cst_76 = arith.constant 0.000000e+00 : f32
    %864 = vector.broadcast %cst_76 : f32 to vector<8x1xf32>
    %865 = vector.extract_strided_slice %841 {offsets = [0, 1], sizes = [8, 15], strides = [1, 1]} : vector<8x16xf32> to vector<8x15xf32>
    %866 = tpu.concatenate %865, %864 in 1 : vector<8x15xf32>, vector<8x1xf32> -> vector<8x16xf32>
    %c72 = arith.constant 72 : index
    %867 = memref.load %arg3[%c72] : memref<205xf32, #tpu.memory_space<smem>>
    %868 = vector.broadcast %867 : f32 to vector<8x16xf32>
    %869 = arith.mulf %868, %845 : vector<8x16xf32>
    %c156 = arith.constant 156 : index
    %870 = memref.load %arg3[%c156] : memref<205xf32, #tpu.memory_space<smem>>
    %871 = vector.broadcast %870 : f32 to vector<8x16xf32>
    %872 = arith.mulf %871, %857 : vector<8x16xf32>
    %873 = arith.addf %869, %872 : vector<8x16xf32>
    %c73 = arith.constant 73 : index
    %874 = memref.load %arg3[%c73] : memref<205xf32, #tpu.memory_space<smem>>
    %875 = vector.broadcast %874 : f32 to vector<8x16xf32>
    %876 = arith.mulf %875, %784 : vector<8x16xf32>
    %c157 = arith.constant 157 : index
    %877 = memref.load %arg3[%c157] : memref<205xf32, #tpu.memory_space<smem>>
    %878 = vector.broadcast %877 : f32 to vector<8x16xf32>
    %879 = arith.mulf %878, %784 : vector<8x16xf32>
    %880 = arith.addf %876, %879 : vector<8x16xf32>
    %881 = arith.addf %873, %880 : vector<8x16xf32>
    %c74 = arith.constant 74 : index
    %882 = memref.load %arg3[%c74] : memref<205xf32, #tpu.memory_space<smem>>
    %883 = vector.broadcast %882 : f32 to vector<8x16xf32>
    %884 = arith.mulf %883, %848 : vector<8x16xf32>
    %c158 = arith.constant 158 : index
    %885 = memref.load %arg3[%c158] : memref<205xf32, #tpu.memory_space<smem>>
    %886 = vector.broadcast %885 : f32 to vector<8x16xf32>
    %887 = arith.mulf %886, %860 : vector<8x16xf32>
    %888 = arith.addf %884, %887 : vector<8x16xf32>
    %889 = arith.addf %881, %888 : vector<8x16xf32>
    %c75 = arith.constant 75 : index
    %890 = memref.load %arg3[%c75] : memref<205xf32, #tpu.memory_space<smem>>
    %891 = vector.broadcast %890 : f32 to vector<8x16xf32>
    %892 = arith.mulf %891, %851 : vector<8x16xf32>
    %c159 = arith.constant 159 : index
    %893 = memref.load %arg3[%c159] : memref<205xf32, #tpu.memory_space<smem>>
    %894 = vector.broadcast %893 : f32 to vector<8x16xf32>
    %895 = arith.mulf %894, %863 : vector<8x16xf32>
    %896 = arith.addf %892, %895 : vector<8x16xf32>
    %897 = arith.addf %889, %896 : vector<8x16xf32>
    %c76 = arith.constant 76 : index
    %898 = memref.load %arg3[%c76] : memref<205xf32, #tpu.memory_space<smem>>
    %899 = vector.broadcast %898 : f32 to vector<8x16xf32>
    %900 = arith.mulf %899, %841 : vector<8x16xf32>
    %c160 = arith.constant 160 : index
    %901 = memref.load %arg3[%c160] : memref<205xf32, #tpu.memory_space<smem>>
    %902 = vector.broadcast %901 : f32 to vector<8x16xf32>
    %903 = arith.mulf %902, %841 : vector<8x16xf32>
    %904 = arith.addf %900, %903 : vector<8x16xf32>
    %905 = arith.addf %897, %904 : vector<8x16xf32>
    %c77 = arith.constant 77 : index
    %906 = memref.load %arg3[%c77] : memref<205xf32, #tpu.memory_space<smem>>
    %907 = vector.broadcast %906 : f32 to vector<8x16xf32>
    %908 = arith.mulf %907, %854 : vector<8x16xf32>
    %c161 = arith.constant 161 : index
    %909 = memref.load %arg3[%c161] : memref<205xf32, #tpu.memory_space<smem>>
    %910 = vector.broadcast %909 : f32 to vector<8x16xf32>
    %911 = arith.mulf %910, %866 : vector<8x16xf32>
    %912 = arith.addf %908, %911 : vector<8x16xf32>
    %913 = arith.addf %905, %912 : vector<8x16xf32>
    %c180 = arith.constant 180 : index
    %914 = memref.load %arg3[%c180] : memref<205xf32, #tpu.memory_space<smem>>
    %915 = vector.broadcast %914 : f32 to vector<8x16xf32>
    %916 = arith.addf %913, %915 : vector<8x16xf32>
    %cst_77 = arith.constant 0.000000e+00 : f32
    %917 = vector.broadcast %cst_77 : f32 to vector<8x16xf32>
    %918 = arith.cmpf ogt, %916, %917 : vector<8x16xf32>
    %919 = vector.broadcast %842 : f32 to vector<8x16xf32>
    %920 = arith.mulf %919, %916 : vector<8x16xf32>
    %921 = arith.select %918, %916, %920 : vector<8x16xi1>, vector<8x16xf32>
    %922 = arith.mulf %921, %7 : vector<8x16xf32>
    %923 = arith.addf %922, %784 : vector<8x16xf32>
    %c78 = arith.constant 78 : index
    %924 = memref.load %arg3[%c78] : memref<205xf32, #tpu.memory_space<smem>>
    %925 = vector.broadcast %924 : f32 to vector<8x16xf32>
    %926 = arith.mulf %925, %845 : vector<8x16xf32>
    %c162 = arith.constant 162 : index
    %927 = memref.load %arg3[%c162] : memref<205xf32, #tpu.memory_space<smem>>
    %928 = vector.broadcast %927 : f32 to vector<8x16xf32>
    %929 = arith.mulf %928, %857 : vector<8x16xf32>
    %930 = arith.addf %926, %929 : vector<8x16xf32>
    %c79 = arith.constant 79 : index
    %931 = memref.load %arg3[%c79] : memref<205xf32, #tpu.memory_space<smem>>
    %932 = vector.broadcast %931 : f32 to vector<8x16xf32>
    %933 = arith.mulf %932, %784 : vector<8x16xf32>
    %c163 = arith.constant 163 : index
    %934 = memref.load %arg3[%c163] : memref<205xf32, #tpu.memory_space<smem>>
    %935 = vector.broadcast %934 : f32 to vector<8x16xf32>
    %936 = arith.mulf %935, %784 : vector<8x16xf32>
    %937 = arith.addf %933, %936 : vector<8x16xf32>
    %938 = arith.addf %930, %937 : vector<8x16xf32>
    %c80 = arith.constant 80 : index
    %939 = memref.load %arg3[%c80] : memref<205xf32, #tpu.memory_space<smem>>
    %940 = vector.broadcast %939 : f32 to vector<8x16xf32>
    %941 = arith.mulf %940, %848 : vector<8x16xf32>
    %c164 = arith.constant 164 : index
    %942 = memref.load %arg3[%c164] : memref<205xf32, #tpu.memory_space<smem>>
    %943 = vector.broadcast %942 : f32 to vector<8x16xf32>
    %944 = arith.mulf %943, %860 : vector<8x16xf32>
    %945 = arith.addf %941, %944 : vector<8x16xf32>
    %946 = arith.addf %938, %945 : vector<8x16xf32>
    %c81 = arith.constant 81 : index
    %947 = memref.load %arg3[%c81] : memref<205xf32, #tpu.memory_space<smem>>
    %948 = vector.broadcast %947 : f32 to vector<8x16xf32>
    %949 = arith.mulf %948, %851 : vector<8x16xf32>
    %c165 = arith.constant 165 : index
    %950 = memref.load %arg3[%c165] : memref<205xf32, #tpu.memory_space<smem>>
    %951 = vector.broadcast %950 : f32 to vector<8x16xf32>
    %952 = arith.mulf %951, %863 : vector<8x16xf32>
    %953 = arith.addf %949, %952 : vector<8x16xf32>
    %954 = arith.addf %946, %953 : vector<8x16xf32>
    %c82 = arith.constant 82 : index
    %955 = memref.load %arg3[%c82] : memref<205xf32, #tpu.memory_space<smem>>
    %956 = vector.broadcast %955 : f32 to vector<8x16xf32>
    %957 = arith.mulf %956, %841 : vector<8x16xf32>
    %c166 = arith.constant 166 : index
    %958 = memref.load %arg3[%c166] : memref<205xf32, #tpu.memory_space<smem>>
    %959 = vector.broadcast %958 : f32 to vector<8x16xf32>
    %960 = arith.mulf %959, %841 : vector<8x16xf32>
    %961 = arith.addf %957, %960 : vector<8x16xf32>
    %962 = arith.addf %954, %961 : vector<8x16xf32>
    %c83 = arith.constant 83 : index
    %963 = memref.load %arg3[%c83] : memref<205xf32, #tpu.memory_space<smem>>
    %964 = vector.broadcast %963 : f32 to vector<8x16xf32>
    %965 = arith.mulf %964, %854 : vector<8x16xf32>
    %c167 = arith.constant 167 : index
    %966 = memref.load %arg3[%c167] : memref<205xf32, #tpu.memory_space<smem>>
    %967 = vector.broadcast %966 : f32 to vector<8x16xf32>
    %968 = arith.mulf %967, %866 : vector<8x16xf32>
    %969 = arith.addf %965, %968 : vector<8x16xf32>
    %970 = arith.addf %962, %969 : vector<8x16xf32>
    %c181 = arith.constant 181 : index
    %971 = memref.load %arg3[%c181] : memref<205xf32, #tpu.memory_space<smem>>
    %972 = vector.broadcast %971 : f32 to vector<8x16xf32>
    %973 = arith.addf %970, %972 : vector<8x16xf32>
    %cst_78 = arith.constant 0.000000e+00 : f32
    %974 = vector.broadcast %cst_78 : f32 to vector<8x16xf32>
    %975 = arith.cmpf ogt, %973, %974 : vector<8x16xf32>
    %976 = vector.broadcast %842 : f32 to vector<8x16xf32>
    %977 = arith.mulf %976, %973 : vector<8x16xf32>
    %978 = arith.select %975, %973, %977 : vector<8x16xi1>, vector<8x16xf32>
    %979 = arith.mulf %978, %7 : vector<8x16xf32>
    %980 = arith.addf %979, %841 : vector<8x16xf32>
    %c202 = arith.constant 202 : index
    %981 = memref.load %arg3[%c202] : memref<205xf32, #tpu.memory_space<smem>>
    %982 = vector.broadcast %981 : f32 to vector<8x16xf32>
    %983 = arith.mulf %982, %923 : vector<8x16xf32>
    %c203 = arith.constant 203 : index
    %984 = memref.load %arg3[%c203] : memref<205xf32, #tpu.memory_space<smem>>
    %985 = vector.broadcast %984 : f32 to vector<8x16xf32>
    %986 = arith.mulf %985, %980 : vector<8x16xf32>
    %987 = arith.addf %983, %986 : vector<8x16xf32>
    %c204 = arith.constant 204 : index
    %988 = memref.load %arg3[%c204] : memref<205xf32, #tpu.memory_space<smem>>
    %cst_79 = arith.constant 0.000000e+00 : f32
    %989 = vector.broadcast %cst_79 : f32 to vector<1x16xf32>
    %990 = vector.extract_strided_slice %923 {offsets = [0, 0], sizes = [7, 16], strides = [1, 1]} : vector<8x16xf32> to vector<7x16xf32>
    %991 = tpu.concatenate %989, %990 in 0 : vector<1x16xf32>, vector<7x16xf32> -> vector<8x16xf32>
    %cst_80 = arith.constant 0.000000e+00 : f32
    %992 = vector.broadcast %cst_80 : f32 to vector<1x16xf32>
    %993 = vector.extract_strided_slice %923 {offsets = [1, 0], sizes = [7, 16], strides = [1, 1]} : vector<8x16xf32> to vector<7x16xf32>
    %994 = tpu.concatenate %993, %992 in 0 : vector<7x16xf32>, vector<1x16xf32> -> vector<8x16xf32>
    %cst_81 = arith.constant 0.000000e+00 : f32
    %995 = vector.broadcast %cst_81 : f32 to vector<1x16xf32>
    %996 = vector.extract_strided_slice %980 {offsets = [0, 0], sizes = [7, 16], strides = [1, 1]} : vector<8x16xf32> to vector<7x16xf32>
    %997 = tpu.concatenate %995, %996 in 0 : vector<1x16xf32>, vector<7x16xf32> -> vector<8x16xf32>
    %cst_82 = arith.constant 0.000000e+00 : f32
    %998 = vector.broadcast %cst_82 : f32 to vector<1x16xf32>
    %999 = vector.extract_strided_slice %980 {offsets = [1, 0], sizes = [7, 16], strides = [1, 1]} : vector<8x16xf32> to vector<7x16xf32>
    %1000 = tpu.concatenate %999, %998 in 0 : vector<7x16xf32>, vector<1x16xf32> -> vector<8x16xf32>
    %cst_83 = arith.constant 0.000000e+00 : f32
    %1001 = vector.broadcast %cst_83 : f32 to vector<8x1xf32>
    %1002 = vector.extract_strided_slice %923 {offsets = [0, 0], sizes = [8, 15], strides = [1, 1]} : vector<8x16xf32> to vector<8x15xf32>
    %1003 = tpu.concatenate %1001, %1002 in 1 : vector<8x1xf32>, vector<8x15xf32> -> vector<8x16xf32>
    %cst_84 = arith.constant 0.000000e+00 : f32
    %1004 = vector.broadcast %cst_84 : f32 to vector<8x1xf32>
    %1005 = vector.extract_strided_slice %923 {offsets = [0, 1], sizes = [8, 15], strides = [1, 1]} : vector<8x16xf32> to vector<8x15xf32>
    %1006 = tpu.concatenate %1005, %1004 in 1 : vector<8x15xf32>, vector<8x1xf32> -> vector<8x16xf32>
    %cst_85 = arith.constant 0.000000e+00 : f32
    %1007 = vector.broadcast %cst_85 : f32 to vector<8x1xf32>
    %1008 = vector.extract_strided_slice %980 {offsets = [0, 0], sizes = [8, 15], strides = [1, 1]} : vector<8x16xf32> to vector<8x15xf32>
    %1009 = tpu.concatenate %1007, %1008 in 1 : vector<8x1xf32>, vector<8x15xf32> -> vector<8x16xf32>
    %cst_86 = arith.constant 0.000000e+00 : f32
    %1010 = vector.broadcast %cst_86 : f32 to vector<8x1xf32>
    %1011 = vector.extract_strided_slice %980 {offsets = [0, 1], sizes = [8, 15], strides = [1, 1]} : vector<8x16xf32> to vector<8x15xf32>
    %1012 = tpu.concatenate %1011, %1010 in 1 : vector<8x15xf32>, vector<8x1xf32> -> vector<8x16xf32>
    %c189 = arith.constant 189 : index
    %1013 = memref.load %arg3[%c189] : memref<205xf32, #tpu.memory_space<smem>>
    %1014 = vector.broadcast %1013 : f32 to vector<8x16xf32>
    %1015 = arith.mulf %1014, %991 : vector<8x16xf32>
    %c195 = arith.constant 195 : index
    %1016 = memref.load %arg3[%c195] : memref<205xf32, #tpu.memory_space<smem>>
    %1017 = vector.broadcast %1016 : f32 to vector<8x16xf32>
    %1018 = arith.mulf %1017, %1003 : vector<8x16xf32>
    %1019 = arith.addf %1015, %1018 : vector<8x16xf32>
    %c190 = arith.constant 190 : index
    %1020 = memref.load %arg3[%c190] : memref<205xf32, #tpu.memory_space<smem>>
    %1021 = vector.broadcast %1020 : f32 to vector<8x16xf32>
    %1022 = arith.mulf %1021, %923 : vector<8x16xf32>
    %c196 = arith.constant 196 : index
    %1023 = memref.load %arg3[%c196] : memref<205xf32, #tpu.memory_space<smem>>
    %1024 = vector.broadcast %1023 : f32 to vector<8x16xf32>
    %1025 = arith.mulf %1024, %923 : vector<8x16xf32>
    %1026 = arith.addf %1022, %1025 : vector<8x16xf32>
    %1027 = arith.addf %1019, %1026 : vector<8x16xf32>
    %c191 = arith.constant 191 : index
    %1028 = memref.load %arg3[%c191] : memref<205xf32, #tpu.memory_space<smem>>
    %1029 = vector.broadcast %1028 : f32 to vector<8x16xf32>
    %1030 = arith.mulf %1029, %994 : vector<8x16xf32>
    %c197 = arith.constant 197 : index
    %1031 = memref.load %arg3[%c197] : memref<205xf32, #tpu.memory_space<smem>>
    %1032 = vector.broadcast %1031 : f32 to vector<8x16xf32>
    %1033 = arith.mulf %1032, %1006 : vector<8x16xf32>
    %1034 = arith.addf %1030, %1033 : vector<8x16xf32>
    %1035 = arith.addf %1027, %1034 : vector<8x16xf32>
    %c192 = arith.constant 192 : index
    %1036 = memref.load %arg3[%c192] : memref<205xf32, #tpu.memory_space<smem>>
    %1037 = vector.broadcast %1036 : f32 to vector<8x16xf32>
    %1038 = arith.mulf %1037, %997 : vector<8x16xf32>
    %c198 = arith.constant 198 : index
    %1039 = memref.load %arg3[%c198] : memref<205xf32, #tpu.memory_space<smem>>
    %1040 = vector.broadcast %1039 : f32 to vector<8x16xf32>
    %1041 = arith.mulf %1040, %1009 : vector<8x16xf32>
    %1042 = arith.addf %1038, %1041 : vector<8x16xf32>
    %1043 = arith.addf %1035, %1042 : vector<8x16xf32>
    %c193 = arith.constant 193 : index
    %1044 = memref.load %arg3[%c193] : memref<205xf32, #tpu.memory_space<smem>>
    %1045 = vector.broadcast %1044 : f32 to vector<8x16xf32>
    %1046 = arith.mulf %1045, %980 : vector<8x16xf32>
    %c199 = arith.constant 199 : index
    %1047 = memref.load %arg3[%c199] : memref<205xf32, #tpu.memory_space<smem>>
    %1048 = vector.broadcast %1047 : f32 to vector<8x16xf32>
    %1049 = arith.mulf %1048, %980 : vector<8x16xf32>
    %1050 = arith.addf %1046, %1049 : vector<8x16xf32>
    %1051 = arith.addf %1043, %1050 : vector<8x16xf32>
    %c194 = arith.constant 194 : index
    %1052 = memref.load %arg3[%c194] : memref<205xf32, #tpu.memory_space<smem>>
    %1053 = vector.broadcast %1052 : f32 to vector<8x16xf32>
    %1054 = arith.mulf %1053, %1000 : vector<8x16xf32>
    %c200 = arith.constant 200 : index
    %1055 = memref.load %arg3[%c200] : memref<205xf32, #tpu.memory_space<smem>>
    %1056 = vector.broadcast %1055 : f32 to vector<8x16xf32>
    %1057 = arith.mulf %1056, %1012 : vector<8x16xf32>
    %1058 = arith.addf %1054, %1057 : vector<8x16xf32>
    %1059 = arith.addf %1051, %1058 : vector<8x16xf32>
    %c201 = arith.constant 201 : index
    %1060 = memref.load %arg3[%c201] : memref<205xf32, #tpu.memory_space<smem>>
    %1061 = vector.broadcast %1060 : f32 to vector<8x16xf32>
    %1062 = arith.addf %1059, %1061 : vector<8x16xf32>
    %cst_87 = arith.constant 0.000000e+00 : f32
    %1063 = vector.broadcast %cst_87 : f32 to vector<8x16xf32>
    %1064 = arith.cmpf ogt, %1062, %1063 : vector<8x16xf32>
    %1065 = vector.broadcast %988 : f32 to vector<8x16xf32>
    %1066 = arith.mulf %1065, %1062 : vector<8x16xf32>
    %1067 = arith.select %1064, %1062, %1066 : vector<8x16xi1>, vector<8x16xf32>
    %1068 = arith.mulf %1067, %7 : vector<8x16xf32>
    %1069 = arith.addf %1068, %987 : vector<8x16xf32>
    %1070 = arith.negf %1069 : vector<8x16xf32>
    %1071 = math.exp %1070 : vector<8x16xf32>
    %cst_88 = arith.constant 1.000000e+00 : f32
    %1072 = vector.broadcast %cst_88 : f32 to vector<8x16xf32>
    %1073 = arith.addf %1072, %1071 : vector<8x16xf32>
    %1074 = arith.divf %1072, %1073 : vector<8x16xf32>
    %c0_89 = arith.constant 0 : index
    %c0_90 = arith.constant 0 : index
    %c0_91 = arith.constant 0 : index
    %c0_92 = arith.constant 0 : index
    %1075 = vector.load %arg1[%c0_89, %c0_90, %c0_91, %c0_92] : memref<1x8x16x128xf32, #tpu.memory_space<vmem>>, vector<1x8x16x128xf32>
    %1076 = vector.shape_cast %1075 : vector<1x8x16x128xf32> to vector<8x16x128xf32>
    %1077 = vector.shape_cast %1074 : vector<8x16xf32> to vector<8x16x1xf32>
    %1078 = vector.broadcast %1077 : vector<8x16x1xf32> to vector<8x16x128xf32>
    %1079 = arith.mulf %1076, %1078 : vector<8x16x128xf32>
    %c0_93 = arith.constant 0 : index
    %c0_94 = arith.constant 0 : index
    %c0_95 = arith.constant 0 : index
    %c0_96 = arith.constant 0 : index
    %1080 = vector.load %arg4[%c0_93, %c0_94, %c0_95, %c0_96] : memref<1x8x16x128xf32, #tpu.memory_space<vmem>>, vector<1x8x16x128xf32>
    %1081 = vector.shape_cast %1080 : vector<1x8x16x128xf32> to vector<8x16x128xf32>
    %1082 = vector.shape_cast %1079 : vector<8x16x128xf32> to vector<1x8x16x128xf32>
    tpu.vector_store %arg4[%c0_93, %c0_94, %c0_95, %c0_96], %1082 {strides = array<i32>} : memref<1x8x16x128xf32, #tpu.memory_space<vmem>>, vector<1x8x16x128xf32>,
    return
  }
  func.func @transform_0(%arg0: i32) -> (i32, i32, i32, i32) {
    %c0_i32 = arith.constant 0 : i32
    %c0_i32_0 = arith.constant 0 : i32
    %c0_i32_1 = arith.constant 0 : i32
    %c0_i32_2 = arith.constant 0 : i32
    return %arg0, %c0_i32, %c0_i32_0, %c0_i32_1 : i32, i32, i32, i32
  }
  func.func @transform_1(%arg0: i32) -> (i32, i32, i32) {
    %c0_i32 = arith.constant 0 : i32
    %c0_i32_0 = arith.constant 0 : i32
    %c0_i32_1 = arith.constant 0 : i32
    return %arg0, %c0_i32, %c0_i32_0 : i32, i32, i32
  }
  func.func @transform_2(%arg0: i32) -> i32 {
    %c0_i32 = arith.constant 0 : i32
    %c0_i32_0 = arith.constant 0 : i32
    return %c0_i32 : i32
  }
  func.func @transform_3(%arg0: i32) -> (i32, i32, i32, i32) {
    %c0_i32 = arith.constant 0 : i32
    %c0_i32_0 = arith.constant 0 : i32
    %c0_i32_1 = arith.constant 0 : i32
    %c0_i32_2 = arith.constant 0 : i32
    return %arg0, %c0_i32, %c0_i32_0, %c0_i32_1 : i32, i32, i32, i32
  }
}

</mosaic_0001>

<llo_original>
// kernel: tpu_custom_call.1
$region0: #{tpu_custom_call.1}
  #allocation0 [shape = 'u32[]', space=smem, size = 0x4, offset = 0x4, fixed_abs, tag = 'smem constant byte address 0x4 - core index']
  #allocation1 [shape = 'u32[144,128]{1,0:T(1,128)}', space=vmem, size = 0x12000, scoped, tag = 'internal scratch']
  %s0 = inlined_call_operand.hbm [shape: f32[2,8,16,128], index: 0, kind: input, shape index: {}]
  %s1 = inlined_call_operand.hbm [shape: f32[2,8,16], index: 1, kind: input, shape index: {}]
  %s2 = inlined_call_operand.vmem [shape: f32[205], index: 2, kind: input, shape index: {}]
  %s3 = inlined_call_operand.hbm [shape: f32[2,8,16,128], index: 3, kind: output, shape index: {}]
  %s4 = sld [smem:[#allocation0]]
  $region57: #{tpu_custom_call.1} parent=0
    _
  %s6 = ssub.s32 1, %s4
  %s7 = scalar_select 0, %s6, %s4
  $region1: #{tpu_custom_call.1} parent=0
    #allocation2 [shape = 'u8[131072]{0}', space=vmem, size = 0x20000, scoped, tag = 'input window, operand 0']
    #allocation3 [shape = 's32[2]{0}', space=sflag, size = 0x8, scoped, tag = 'scoped memory for tpu_custom_call.1']
    #allocation4 [shape = 's32[2]{0}', space=sflag, size = 0x8, scoped, tag = 'scoped memory for tpu_custom_call.1']
    #allocation5 [shape = 's32[2]{0}', space=sflag, size = 0x8, scoped, tag = 'scoped memory for tpu_custom_call.1']
    #allocation6 [shape = 'u8[8192]{0}', space=vmem, size = 0x2000, scoped, tag = 'input window, operand 1']
    #allocation7 [shape = 's32[2]{0}', space=sflag, size = 0x8, scoped, tag = 'scoped memory for tpu_custom_call.1']
    #allocation8 [shape = 'u8[1024]{0}', space=smem, size = 0x400, scoped, tag = 'input window, operand 2, single buffered']
    #allocation9 [shape = 'u8[131072]{0}', space=vmem, size = 0x20000, scoped, tag = 'output window, operand 0']
    %8 = vsyncpa [#allocation3], 0
    %s9 = scalar_lea.sflag [#allocation3], 1
    %10 = vsyncpa %s9, 0
    %11 = vsyncpa [#allocation7], 0
    %s12 = scalar_lea.sflag [#allocation7], 1
    %13 = vsyncpa %s12, 0
    %14 = vsyncpa [#allocation5], 0
    %15 = vsyncpa [#allocation4], 0
    %s16 = scalar_lea.sflag [#allocation4], 1
    %17 = vsyncpa %s16, 0
    loop: start=0, step=1, limit=4
    $region2: #{tpu_custom_call.1} parent=1 // loop_pre_header
      _
    $region3: #{tpu_custom_call.1} parent=1 // loop_header
      %s19 = sphi 0, %s23
      %p20 = scmp.ge.s32.totalorder %s19, 4
      %s29 = sphi 0, %s31
      %s32 = sphi 0, %s29
      %s33 = sphi 0, %s32
      %s49 = sphi 0, %s33
      %s55 = sphi 0, %s57
      %s58 = sphi 0, %s55
      %s59 = sphi 0, %s58
      %s75 = sphi 0, %s59
      %s79 = sphi 0, %s79
      %s81 = sphi 0, %s79
      %s82 = sphi 0, %s81
      %s96 = sphi 0, %s82
      %s102 = sphi 0, %s104
      %s105 = sphi 0, %s102
      %s106 = sphi 0, %s105
      %s122 = sphi 0, %s106
    $region4: #{tpu_custom_call.1} parent=1 // loop_header_branch
      %22 = sbr.rel (%p20) target = $region8
    $region5: #{tpu_custom_call.1} parent=1 // loop_body
      %s24 = ssub.s32 %s19, 1
      %s25 = ssub.s32 %s19, 2
      %s26 = sadd.s32 %s19, 1
      %s27 = ssub.s32 %s19, %s26
      %p28 = scmp.eq.s32.totalorder %s27, 0
      %s30 = sadd.s32 %s29, 1
      %s31 = scalar_select %p28, %s29, %s30
      %p34 = pneg %p28
      %p35 = scmp.eq.s32.totalorder %s19, 1
      %p36 = por %p34, %p35
      %p37 = scmp.ne.s32.totalorder %s29, %s32
      %p38 = scmp.eq.s32.totalorder %s19, 0
      %p39 = por %p37, %p38
      %p40 = scmp.ne.s32.totalorder %s29, %s32
      %p41 = scmp.eq.s32.totalorder %s24, 1
      %p42 = por %p40, %p41
      %p43 = scmp.ne.s32.totalorder %s32, %s33
      %p44 = scmp.eq.s32.totalorder %s24, 0
      %p45 = por %p43, %p44
      %p46 = scmp.ne.s32.totalorder %s32, %s33
      %p47 = scmp.eq.s32.totalorder %s25, 1
      %p48 = por %p46, %p47
      %p50 = scmp.ne.s32.totalorder %s33, %s49
      %p51 = scmp.eq.s32.totalorder %s25, 0
      %p52 = por %p50, %p51
      %s53 = ssub.s32 %s19, %s26
      %p54 = scmp.eq.s32.totalorder %s53, 0
      %s56 = sadd.s32 %s55, 1
      %s57 = scalar_select %p54, %s55, %s56
      %p60 = pneg %p54
      %p61 = scmp.eq.s32.totalorder %s19, 1
      %p62 = por %p60, %p61
      %p63 = scmp.ne.s32.totalorder %s55, %s58
      %p64 = scmp.eq.s32.totalorder %s19, 0
      %p65 = por %p63, %p64
      %p66 = scmp.ne.s32.totalorder %s55, %s58
      %p67 = scmp.eq.s32.totalorder %s24, 1
      %p68 = por %p66, %p67
      %p69 = scmp.ne.s32.totalorder %s58, %s59
      %p70 = scmp.eq.s32.totalorder %s24, 0
      %p71 = por %p69, %p70
      %p72 = scmp.ne.s32.totalorder %s58, %s59
      %p73 = scmp.eq.s32.totalorder %s25, 1
      %p74 = por %p72, %p73
      %p76 = scmp.ne.s32.totalorder %s59, %s75
      %p77 = scmp.eq.s32.totalorder %s25, 0
      %p78 = por %p76, %p77
      %s80 = sadd.s32 %s79, 1
      %p83 = scmp.eq.s32.totalorder %s19, 1
      %p84 = scmp.ne.s32.totalorder %s79, %s81
      %p85 = scmp.eq.s32.totalorder %s19, 0
      %p86 = por %p84, %p85
      %p87 = scmp.ne.s32.totalorder %s79, %s81
      %p88 = scmp.eq.s32.totalorder %s24, 1
      %p89 = por %p87, %p88
      %p90 = scmp.ne.s32.totalorder %s81, %s82
      %p91 = scmp.eq.s32.totalorder %s24, 0
      %p92 = por %p90, %p91
      %p93 = scmp.ne.s32.totalorder %s81, %s82
      %p94 = scmp.eq.s32.totalorder %s25, 1
      %p95 = por %p93, %p94
      %p97 = scmp.ne.s32.totalorder %s82, %s96
      %p98 = scmp.eq.s32.totalorder %s25, 0
      %p99 = por %p97, %p98
      %s100 = ssub.s32 %s19, %s26
      %p101 = scmp.eq.s32.totalorder %s100, 0
      %s103 = sadd.s32 %s102, 1
      %s104 = scalar_select %p101, %s102, %s103
      %p107 = pneg %p101
      %p108 = scmp.eq.s32.totalorder %s19, 1
      %p109 = por %p107, %p108
      %p110 = scmp.ne.s32.totalorder %s102, %s105
      %p111 = scmp.eq.s32.totalorder %s19, 0
      %p112 = por %p110, %p111
      %p113 = scmp.ne.s32.totalorder %s102, %s105
      %p114 = scmp.eq.s32.totalorder %s24, 1
      %p115 = por %p113, %p114
      %p116 = scmp.ne.s32.totalorder %s105, %s106
      %p117 = scmp.eq.s32.totalorder %s24, 0
      %p118 = por %p116, %p117
      %p119 = scmp.ne.s32.totalorder %s105, %s106
      %p120 = scmp.eq.s32.totalorder %s25, 1
      %p121 = por %p119, %p120
      %p123 = scmp.ne.s32.totalorder %s106, %s122
      %p124 = scmp.eq.s32.totalorder %s25, 0
      %p125 = por %p123, %p124
      %p126 = scmp.le.s32.totalorder 1, %s19
      %p127 = scmp.lt.s32.totalorder %s19, 3
      %p128 = pnand %p126, %p127
      %p129 = pneg %p128
      // Predicated region
      $region9: #{tpu_custom_call.1} parent=5 // pred_check
        _
      $region10: #{tpu_custom_call.1} parent=5 // pred_check_branch
        %131 = sbr.rel (%p128) target = $region12
      $region11: #{tpu_custom_call.1} parent=5 // pred_region
        %s132 = ssub.s32 %s19, 1
        // Predicated region
        $region13: #{tpu_custom_call.1} parent=11 // pred_check
          %p133 = pneg %p92
        $region14: #{tpu_custom_call.1} parent=11 // pred_check_branch
          %135 = sbr.rel (%p133) target = $region16
        $region15: #{tpu_custom_call.1} parent=11 // pred_region
          %s137 = ssub.s32 32, 32
          %138 = vsyncadd [#allocation5], %s137
          %s140 = sshll.u32 %s2, 4
          %s141 = int_to_ptr.vmem [resolvable:$true] %s140
          %143 = dma.vmem_to_smem %s141, 32, [#allocation8], [#allocation5]
        $region16: #{tpu_custom_call.1} parent=11 // pred_fallthru
          _
      $region12: #{tpu_custom_call.1} parent=5 // pred_fallthru
        _
      %p144 = scmp.lt.s32.totalorder %s19, 2
      // Predicated region
      $region17: #{tpu_custom_call.1} parent=5 // pred_check
        %p145 = pneg %p144
      $region18: #{tpu_custom_call.1} parent=5 // pred_check_branch
        %147 = sbr.rel (%p145) target = $region20
      $region19: #{tpu_custom_call.1} parent=5 // pred_region
        // Predicated region
        $region21: #{tpu_custom_call.1} parent=19 // pred_check
          %p148 = pneg %p39
        $region22: #{tpu_custom_call.1} parent=19 // pred_check_branch
          %150 = sbr.rel (%p148) target = $region24
        $region23: #{tpu_custom_call.1} parent=19 // pred_region
          %s151 = sand.u32 %s29, 1
          %s152 = scalar_lea.sflag [#allocation3], %s151
          %s153 = sand.u32 %s29, 1
          %s154 = smul.addr %s153, 128
          %s155 = scalar_lea.vmem [#allocation2], %s154
          %s157 = ssub.s32 2048, 2048
          %158 = vsyncadd %s152, %s157
          %s159 = smul.addr %s19, 16
          %s160 = smul.addr %s159, 128
          %s161 = scalar_lea.hbm %s0, %s160
          %s162 = sshll.u32 %s155, 4
          %s163 = int_to_ptr.vmem [resolvable:$true] %s162
          %168 = dma.hbm_to_vmem [thread:$0]  %s161, 2048, %s163, %s152, 128, 128, 8
        $region24: #{tpu_custom_call.1} parent=19 // pred_fallthru
          _
        // Predicated region
        $region25: #{tpu_custom_call.1} parent=19 // pred_check
          %p169 = pneg %p65
        $region26: #{tpu_custom_call.1} parent=19 // pred_check_branch
          %171 = sbr.rel (%p169) target = $region28
        $region27: #{tpu_custom_call.1} parent=19 // pred_region
          %s172 = sand.u32 %s55, 1
          %s173 = scalar_lea.sflag [#allocation7], %s172
          %s174 = sand.u32 %s55, 1
          %s175 = smul.addr %s174, 8
          %s176 = scalar_lea.vmem [#allocation6], %s175
          %s178 = ssub.s32 128, 128
          %179 = vsyncadd %s173, %s178
          %s180 = smul.addr %s19, 128
          %s181 = scalar_lea.hbm %s1, %s180
          %s183 = sshll.u32 %s176, 4
          %s184 = int_to_ptr.vmem [resolvable:$true] %s183
          %186 = dma.hbm_to_vmem [thread:$0]  %s181, 128, %s184, %s173
        $region28: #{tpu_custom_call.1} parent=19 // pred_fallthru
          _
      $region20: #{tpu_custom_call.1} parent=5 // pred_fallthru
        _
      %p187 = scmp.le.s32.totalorder 1, %s19
      %p188 = scmp.lt.s32.totalorder %s19, 3
      %p189 = pnand %p187, %p188
      %p190 = pneg %p189
      // Predicated region
      $region29: #{tpu_custom_call.1} parent=5 // pred_check
        _
      $region30: #{tpu_custom_call.1} parent=5 // pred_check_branch
        %192 = sbr.rel (%p189) target = $region32
      $region31: #{tpu_custom_call.1} parent=5 // pred_region
        %s193 = ssub.s32 %s19, 1
        %s194 = sand.u32 %s32, 1
        %s195 = scalar_lea.sflag [#allocation3], %s194
        %s196 = sand.u32 %s32, 1
        %s197 = smul.addr %s196, 128
        %s198 = scalar_lea.vmem [#allocation2], %s197
        // Predicated region
        $region33: #{tpu_custom_call.1} parent=31 // pred_check
          %p199 = pneg %p45
        $region34: #{tpu_custom_call.1} parent=31 // pred_check_branch
          %201 = sbr.rel (%p199) target = $region36
        $region35: #{tpu_custom_call.1} parent=31 // pred_region
          %202 = dma.done %s195, 2048
        $region36: #{tpu_custom_call.1} parent=31 // pred_fallthru
          _
        %s203 = sand.u32 %s58, 1
        %s204 = scalar_lea.sflag [#allocation7], %s203
        %s205 = sand.u32 %s58, 1
        %s206 = smul.addr %s205, 8
        %s207 = scalar_lea.vmem [#allocation6], %s206
        // Predicated region
        $region37: #{tpu_custom_call.1} parent=31 // pred_check
          %p208 = pneg %p71
        $region38: #{tpu_custom_call.1} parent=31 // pred_check_branch
          %210 = sbr.rel (%p208) target = $region40
        $region39: #{tpu_custom_call.1} parent=31 // pred_region
          %211 = dma.done %s204, 128
        $region40: #{tpu_custom_call.1} parent=31 // pred_fallthru
          _
        // Predicated region
        $region41: #{tpu_custom_call.1} parent=31 // pred_check
          %p212 = pneg %p92
        $region42: #{tpu_custom_call.1} parent=31 // pred_check_branch
          %214 = sbr.rel (%p212) target = $region44
        $region43: #{tpu_custom_call.1} parent=31 // pred_region
          %215 = dma.done [#allocation5], 32
        $region44: #{tpu_custom_call.1} parent=31 // pred_fallthru
          _
        %216 = sfence
        %s217 = sand.u32 %s32, 1
        %s218 = scalar_lea.sflag [#allocation3], %s217
        %s219 = sand.u32 %s32, 1
        %s220 = smul.addr %s219, 128
        %s221 = scalar_lea.vmem [#allocation2], %s220
        %p222 = pneg %p45
        %p223 = pneg %p42
        %s224 = sand.u32 %s58, 1
        %s225 = scalar_lea.sflag [#allocation7], %s224
        %s226 = sand.u32 %s58, 1
        %s227 = smul.addr %s226, 8
        %s228 = scalar_lea.vmem [#allocation6], %s227
        %p229 = pneg %p71
        %p230 = pneg %p68
        %p231 = pneg %p92
        %p232 = pneg %p89
        %p233 = pneg %p118
        %p234 = pneg %p115
        %s235 = sand.u32 %s105, 1
        %s236 = scalar_lea.sflag [#allocation4], %s235
        %s237 = sand.u32 %s105, 1
        %s238 = smul.addr %s237, 128
        %s239 = scalar_lea.vmem [#allocation9], %s238
        %v240 = vld [vmem:[%s198] sm:$0xff]
        %v241 = vld [vmem:[%s198 + $0x8] sm:$0xff]
        %v242 = vld [vmem:[%s198 + $0x10] sm:$0xff]
        %v243 = vld [vmem:[%s198 + $0x18] sm:$0xff]
        %v244 = vld [vmem:[%s198 + $0x20] sm:$0xff]
        %v245 = vld [vmem:[%s198 + $0x28] sm:$0xff]
        %v246 = vld [vmem:[%s198 + $0x30] sm:$0xff]
        %v247 = vld [vmem:[%s198 + $0x38] sm:$0xff]
        %v248 = vld [vmem:[%s198 + $0x40] sm:$0xff]
        %v249 = vld [vmem:[%s198 + $0x48] sm:$0xff]
        %v250 = vld [vmem:[%s198 + $0x50] sm:$0xff]
        %v251 = vld [vmem:[%s198 + $0x58] sm:$0xff]
        %v252 = vld [vmem:[%s198 + $0x60] sm:$0xff]
        %v253 = vld [vmem:[%s198 + $0x68] sm:$0xff]
        %v254 = vld [vmem:[%s198 + $0x70] sm:$0xff]
        %v255 = vld [vmem:[%s198 + $0x78] sm:$0xff]
        %256 = vadd.xlane.f32.xlu0 %v240
        %v257 = vpop.xlane.xlu0 %256
        %258 = vadd.xlane.f32.xlu0 %v241
        %v259 = vpop.xlane.xlu0 %258
        %260 = vadd.xlane.f32.xlu0 %v242
        %v261 = vpop.xlane.xlu0 %260
        %262 = vadd.xlane.f32.xlu0 %v243
        %v263 = vpop.xlane.xlu0 %262
        %264 = vadd.xlane.f32.xlu0 %v244
        %v265 = vpop.xlane.xlu0 %264
        %266 = vadd.xlane.f32.xlu0 %v245
        %v267 = vpop.xlane.xlu0 %266
        %268 = vadd.xlane.f32.xlu0 %v246
        %v269 = vpop.xlane.xlu0 %268
        %270 = vadd.xlane.f32.xlu0 %v247
        %v271 = vpop.xlane.xlu0 %270
        %272 = vadd.xlane.f32.xlu0 %v248
        %v273 = vpop.xlane.xlu0 %272
        %274 = vadd.xlane.f32.xlu0 %v249
        %v275 = vpop.xlane.xlu0 %274
        %276 = vadd.xlane.f32.xlu0 %v250
        %v277 = vpop.xlane.xlu0 %276
        %278 = vadd.xlane.f32.xlu0 %v251
        %v279 = vpop.xlane.xlu0 %278
        %280 = vadd.xlane.f32.xlu0 %v252
        %v281 = vpop.xlane.xlu0 %280
        %282 = vadd.xlane.f32.xlu0 %v253
        %v283 = vpop.xlane.xlu0 %282
        %284 = vadd.xlane.f32.xlu0 %v254
        %v285 = vpop.xlane.xlu0 %284
        %286 = vadd.xlane.f32.xlu0 %v255
        %v287 = vpop.xlane.xlu0 %286
        %v288 = vmul.f32 %v257, 0.0078125
        %v289 = vmul.f32 %v259, 0.0078125
        %v290 = vmul.f32 %v261, 0.0078125
        %v291 = vmul.f32 %v263, 0.0078125
        %v292 = vmul.f32 %v265, 0.0078125
        %v293 = vmul.f32 %v267, 0.0078125
        %v294 = vmul.f32 %v269, 0.0078125
        %v295 = vmul.f32 %v271, 0.0078125
        %v296 = vmul.f32 %v273, 0.0078125
        %v297 = vmul.f32 %v275, 0.0078125
        %v298 = vmul.f32 %v277, 0.0078125
        %v299 = vmul.f32 %v279, 0.0078125
        %v300 = vmul.f32 %v281, 0.0078125
        %v301 = vmul.f32 %v283, 0.0078125
        %v302 = vmul.f32 %v285, 0.0078125
        %v303 = vmul.f32 %v287, 0.0078125
        %304 = vmax.xlane.f32.xlu0 %v240
        %v305 = vpop.xlane.xlu0 %304
        %306 = vmax.xlane.f32.xlu0 %v241
        %v307 = vpop.xlane.xlu0 %306
        %308 = vmax.xlane.f32.xlu0 %v242
        %v309 = vpop.xlane.xlu0 %308
        %310 = vmax.xlane.f32.xlu0 %v243
        %v311 = vpop.xlane.xlu0 %310
        %312 = vmax.xlane.f32.xlu0 %v244
        %v313 = vpop.xlane.xlu0 %312
        %314 = vmax.xlane.f32.xlu0 %v245
        %v315 = vpop.xlane.xlu0 %314
        %316 = vmax.xlane.f32.xlu0 %v246
        %v317 = vpop.xlane.xlu0 %316
        %318 = vmax.xlane.f32.xlu0 %v247
        %v319 = vpop.xlane.xlu0 %318
        %320 = vmax.xlane.f32.xlu0 %v248
        %v321 = vpop.xlane.xlu0 %320
        %322 = vmax.xlane.f32.xlu0 %v249
        %v323 = vpop.xlane.xlu0 %322
        %324 = vmax.xlane.f32.xlu0 %v250
        %v325 = vpop.xlane.xlu0 %324
        %326 = vmax.xlane.f32.xlu0 %v251
        %v327 = vpop.xlane.xlu0 %326
        %328 = vmax.xlane.f32.xlu0 %v252
        %v329 = vpop.xlane.xlu0 %328
        %330 = vmax.xlane.f32.xlu0 %v253
        %v331 = vpop.xlane.xlu0 %330
        %332 = vmax.xlane.f32.xlu0 %v254
        %v333 = vpop.xlane.xlu0 %332
        %334 = vmax.xlane.f32.xlu0 %v255
        %v335 = vpop.xlane.xlu0 %334
        %v336 = vld [vmem:[%s207] sm:$0xff]
        %s337 = sld [smem:[#allocation8 + $0xb6]]
        %v352 = vlaneseq
        %v353 = vand.u32 %v352, 127
        %v354 = vlaneseq
        %v355 = vshrl.u32 %v354, 7
        %v356 = vsub.s32 %v353, %v355
        %v357 = vrot.slane %v288, %v356
        %v358 = vadd.s32 %v353, 4294967288
        %v359 = vlaneseq
        %v360 = vshrl.u32 %v359, 7
        %v361 = vsub.s32 %v358, %v360
        %v362 = vrot.slane %v289, %v361
        %vm363 = vcmask 130112
        %v364 = vsel %vm363, %v362, %v357
        %v365 = vlaneseq
        %v366 = vshrl.u32 %v365, 7
        %v367 = vsub.s32 %v353, %v366
        %v368 = vrot.slane %v290, %v367
        %v369 = vlaneseq
        %v370 = vshrl.u32 %v369, 7
        %v371 = vsub.s32 %v358, %v370
        %v372 = vrot.slane %v291, %v371
        %v373 = vsel %vm363, %v372, %v368
        %v374 = vlaneseq
        %v375 = vshrl.u32 %v374, 7
        %v376 = vsub.s32 %v353, %v375
        %v377 = vrot.slane %v292, %v376
        %v378 = vlaneseq
        %v379 = vshrl.u32 %v378, 7
        %v380 = vsub.s32 %v358, %v379
        %v381 = vrot.slane %v293, %v380
        %v382 = vsel %vm363, %v381, %v377
        %v383 = vlaneseq
        %v384 = vshrl.u32 %v383, 7
        %v385 = vsub.s32 %v353, %v384
        %v386 = vrot.slane %v294, %v385
        %v387 = vlaneseq
        %v388 = vshrl.u32 %v387, 7
        %v389 = vsub.s32 %v358, %v388
        %v390 = vrot.slane %v295, %v389
        %v391 = vsel %vm363, %v390, %v386
        %v392 = vlaneseq
        %v393 = vshrl.u32 %v392, 7
        %v394 = vsub.s32 %v353, %v393
        %v395 = vrot.slane %v296, %v394
        %v396 = vlaneseq
        %v397 = vshrl.u32 %v396, 7
        %v398 = vsub.s32 %v358, %v397
        %v399 = vrot.slane %v297, %v398
        %v400 = vsel %vm363, %v399, %v395
        %v401 = vlaneseq
        %v402 = vshrl.u32 %v401, 7
        %v403 = vsub.s32 %v353, %v402
        %v404 = vrot.slane %v298, %v403
        %v405 = vlaneseq
        %v406 = vshrl.u32 %v405, 7
        %v407 = vsub.s32 %v358, %v406
        %v408 = vrot.slane %v299, %v407
        %v409 = vsel %vm363, %v408, %v404
        %v410 = vlaneseq
        %v411 = vshrl.u32 %v410, 7
        %v412 = vsub.s32 %v353, %v411
        %v413 = vrot.slane %v300, %v412
        %v414 = vlaneseq
        %v415 = vshrl.u32 %v414, 7
        %v416 = vsub.s32 %v358, %v415
        %v417 = vrot.slane %v301, %v416
        %v418 = vsel %vm363, %v417, %v413
        %vm419 = vcmask 1042434
        %v420 = vsel %vm419, %v373, %v364
        %vm421 = vcmask 1043459
        %v422 = vsel %vm421, %v382, %v420
        %vm423 = vcmask 1044484
        %v424 = vsel %vm423, %v391, %v422
        %vm425 = vcmask 1045509
        %v426 = vsel %vm425, %v400, %v424
        %vm427 = vcmask 1046534
        %v428 = vsel %vm427, %v409, %v426
        %vm429 = vcmask 1047559
        %v430 = vsel %vm429, %v418, %v428
        %vm432 = vcmask 1040384
        %v433 = vsel %vm432, 0.0, %v430
        %v436 = vlaneseq
        %v437 = vshrl.u32 %v436, 7
        %v438 = vsub.s32 %v353, %v437
        %v439 = vrot.slane %v302, %v438
        %v440 = vlaneseq
        %v441 = vshrl.u32 %v440, 7
        %v442 = vsub.s32 %v358, %v441
        %v443 = vrot.slane %v303, %v442
        %v444 = vsel %vm363, %v443, %v439
        %vm445 = vcmask 1041409
        %v446 = vsel %vm445, %v382, %v373
        %v447 = vsel %vm419, %v391, %v446
        %v448 = vsel %vm421, %v400, %v447
        %v449 = vsel %vm423, %v409, %v448
        %v450 = vsel %vm425, %v418, %v449
        %v451 = vsel %vm427, %v444, %v450
        %vm453 = vcmask 1046528
        %v454 = vsel %vm453, %v451, 0.0
        %v469 = vlaneseq
        %v470 = vshrl.u32 %v469, 7
        %v471 = vsub.s32 %v353, %v470
        %v472 = vrot.slane %v305, %v471
        %v473 = vlaneseq
        %v474 = vshrl.u32 %v473, 7
        %v475 = vsub.s32 %v358, %v474
        %v476 = vrot.slane %v307, %v475
        %v477 = vsel %vm363, %v476, %v472
        %v478 = vlaneseq
        %v479 = vshrl.u32 %v478, 7
        %v480 = vsub.s32 %v353, %v479
        %v481 = vrot.slane %v309, %v480
        %v482 = vlaneseq
        %v483 = vshrl.u32 %v482, 7
        %v484 = vsub.s32 %v358, %v483
        %v485 = vrot.slane %v311, %v484
        %v486 = vsel %vm363, %v485, %v481
        %v487 = vlaneseq
        %v488 = vshrl.u32 %v487, 7
        %v489 = vsub.s32 %v353, %v488
        %v490 = vrot.slane %v313, %v489
        %v491 = vlaneseq
        %v492 = vshrl.u32 %v491, 7
        %v493 = vsub.s32 %v358, %v492
        %v494 = vrot.slane %v315, %v493
        %v495 = vsel %vm363, %v494, %v490
        %v496 = vlaneseq
        %v497 = vshrl.u32 %v496, 7
        %v498 = vsub.s32 %v353, %v497
        %v499 = vrot.slane %v317, %v498
        %v500 = vlaneseq
        %v501 = vshrl.u32 %v500, 7
        %v502 = vsub.s32 %v358, %v501
        %v503 = vrot.slane %v319, %v502
        %v504 = vsel %vm363, %v503, %v499
        %v505 = vlaneseq
        %v506 = vshrl.u32 %v505, 7
        %v507 = vsub.s32 %v353, %v506
        %v508 = vrot.slane %v321, %v507
        %v509 = vlaneseq
        %v510 = vshrl.u32 %v509, 7
        %v511 = vsub.s32 %v358, %v510
        %v512 = vrot.slane %v323, %v511
        %v513 = vsel %vm363, %v512, %v508
        %v514 = vlaneseq
        %v515 = vshrl.u32 %v514, 7
        %v516 = vsub.s32 %v353, %v515
        %v517 = vrot.slane %v325, %v516
        %v518 = vlaneseq
        %v519 = vshrl.u32 %v518, 7
        %v520 = vsub.s32 %v358, %v519
        %v521 = vrot.slane %v327, %v520
        %v522 = vsel %vm363, %v521, %v517
        %v523 = vlaneseq
        %v524 = vshrl.u32 %v523, 7
        %v525 = vsub.s32 %v353, %v524
        %v526 = vrot.slane %v329, %v525
        %v527 = vlaneseq
        %v528 = vshrl.u32 %v527, 7
        %v529 = vsub.s32 %v358, %v528
        %v530 = vrot.slane %v331, %v529
        %v531 = vsel %vm363, %v530, %v526
        %v532 = vsel %vm419, %v486, %v477
        %v533 = vsel %vm421, %v495, %v532
        %v534 = vsel %vm423, %v504, %v533
        %v535 = vsel %vm425, %v513, %v534
        %v536 = vsel %vm427, %v522, %v535
        %v537 = vsel %vm429, %v531, %v536
        %v539 = vsel %vm432, 0.0, %v537
        %v542 = vlaneseq
        %v543 = vshrl.u32 %v542, 7
        %v544 = vsub.s32 %v353, %v543
        %v545 = vrot.slane %v333, %v544
        %v546 = vlaneseq
        %v547 = vshrl.u32 %v546, 7
        %v548 = vsub.s32 %v358, %v547
        %v549 = vrot.slane %v335, %v548
        %v550 = vsel %vm363, %v549, %v545
        %v551 = vsel %vm445, %v495, %v486
        %v552 = vsel %vm419, %v504, %v551
        %v553 = vsel %vm421, %v513, %v552
        %v554 = vsel %vm423, %v522, %v553
        %v555 = vsel %vm425, %v531, %v554
        %v556 = vsel %vm427, %v550, %v555
        %v558 = vsel %vm453, %v556, 0.0
        %v559 = vadd.s32 %v353, 4294967295
        %v560 = vlaneseq
        %v561 = vshrl.u32 %v560, 7
        %v562 = vsub.s32 %v559, %v561
        %v563 = vrot.slane %v288, %v562
        %v564 = vadd.s32 %v353, 4294967287
        %v565 = vlaneseq
        %v566 = vshrl.u32 %v565, 7
        %v567 = vsub.s32 %v564, %v566
        %v568 = vrot.slane %v289, %v567
        %vm569 = vcmask 138312
        %v570 = vsel %vm569, %v568, %v563
        %v571 = vlaneseq
        %v572 = vshrl.u32 %v571, 7
        %v573 = vsub.s32 %v559, %v572
        %v574 = vrot.slane %v290, %v573
        %v575 = vlaneseq
        %v576 = vshrl.u32 %v575, 7
        %v577 = vsub.s32 %v564, %v576
        %v578 = vrot.slane %v291, %v577
        %v579 = vsel %vm569, %v578, %v574
        %v580 = vlaneseq
        %v581 = vshrl.u32 %v580, 7
        %v582 = vsub.s32 %v559, %v581
        %v583 = vrot.slane %v292, %v582
        %v584 = vlaneseq
        %v585 = vshrl.u32 %v584, 7
        %v586 = vsub.s32 %v564, %v585
        %v587 = vrot.slane %v293, %v586
        %v588 = vsel %vm569, %v587, %v583
        %v589 = vlaneseq
        %v590 = vshrl.u32 %v589, 7
        %v591 = vsub.s32 %v559, %v590
        %v592 = vrot.slane %v294, %v591
        %v593 = vlaneseq
        %v594 = vshrl.u32 %v593, 7
        %v595 = vsub.s32 %v564, %v594
        %v596 = vrot.slane %v295, %v595
        %v597 = vsel %vm569, %v596, %v592
        %v598 = vlaneseq
        %v599 = vshrl.u32 %v598, 7
        %v600 = vsub.s32 %v559, %v599
        %v601 = vrot.slane %v296, %v600
        %v602 = vlaneseq
        %v603 = vshrl.u32 %v602, 7
        %v604 = vsub.s32 %v564, %v603
        %v605 = vrot.slane %v297, %v604
        %v606 = vsel %vm569, %v605, %v601
        %v607 = vlaneseq
        %v608 = vshrl.u32 %v607, 7
        %v609 = vsub.s32 %v559, %v608
        %v610 = vrot.slane %v298, %v609
        %v611 = vlaneseq
        %v612 = vshrl.u32 %v611, 7
        %v613 = vsub.s32 %v564, %v612
        %v614 = vrot.slane %v299, %v613
        %v615 = vsel %vm569, %v614, %v610
        %v616 = vlaneseq
        %v617 = vshrl.u32 %v616, 7
        %v618 = vsub.s32 %v559, %v617
        %v619 = vrot.slane %v300, %v618
        %v620 = vlaneseq
        %v621 = vshrl.u32 %v620, 7
        %v622 = vsub.s32 %v564, %v621
        %v623 = vrot.slane %v301, %v622
        %v624 = vsel %vm569, %v623, %v619
        %v625 = vlaneseq
        %v626 = vshrl.u32 %v625, 7
        %v627 = vsub.s32 %v559, %v626
        %v628 = vrot.slane %v302, %v627
        %v629 = vlaneseq
        %v630 = vshrl.u32 %v629, 7
        %v631 = vsub.s32 %v564, %v630
        %v632 = vrot.slane %v303, %v631
        %v633 = vsel %vm569, %v632, %v628
        %v634 = vsel %vm445, %v579, %v570
        %v635 = vsel %vm419, %v588, %v634
        %v636 = vsel %vm421, %v597, %v635
        %v637 = vsel %vm423, %v606, %v636
        %v638 = vsel %vm425, %v615, %v637
        %v639 = vsel %vm427, %v624, %v638
        %v640 = vsel %vm429, %v633, %v639
        %vm642 = vcmask 7168
        %v643 = vsel %vm642, 0.0, %v640
        %v644 = vadd.s32 %v353, 1
        %v645 = vlaneseq
        %v646 = vshrl.u32 %v645, 7
        %v647 = vsub.s32 %v644, %v646
        %v648 = vrot.slane %v288, %v647
        %v649 = vadd.s32 %v353, 4294967289
        %v650 = vlaneseq
        %v651 = vshrl.u32 %v650, 7
        %v652 = vsub.s32 %v649, %v651
        %v653 = vrot.slane %v289, %v652
        %vm654 = vcmask 121912
        %v655 = vsel %vm654, %v653, %v648
        %v656 = vlaneseq
        %v657 = vshrl.u32 %v656, 7
        %v658 = vsub.s32 %v644, %v657
        %v659 = vrot.slane %v290, %v658
        %v660 = vlaneseq
        %v661 = vshrl.u32 %v660, 7
        %v662 = vsub.s32 %v649, %v661
        %v663 = vrot.slane %v291, %v662
        %v664 = vsel %vm654, %v663, %v659
        %v665 = vlaneseq
        %v666 = vshrl.u32 %v665, 7
        %v667 = vsub.s32 %v644, %v666
        %v668 = vrot.slane %v292, %v667
        %v669 = vlaneseq
        %v670 = vshrl.u32 %v669, 7
        %v671 = vsub.s32 %v649, %v670
        %v672 = vrot.slane %v293, %v671
        %v673 = vsel %vm654, %v672, %v668
        %v674 = vlaneseq
        %v675 = vshrl.u32 %v674, 7
        %v676 = vsub.s32 %v644, %v675
        %v677 = vrot.slane %v294, %v676
        %v678 = vlaneseq
        %v679 = vshrl.u32 %v678, 7
        %v680 = vsub.s32 %v649, %v679
        %v681 = vrot.slane %v295, %v680
        %v682 = vsel %vm654, %v681, %v677
        %v683 = vlaneseq
        %v684 = vshrl.u32 %v683, 7
        %v685 = vsub.s32 %v644, %v684
        %v686 = vrot.slane %v296, %v685
        %v687 = vlaneseq
        %v688 = vshrl.u32 %v687, 7
        %v689 = vsub.s32 %v649, %v688
        %v690 = vrot.slane %v297, %v689
        %v691 = vsel %vm654, %v690, %v686
        %v692 = vlaneseq
        %v693 = vshrl.u32 %v692, 7
        %v694 = vsub.s32 %v644, %v693
        %v695 = vrot.slane %v298, %v694
        %v696 = vlaneseq
        %v697 = vshrl.u32 %v696, 7
        %v698 = vsub.s32 %v649, %v697
        %v699 = vrot.slane %v299, %v698
        %v700 = vsel %vm654, %v699, %v695
        %v701 = vlaneseq
        %v702 = vshrl.u32 %v701, 7
        %v703 = vsub.s32 %v644, %v702
        %v704 = vrot.slane %v300, %v703
        %v705 = vlaneseq
        %v706 = vshrl.u32 %v705, 7
        %v707 = vsub.s32 %v649, %v706
        %v708 = vrot.slane %v301, %v707
        %v709 = vsel %vm654, %v708, %v704
        %v710 = vlaneseq
        %v711 = vshrl.u32 %v710, 7
        %v712 = vsub.s32 %v644, %v711
        %v713 = vrot.slane %v302, %v712
        %v714 = vlaneseq
        %v715 = vshrl.u32 %v714, 7
        %v716 = vsub.s32 %v649, %v715
        %v717 = vrot.slane %v303, %v716
        %v718 = vsel %vm654, %v717, %v713
        %v719 = vsel %vm419, %v664, %v655
        %v720 = vsel %vm421, %v673, %v719
        %v721 = vsel %vm423, %v682, %v720
        %v722 = vsel %vm425, %v691, %v721
        %v723 = vsel %vm427, %v700, %v722
        %v724 = vsel %vm429, %v709, %v723
        %vm727 = vcmask 121856
        %v728 = vsel %vm727, %v724, 0.0
        %v729 = vsel %vm727, %v718, 0.0
        %v730 = vlaneseq
        %v731 = vshrl.u32 %v730, 7
        %v732 = vsub.s32 %v559, %v731
        %v733 = vrot.slane %v305, %v732
        %v734 = vlaneseq
        %v735 = vshrl.u32 %v734, 7
        %v736 = vsub.s32 %v564, %v735
        %v737 = vrot.slane %v307, %v736
        %v738 = vsel %vm569, %v737, %v733
        %v739 = vlaneseq
        %v740 = vshrl.u32 %v739, 7
        %v741 = vsub.s32 %v559, %v740
        %v742 = vrot.slane %v309, %v741
        %v743 = vlaneseq
        %v744 = vshrl.u32 %v743, 7
        %v745 = vsub.s32 %v564, %v744
        %v746 = vrot.slane %v311, %v745
        %v747 = vsel %vm569, %v746, %v742
        %v748 = vlaneseq
        %v749 = vshrl.u32 %v748, 7
        %v750 = vsub.s32 %v559, %v749
        %v751 = vrot.slane %v313, %v750
        %v752 = vlaneseq
        %v753 = vshrl.u32 %v752, 7
        %v754 = vsub.s32 %v564, %v753
        %v755 = vrot.slane %v315, %v754
        %v756 = vsel %vm569, %v755, %v751
        %v757 = vlaneseq
        %v758 = vshrl.u32 %v757, 7
        %v759 = vsub.s32 %v559, %v758
        %v760 = vrot.slane %v317, %v759
        %v761 = vlaneseq
        %v762 = vshrl.u32 %v761, 7
        %v763 = vsub.s32 %v564, %v762
        %v764 = vrot.slane %v319, %v763
        %v765 = vsel %vm569, %v764, %v760
        %v766 = vlaneseq
        %v767 = vshrl.u32 %v766, 7
        %v768 = vsub.s32 %v559, %v767
        %v769 = vrot.slane %v321, %v768
        %v770 = vlaneseq
        %v771 = vshrl.u32 %v770, 7
        %v772 = vsub.s32 %v564, %v771
        %v773 = vrot.slane %v323, %v772
        %v774 = vsel %vm569, %v773, %v769
        %v775 = vlaneseq
        %v776 = vshrl.u32 %v775, 7
        %v777 = vsub.s32 %v559, %v776
        %v778 = vrot.slane %v325, %v777
        %v779 = vlaneseq
        %v780 = vshrl.u32 %v779, 7
        %v781 = vsub.s32 %v564, %v780
        %v782 = vrot.slane %v327, %v781
        %v783 = vsel %vm569, %v782, %v778
        %v784 = vlaneseq
        %v785 = vshrl.u32 %v784, 7
        %v786 = vsub.s32 %v559, %v785
        %v787 = vrot.slane %v329, %v786
        %v788 = vlaneseq
        %v789 = vshrl.u32 %v788, 7
        %v790 = vsub.s32 %v564, %v789
        %v791 = vrot.slane %v331, %v790
        %v792 = vsel %vm569, %v791, %v787
        %v793 = vlaneseq
        %v794 = vshrl.u32 %v793, 7
        %v795 = vsub.s32 %v559, %v794
        %v796 = vrot.slane %v333, %v795
        %v797 = vlaneseq
        %v798 = vshrl.u32 %v797, 7
        %v799 = vsub.s32 %v564, %v798
        %v800 = vrot.slane %v335, %v799
        %v801 = vsel %vm569, %v800, %v796
        %v802 = vsel %vm445, %v747, %v738
        %v803 = vsel %vm419, %v756, %v802
        %v804 = vsel %vm421, %v765, %v803
        %v805 = vsel %vm423, %v774, %v804
        %v806 = vsel %vm425, %v783, %v805
        %v807 = vsel %vm427, %v792, %v806
        %v808 = vsel %vm429, %v801, %v807
        %v810 = vsel %vm642, 0.0, %v808
        %v811 = vlaneseq
        %v812 = vshrl.u32 %v811, 7
        %v813 = vsub.s32 %v644, %v812
        %v814 = vrot.slane %v305, %v813
        %v815 = vlaneseq
        %v816 = vshrl.u32 %v815, 7
        %v817 = vsub.s32 %v649, %v816
        %v818 = vrot.slane %v307, %v817
        %v819 = vsel %vm654, %v818, %v814
        %v820 = vlaneseq
        %v821 = vshrl.u32 %v820, 7
        %v822 = vsub.s32 %v644, %v821
        %v823 = vrot.slane %v309, %v822
        %v824 = vlaneseq
        %v825 = vshrl.u32 %v824, 7
        %v826 = vsub.s32 %v649, %v825
        %v827 = vrot.slane %v311, %v826
        %v828 = vsel %vm654, %v827, %v823
        %v829 = vlaneseq
        %v830 = vshrl.u32 %v829, 7
        %v831 = vsub.s32 %v644, %v830
        %v832 = vrot.slane %v313, %v831
        %v833 = vlaneseq
        %v834 = vshrl.u32 %v833, 7
        %v835 = vsub.s32 %v649, %v834
        %v836 = vrot.slane %v315, %v835
        %v837 = vsel %vm654, %v836, %v832
        %v838 = vlaneseq
        %v839 = vshrl.u32 %v838, 7
        %v840 = vsub.s32 %v644, %v839
        %v841 = vrot.slane %v317, %v840
        %v842 = vlaneseq
        %v843 = vshrl.u32 %v842, 7
        %v844 = vsub.s32 %v649, %v843
        %v845 = vrot.slane %v319, %v844
        %v846 = vsel %vm654, %v845, %v841
        %v847 = vlaneseq
        %v848 = vshrl.u32 %v847, 7
        %v849 = vsub.s32 %v644, %v848
        %v850 = vrot.slane %v321, %v849
        %v851 = vlaneseq
        %v852 = vshrl.u32 %v851, 7
        %v853 = vsub.s32 %v649, %v852
        %v854 = vrot.slane %v323, %v853
        %v855 = vsel %vm654, %v854, %v850
        %v856 = vlaneseq
        %v857 = vshrl.u32 %v856, 7
        %v858 = vsub.s32 %v644, %v857
        %v859 = vrot.slane %v325, %v858
        %v860 = vlaneseq
        %v861 = vshrl.u32 %v860, 7
        %v862 = vsub.s32 %v649, %v861
        %v863 = vrot.slane %v327, %v862
        %v864 = vsel %vm654, %v863, %v859
        %v865 = vlaneseq
        %v866 = vshrl.u32 %v865, 7
        %v867 = vsub.s32 %v644, %v866
        %v868 = vrot.slane %v329, %v867
        %v869 = vlaneseq
        %v870 = vshrl.u32 %v869, 7
        %v871 = vsub.s32 %v649, %v870
        %v872 = vrot.slane %v331, %v871
        %v873 = vsel %vm654, %v872, %v868
        %v874 = vlaneseq
        %v875 = vshrl.u32 %v874, 7
        %v876 = vsub.s32 %v644, %v875
        %v877 = vrot.slane %v333, %v876
        %v878 = vlaneseq
        %v879 = vshrl.u32 %v878, 7
        %v880 = vsub.s32 %v649, %v879
        %v881 = vrot.slane %v335, %v880
        %v882 = vsel %vm654, %v881, %v877
        %v883 = vsel %vm419, %v828, %v819
        %v884 = vsel %vm421, %v837, %v883
        %v885 = vsel %vm423, %v846, %v884
        %v886 = vsel %vm425, %v855, %v885
        %v887 = vsel %vm427, %v864, %v886
        %v888 = vsel %vm429, %v873, %v887
        %v891 = vsel %vm727, %v888, 0.0
        %v892 = vsel %vm727, %v882, 0.0
        %s893 = sld [smem:[#allocation8]]
        %v894 = vstv %s893
        %v895 = vmul.f32 %v894, %v433
        %s896 = sld [smem:[#allocation8 + $0x54]]
        %v897 = vstv %s896
        %v898 = vmul.f32 %v897, %v643
        %v899 = vadd.f32 %v895, %v898
        %s900 = sld [smem:[#allocation8 + $0x1]]
        %v901 = vstv %s900
        %v902 = vmul.f32 %v901, %v288
        %v903 = vmul.f32 %v901, %v289
        %v904 = vmul.f32 %v901, %v290
        %v905 = vmul.f32 %v901, %v291
        %v906 = vmul.f32 %v901, %v292
        %v907 = vmul.f32 %v901, %v293
        %v908 = vmul.f32 %v901, %v294
        %v909 = vmul.f32 %v901, %v295
        %v910 = vmul.f32 %v901, %v296
        %v911 = vmul.f32 %v901, %v297
        %v912 = vmul.f32 %v901, %v298
        %v913 = vmul.f32 %v901, %v299
        %v914 = vmul.f32 %v901, %v300
        %v915 = vmul.f32 %v901, %v301
        %v916 = vmul.f32 %v901, %v302
        %v917 = vmul.f32 %v901, %v303
        %s918 = sld [smem:[#allocation8 + $0x55]]
        %v919 = vstv %s918
        %v920 = vmul.f32 %v919, %v288
        %v921 = vmul.f32 %v919, %v289
        %v922 = vmul.f32 %v919, %v290
        %v923 = vmul.f32 %v919, %v291
        %v924 = vmul.f32 %v919, %v292
        %v925 = vmul.f32 %v919, %v293
        %v926 = vmul.f32 %v919, %v294
        %v927 = vmul.f32 %v919, %v295
        %v928 = vmul.f32 %v919, %v296
        %v929 = vmul.f32 %v919, %v297
        %v930 = vmul.f32 %v919, %v298
        %v931 = vmul.f32 %v919, %v299
        %v932 = vmul.f32 %v919, %v300
        %v933 = vmul.f32 %v919, %v301
        %v934 = vmul.f32 %v919, %v302
        %v935 = vmul.f32 %v919, %v303
        %v936 = vadd.f32 %v902, %v920
        %v937 = vadd.f32 %v903, %v921
        %v938 = vadd.f32 %v904, %v922
        %v939 = vadd.f32 %v905, %v923
        %v940 = vadd.f32 %v906, %v924
        %v941 = vadd.f32 %v907, %v925
        %v942 = vadd.f32 %v908, %v926
        %v943 = vadd.f32 %v909, %v927
        %v944 = vadd.f32 %v910, %v928
        %v945 = vadd.f32 %v911, %v929
        %v946 = vadd.f32 %v912, %v930
        %v947 = vadd.f32 %v913, %v931
        %v948 = vadd.f32 %v914, %v932
        %v949 = vadd.f32 %v915, %v933
        %v950 = vadd.f32 %v916, %v934
        %v951 = vadd.f32 %v917, %v935
        %v968 = vlaneseq
        %v969 = vshrl.u32 %v968, 7
        %v970 = vsub.s32 %v353, %v969
        %v971 = vrot.slane %v936, %v970
        %v972 = vlaneseq
        %v973 = vshrl.u32 %v972, 7
        %v974 = vsub.s32 %v358, %v973
        %v975 = vrot.slane %v937, %v974
        %v976 = vsel %vm363, %v975, %v971
        %v977 = vlaneseq
        %v978 = vshrl.u32 %v977, 7
        %v979 = vsub.s32 %v353, %v978
        %v980 = vrot.slane %v938, %v979
        %v981 = vlaneseq
        %v982 = vshrl.u32 %v981, 7
        %v983 = vsub.s32 %v358, %v982
        %v984 = vrot.slane %v939, %v983
        %v985 = vsel %vm363, %v984, %v980
        %v986 = vlaneseq
        %v987 = vshrl.u32 %v986, 7
        %v988 = vsub.s32 %v353, %v987
        %v989 = vrot.slane %v940, %v988
        %v990 = vlaneseq
        %v991 = vshrl.u32 %v990, 7
        %v992 = vsub.s32 %v358, %v991
        %v993 = vrot.slane %v941, %v992
        %v994 = vsel %vm363, %v993, %v989
        %v995 = vlaneseq
        %v996 = vshrl.u32 %v995, 7
        %v997 = vsub.s32 %v353, %v996
        %v998 = vrot.slane %v942, %v997
        %v999 = vlaneseq
        %v1000 = vshrl.u32 %v999, 7
        %v1001 = vsub.s32 %v358, %v1000
        %v1002 = vrot.slane %v943, %v1001
        %v1003 = vsel %vm363, %v1002, %v998
        %v1004 = vlaneseq
        %v1005 = vshrl.u32 %v1004, 7
        %v1006 = vsub.s32 %v353, %v1005
        %v1007 = vrot.slane %v944, %v1006
        %v1008 = vlaneseq
        %v1009 = vshrl.u32 %v1008, 7
        %v1010 = vsub.s32 %v358, %v1009
        %v1011 = vrot.slane %v945, %v1010
        %v1012 = vsel %vm363, %v1011, %v1007
        %v1013 = vlaneseq
        %v1014 = vshrl.u32 %v1013, 7
        %v1015 = vsub.s32 %v353, %v1014
        %v1016 = vrot.slane %v946, %v1015
        %v1017 = vlaneseq
        %v1018 = vshrl.u32 %v1017, 7
        %v1019 = vsub.s32 %v358, %v1018
        %v1020 = vrot.slane %v947, %v1019
        %v1021 = vsel %vm363, %v1020, %v1016
        %v1022 = vlaneseq
        %v1023 = vshrl.u32 %v1022, 7
        %v1024 = vsub.s32 %v353, %v1023
        %v1025 = vrot.slane %v948, %v1024
        %v1026 = vlaneseq
        %v1027 = vshrl.u32 %v1026, 7
        %v1028 = vsub.s32 %v358, %v1027
        %v1029 = vrot.slane %v949, %v1028
        %v1030 = vsel %vm363, %v1029, %v1025
        %v1031 = vlaneseq
        %v1032 = vshrl.u32 %v1031, 7
        %v1033 = vsub.s32 %v353, %v1032
        %v1034 = vrot.slane %v950, %v1033
        %v1035 = vlaneseq
        %v1036 = vshrl.u32 %v1035, 7
        %v1037 = vsub.s32 %v358, %v1036
        %v1038 = vrot.slane %v951, %v1037
        %v1039 = vsel %vm363, %v1038, %v1034
        %v1040 = vsel %vm445, %v985, %v976
        %v1041 = vsel %vm419, %v994, %v1040
        %v1042 = vsel %vm421, %v1003, %v1041
        %v1043 = vsel %vm423, %v1012, %v1042
        %v1044 = vsel %vm425, %v1021, %v1043
        %v1045 = vsel %vm427, %v1030, %v1044
        %v1046 = vsel %vm429, %v1039, %v1045
        %v1048 = vadd.f32 %v899, %v1046
        %s1049 = sld [smem:[#allocation8 + $0x2]]
        %v1050 = vstv %s1049
        %v1051 = vmul.f32 %v1050, %v454
        %s1052 = sld [smem:[#allocation8 + $0x56]]
        %v1053 = vstv %s1052
        %v1054 = vmul.f32 %v1053, %v728
        %v1055 = vmul.f32 %v1053, %v729
        %v1058 = vrot.slane %v1054, 1
        %v1059 = vrot.slane %v1055, 1
        %v1060 = vsel %vm453, %v1058, %v1059
        %v1062 = vadd.f32 %v1051, %v1060
        %v1063 = vadd.f32 %v1048, %v1062
        %s1064 = sld [smem:[#allocation8 + $0x3]]
        %v1065 = vstv %s1064
        %v1066 = vmul.f32 %v1065, %v539
        %s1067 = sld [smem:[#allocation8 + $0x57]]
        %v1068 = vstv %s1067
        %v1069 = vmul.f32 %v1068, %v810
        %v1070 = vadd.f32 %v1066, %v1069
        %v1071 = vadd.f32 %v1063, %v1070
        %s1072 = sld [smem:[#allocation8 + $0x4]]
        %v1073 = vstv %s1072
        %v1074 = vmul.f32 %v1073, %v305
        %v1075 = vmul.f32 %v1073, %v307
        %v1076 = vmul.f32 %v1073, %v309
        %v1077 = vmul.f32 %v1073, %v311
        %v1078 = vmul.f32 %v1073, %v313
        %v1079 = vmul.f32 %v1073, %v315
        %v1080 = vmul.f32 %v1073, %v317
        %v1081 = vmul.f32 %v1073, %v319
        %v1082 = vmul.f32 %v1073, %v321
        %v1083 = vmul.f32 %v1073, %v323
        %v1084 = vmul.f32 %v1073, %v325
        %v1085 = vmul.f32 %v1073, %v327
        %v1086 = vmul.f32 %v1073, %v329
        %v1087 = vmul.f32 %v1073, %v331
        %v1088 = vmul.f32 %v1073, %v333
        %v1089 = vmul.f32 %v1073, %v335
        %s1090 = sld [smem:[#allocation8 + $0x58]]
        %v1091 = vstv %s1090
        %v1092 = vmul.f32 %v1091, %v305
        %v1093 = vmul.f32 %v1091, %v307
        %v1094 = vmul.f32 %v1091, %v309
        %v1095 = vmul.f32 %v1091, %v311
        %v1096 = vmul.f32 %v1091, %v313
        %v1097 = vmul.f32 %v1091, %v315
        %v1098 = vmul.f32 %v1091, %v317
        %v1099 = vmul.f32 %v1091, %v319
        %v1100 = vmul.f32 %v1091, %v321
        %v1101 = vmul.f32 %v1091, %v323
        %v1102 = vmul.f32 %v1091, %v325
        %v1103 = vmul.f32 %v1091, %v327
        %v1104 = vmul.f32 %v1091, %v329
        %v1105 = vmul.f32 %v1091, %v331
        %v1106 = vmul.f32 %v1091, %v333
        %v1107 = vmul.f32 %v1091, %v335
        %v1108 = vadd.f32 %v1074, %v1092
        %v1109 = vadd.f32 %v1075, %v1093
        %v1110 = vadd.f32 %v1076, %v1094
        %v1111 = vadd.f32 %v1077, %v1095
        %v1112 = vadd.f32 %v1078, %v1096
        %v1113 = vadd.f32 %v1079, %v1097
        %v1114 = vadd.f32 %v1080, %v1098
        %v1115 = vadd.f32 %v1081, %v1099
        %v1116 = vadd.f32 %v1082, %v1100
        %v1117 = vadd.f32 %v1083, %v1101
        %v1118 = vadd.f32 %v1084, %v1102
        %v1119 = vadd.f32 %v1085, %v1103
        %v1120 = vadd.f32 %v1086, %v1104
        %v1121 = vadd.f32 %v1087, %v1105
        %v1122 = vadd.f32 %v1088, %v1106
        %v1123 = vadd.f32 %v1089, %v1107
        %v1140 = vlaneseq
        %v1141 = vshrl.u32 %v1140, 7
        %v1142 = vsub.s32 %v353, %v1141
        %v1143 = vrot.slane %v1108, %v1142
        %v1144 = vlaneseq
        %v1145 = vshrl.u32 %v1144, 7
        %v1146 = vsub.s32 %v358, %v1145
        %v1147 = vrot.slane %v1109, %v1146
        %v1148 = vsel %vm363, %v1147, %v1143
        %v1149 = vlaneseq
        %v1150 = vshrl.u32 %v1149, 7
        %v1151 = vsub.s32 %v353, %v1150
        %v1152 = vrot.slane %v1110, %v1151
        %v1153 = vlaneseq
        %v1154 = vshrl.u32 %v1153, 7
        %v1155 = vsub.s32 %v358, %v1154
        %v1156 = vrot.slane %v1111, %v1155
        %v1157 = vsel %vm363, %v1156, %v1152
        %v1158 = vlaneseq
        %v1159 = vshrl.u32 %v1158, 7
        %v1160 = vsub.s32 %v353, %v1159
        %v1161 = vrot.slane %v1112, %v1160
        %v1162 = vlaneseq
        %v1163 = vshrl.u32 %v1162, 7
        %v1164 = vsub.s32 %v358, %v1163
        %v1165 = vrot.slane %v1113, %v1164
        %v1166 = vsel %vm363, %v1165, %v1161
        %v1167 = vlaneseq
        %v1168 = vshrl.u32 %v1167, 7
        %v1169 = vsub.s32 %v353, %v1168
        %v1170 = vrot.slane %v1114, %v1169
        %v1171 = vlaneseq
        %v1172 = vshrl.u32 %v1171, 7
        %v1173 = vsub.s32 %v358, %v1172
        %v1174 = vrot.slane %v1115, %v1173
        %v1175 = vsel %vm363, %v1174, %v1170
        %v1176 = vlaneseq
        %v1177 = vshrl.u32 %v1176, 7
        %v1178 = vsub.s32 %v353, %v1177
        %v1179 = vrot.slane %v1116, %v1178
        %v1180 = vlaneseq
        %v1181 = vshrl.u32 %v1180, 7
        %v1182 = vsub.s32 %v358, %v1181
        %v1183 = vrot.slane %v1117, %v1182
        %v1184 = vsel %vm363, %v1183, %v1179
        %v1185 = vlaneseq
        %v1186 = vshrl.u32 %v1185, 7
        %v1187 = vsub.s32 %v353, %v1186
        %v1188 = vrot.slane %v1118, %v1187
        %v1189 = vlaneseq
        %v1190 = vshrl.u32 %v1189, 7
        %v1191 = vsub.s32 %v358, %v1190
        %v1192 = vrot.slane %v1119, %v1191
        %v1193 = vsel %vm363, %v1192, %v1188
        %v1194 = vlaneseq
        %v1195 = vshrl.u32 %v1194, 7
        %v1196 = vsub.s32 %v353, %v1195
        %v1197 = vrot.slane %v1120, %v1196
        %v1198 = vlaneseq
        %v1199 = vshrl.u32 %v1198, 7
        %v1200 = vsub.s32 %v358, %v1199
        %v1201 = vrot.slane %v1121, %v1200
        %v1202 = vsel %vm363, %v1201, %v1197
        %v1203 = vlaneseq
        %v1204 = vshrl.u32 %v1203, 7
        %v1205 = vsub.s32 %v353, %v1204
        %v1206 = vrot.slane %v1122, %v1205
        %v1207 = vlaneseq
        %v1208 = vshrl.u32 %v1207, 7
        %v1209 = vsub.s32 %v358, %v1208
        %v1210 = vrot.slane %v1123, %v1209
        %v1211 = vsel %vm363, %v1210, %v1206
        %v1212 = vsel %vm445, %v1157, %v1148
        %v1213 = vsel %vm419, %v1166, %v1212
        %v1214 = vsel %vm421, %v1175, %v1213
        %v1215 = vsel %vm423, %v1184, %v1214
        %v1216 = vsel %vm425, %v1193, %v1215
        %v1217 = vsel %vm427, %v1202, %v1216
        %v1218 = vsel %vm429, %v1211, %v1217
        %v1220 = vadd.f32 %v1071, %v1218
        %s1221 = sld [smem:[#allocation8 + $0x5]]
        %v1222 = vstv %s1221
        %v1223 = vmul.f32 %v1222, %v558
        %s1224 = sld [smem:[#allocation8 + $0x59]]
        %v1225 = vstv %s1224
        %v1226 = vmul.f32 %v1225, %v891
        %v1227 = vmul.f32 %v1225, %v892
        %v1230 = vrot.slane %v1226, 1
        %v1231 = vrot.slane %v1227, 1
        %v1232 = vsel %vm453, %v1230, %v1231
        %v1234 = vadd.f32 %v1223, %v1232
        %v1235 = vadd.f32 %v1220, %v1234
        %s1236 = sld [smem:[#allocation8 + $0xa8]]
        %v1237 = vstv %s1236
        %v1238 = vadd.f32 %v1235, %v1237
        %vm1239 = vcmp.gt.f32.partialorder %v1238, 0.0
        %v1240 = vstv %s337
        %v1241 = vmul.f32 %v1240, %v1238
        %v1242 = vsel %vm1239, %v1238, %v1241
        %v1243 = vmul.f32 %v1242, %v336
        %v1244 = vsel %vm445, %v373, %v364
        %v1245 = vsel %vm419, %v382, %v1244
        %v1246 = vsel %vm421, %v391, %v1245
        %v1247 = vsel %vm423, %v400, %v1246
        %v1248 = vsel %vm425, %v409, %v1247
        %v1249 = vsel %vm427, %v418, %v1248
        %v1250 = vsel %vm429, %v444, %v1249
        %v1252 = vadd.f32 %v1243, %v1250
        %s1253 = sld [smem:[#allocation8 + $0x6]]
        %v1254 = vstv %s1253
        %v1255 = vmul.f32 %v1254, %v433
        %s1256 = sld [smem:[#allocation8 + $0x5a]]
        %v1257 = vstv %s1256
        %v1258 = vmul.f32 %v1257, %v643
        %v1259 = vadd.f32 %v1255, %v1258
        %s1260 = sld [smem:[#allocation8 + $0x7]]
        %v1261 = vstv %s1260
        %v1262 = vmul.f32 %v1261, %v288
        %v1263 = vmul.f32 %v1261, %v289
        %v1264 = vmul.f32 %v1261, %v290
        %v1265 = vmul.f32 %v1261, %v291
        %v1266 = vmul.f32 %v1261, %v292
        %v1267 = vmul.f32 %v1261, %v293
        %v1268 = vmul.f32 %v1261, %v294
        %v1269 = vmul.f32 %v1261, %v295
        %v1270 = vmul.f32 %v1261, %v296
        %v1271 = vmul.f32 %v1261, %v297
        %v1272 = vmul.f32 %v1261, %v298
        %v1273 = vmul.f32 %v1261, %v299
        %v1274 = vmul.f32 %v1261, %v300
        %v1275 = vmul.f32 %v1261, %v301
        %v1276 = vmul.f32 %v1261, %v302
        %v1277 = vmul.f32 %v1261, %v303
        %s1278 = sld [smem:[#allocation8 + $0x5b]]
        %v1279 = vstv %s1278
        %v1280 = vmul.f32 %v1279, %v288
        %v1281 = vmul.f32 %v1279, %v289
        %v1282 = vmul.f32 %v1279, %v290
        %v1283 = vmul.f32 %v1279, %v291
        %v1284 = vmul.f32 %v1279, %v292
        %v1285 = vmul.f32 %v1279, %v293
        %v1286 = vmul.f32 %v1279, %v294
        %v1287 = vmul.f32 %v1279, %v295
        %v1288 = vmul.f32 %v1279, %v296
        %v1289 = vmul.f32 %v1279, %v297
        %v1290 = vmul.f32 %v1279, %v298
        %v1291 = vmul.f32 %v1279, %v299
        %v1292 = vmul.f32 %v1279, %v300
        %v1293 = vmul.f32 %v1279, %v301
        %v1294 = vmul.f32 %v1279, %v302
        %v1295 = vmul.f32 %v1279, %v303
        %v1296 = vadd.f32 %v1262, %v1280
        %v1297 = vadd.f32 %v1263, %v1281
        %v1298 = vadd.f32 %v1264, %v1282
        %v1299 = vadd.f32 %v1265, %v1283
        %v1300 = vadd.f32 %v1266, %v1284
        %v1301 = vadd.f32 %v1267, %v1285
        %v1302 = vadd.f32 %v1268, %v1286
        %v1303 = vadd.f32 %v1269, %v1287
        %v1304 = vadd.f32 %v1270, %v1288
        %v1305 = vadd.f32 %v1271, %v1289
        %v1306 = vadd.f32 %v1272, %v1290
        %v1307 = vadd.f32 %v1273, %v1291
        %v1308 = vadd.f32 %v1274, %v1292
        %v1309 = vadd.f32 %v1275, %v1293
        %v1310 = vadd.f32 %v1276, %v1294
        %v1311 = vadd.f32 %v1277, %v1295
        %v1328 = vlaneseq
        %v1329 = vshrl.u32 %v1328, 7
        %v1330 = vsub.s32 %v353, %v1329
        %v1331 = vrot.slane %v1296, %v1330
        %v1332 = vlaneseq
        %v1333 = vshrl.u32 %v1332, 7
        %v1334 = vsub.s32 %v358, %v1333
        %v1335 = vrot.slane %v1297, %v1334
        %v1336 = vsel %vm363, %v1335, %v1331
        %v1337 = vlaneseq
        %v1338 = vshrl.u32 %v1337, 7
        %v1339 = vsub.s32 %v353, %v1338
        %v1340 = vrot.slane %v1298, %v1339
        %v1341 = vlaneseq
        %v1342 = vshrl.u32 %v1341, 7
        %v1343 = vsub.s32 %v358, %v1342
        %v1344 = vrot.slane %v1299, %v1343
        %v1345 = vsel %vm363, %v1344, %v1340
        %v1346 = vlaneseq
        %v1347 = vshrl.u32 %v1346, 7
        %v1348 = vsub.s32 %v353, %v1347
        %v1349 = vrot.slane %v1300, %v1348
        %v1350 = vlaneseq
        %v1351 = vshrl.u32 %v1350, 7
        %v1352 = vsub.s32 %v358, %v1351
        %v1353 = vrot.slane %v1301, %v1352
        %v1354 = vsel %vm363, %v1353, %v1349
        %v1355 = vlaneseq
        %v1356 = vshrl.u32 %v1355, 7
        %v1357 = vsub.s32 %v353, %v1356
        %v1358 = vrot.slane %v1302, %v1357
        %v1359 = vlaneseq
        %v1360 = vshrl.u32 %v1359, 7
        %v1361 = vsub.s32 %v358, %v1360
        %v1362 = vrot.slane %v1303, %v1361
        %v1363 = vsel %vm363, %v1362, %v1358
        %v1364 = vlaneseq
        %v1365 = vshrl.u32 %v1364, 7
        %v1366 = vsub.s32 %v353, %v1365
        %v1367 = vrot.slane %v1304, %v1366
        %v1368 = vlaneseq
        %v1369 = vshrl.u32 %v1368, 7
        %v1370 = vsub.s32 %v358, %v1369
        %v1371 = vrot.slane %v1305, %v1370
        %v1372 = vsel %vm363, %v1371, %v1367
        %v1373 = vlaneseq
        %v1374 = vshrl.u32 %v1373, 7
        %v1375 = vsub.s32 %v353, %v1374
        %v1376 = vrot.slane %v1306, %v1375
        %v1377 = vlaneseq
        %v1378 = vshrl.u32 %v1377, 7
        %v1379 = vsub.s32 %v358, %v1378
        %v1380 = vrot.slane %v1307, %v1379
        %v1381 = vsel %vm363, %v1380, %v1376
        %v1382 = vlaneseq
        %v1383 = vshrl.u32 %v1382, 7
        %v1384 = vsub.s32 %v353, %v1383
        %v1385 = vrot.slane %v1308, %v1384
        %v1386 = vlaneseq
        %v1387 = vshrl.u32 %v1386, 7
        %v1388 = vsub.s32 %v358, %v1387
        %v1389 = vrot.slane %v1309, %v1388
        %v1390 = vsel %vm363, %v1389, %v1385
        %v1391 = vlaneseq
        %v1392 = vshrl.u32 %v1391, 7
        %v1393 = vsub.s32 %v353, %v1392
        %v1394 = vrot.slane %v1310, %v1393
        %v1395 = vlaneseq
        %v1396 = vshrl.u32 %v1395, 7
        %v1397 = vsub.s32 %v358, %v1396
        %v1398 = vrot.slane %v1311, %v1397
        %v1399 = vsel %vm363, %v1398, %v1394
        %v1400 = vsel %vm445, %v1345, %v1336
        %v1401 = vsel %vm419, %v1354, %v1400
        %v1402 = vsel %vm421, %v1363, %v1401
        %v1403 = vsel %vm423, %v1372, %v1402
        %v1404 = vsel %vm425, %v1381, %v1403
        %v1405 = vsel %vm427, %v1390, %v1404
        %v1406 = vsel %vm429, %v1399, %v1405
        %v1408 = vadd.f32 %v1259, %v1406
        %s1409 = sld [smem:[#allocation8 + $0x8]]
        %v1410 = vstv %s1409
        %v1411 = vmul.f32 %v1410, %v454
        %s1412 = sld [smem:[#allocation8 + $0x5c]]
        %v1413 = vstv %s1412
        %v1414 = vmul.f32 %v1413, %v728
        %v1415 = vmul.f32 %v1413, %v729
        %v1418 = vrot.slane %v1414, 1
        %v1419 = vrot.slane %v1415, 1
        %v1420 = vsel %vm453, %v1418, %v1419
        %v1422 = vadd.f32 %v1411, %v1420
        %v1423 = vadd.f32 %v1408, %v1422
        %s1424 = sld [smem:[#allocation8 + $0x9]]
        %v1425 = vstv %s1424
        %v1426 = vmul.f32 %v1425, %v539
        %s1427 = sld [smem:[#allocation8 + $0x5d]]
        %v1428 = vstv %s1427
        %v1429 = vmul.f32 %v1428, %v810
        %v1430 = vadd.f32 %v1426, %v1429
        %v1431 = vadd.f32 %v1423, %v1430
        %s1432 = sld [smem:[#allocation8 + $0xa]]
        %v1433 = vstv %s1432
        %v1434 = vmul.f32 %v1433, %v305
        %v1435 = vmul.f32 %v1433, %v307
        %v1436 = vmul.f32 %v1433, %v309
        %v1437 = vmul.f32 %v1433, %v311
        %v1438 = vmul.f32 %v1433, %v313
        %v1439 = vmul.f32 %v1433, %v315
        %v1440 = vmul.f32 %v1433, %v317
        %v1441 = vmul.f32 %v1433, %v319
        %v1442 = vmul.f32 %v1433, %v321
        %v1443 = vmul.f32 %v1433, %v323
        %v1444 = vmul.f32 %v1433, %v325
        %v1445 = vmul.f32 %v1433, %v327
        %v1446 = vmul.f32 %v1433, %v329
        %v1447 = vmul.f32 %v1433, %v331
        %v1448 = vmul.f32 %v1433, %v333
        %v1449 = vmul.f32 %v1433, %v335
        %s1450 = sld [smem:[#allocation8 + $0x5e]]
        %v1451 = vstv %s1450
        %v1452 = vmul.f32 %v1451, %v305
        %v1453 = vmul.f32 %v1451, %v307
        %v1454 = vmul.f32 %v1451, %v309
        %v1455 = vmul.f32 %v1451, %v311
        %v1456 = vmul.f32 %v1451, %v313
        %v1457 = vmul.f32 %v1451, %v315
        %v1458 = vmul.f32 %v1451, %v317
        %v1459 = vmul.f32 %v1451, %v319
        %v1460 = vmul.f32 %v1451, %v321
        %v1461 = vmul.f32 %v1451, %v323
        %v1462 = vmul.f32 %v1451, %v325
        %v1463 = vmul.f32 %v1451, %v327
        %v1464 = vmul.f32 %v1451, %v329
        %v1465 = vmul.f32 %v1451, %v331
        %v1466 = vmul.f32 %v1451, %v333
        %v1467 = vmul.f32 %v1451, %v335
        %v1468 = vadd.f32 %v1434, %v1452
        %v1469 = vadd.f32 %v1435, %v1453
        %v1470 = vadd.f32 %v1436, %v1454
        %v1471 = vadd.f32 %v1437, %v1455
        %v1472 = vadd.f32 %v1438, %v1456
        %v1473 = vadd.f32 %v1439, %v1457
        %v1474 = vadd.f32 %v1440, %v1458
        %v1475 = vadd.f32 %v1441, %v1459
        %v1476 = vadd.f32 %v1442, %v1460
        %v1477 = vadd.f32 %v1443, %v1461
        %v1478 = vadd.f32 %v1444, %v1462
        %v1479 = vadd.f32 %v1445, %v1463
        %v1480 = vadd.f32 %v1446, %v1464
        %v1481 = vadd.f32 %v1447, %v1465
        %v1482 = vadd.f32 %v1448, %v1466
        %v1483 = vadd.f32 %v1449, %v1467
        %v1500 = vlaneseq
        %v1501 = vshrl.u32 %v1500, 7
        %v1502 = vsub.s32 %v353, %v1501
        %v1503 = vrot.slane %v1468, %v1502
        %v1504 = vlaneseq
        %v1505 = vshrl.u32 %v1504, 7
        %v1506 = vsub.s32 %v358, %v1505
        %v1507 = vrot.slane %v1469, %v1506
        %v1508 = vsel %vm363, %v1507, %v1503
        %v1509 = vlaneseq
        %v1510 = vshrl.u32 %v1509, 7
        %v1511 = vsub.s32 %v353, %v1510
        %v1512 = vrot.slane %v1470, %v1511
        %v1513 = vlaneseq
        %v1514 = vshrl.u32 %v1513, 7
        %v1515 = vsub.s32 %v358, %v1514
        %v1516 = vrot.slane %v1471, %v1515
        %v1517 = vsel %vm363, %v1516, %v1512
        %v1518 = vlaneseq
        %v1519 = vshrl.u32 %v1518, 7
        %v1520 = vsub.s32 %v353, %v1519
        %v1521 = vrot.slane %v1472, %v1520
        %v1522 = vlaneseq
        %v1523 = vshrl.u32 %v1522, 7
        %v1524 = vsub.s32 %v358, %v1523
        %v1525 = vrot.slane %v1473, %v1524
        %v1526 = vsel %vm363, %v1525, %v1521
        %v1527 = vlaneseq
        %v1528 = vshrl.u32 %v1527, 7
        %v1529 = vsub.s32 %v353, %v1528
        %v1530 = vrot.slane %v1474, %v1529
        %v1531 = vlaneseq
        %v1532 = vshrl.u32 %v1531, 7
        %v1533 = vsub.s32 %v358, %v1532
        %v1534 = vrot.slane %v1475, %v1533
        %v1535 = vsel %vm363, %v1534, %v1530
        %v1536 = vlaneseq
        %v1537 = vshrl.u32 %v1536, 7
        %v1538 = vsub.s32 %v353, %v1537
        %v1539 = vrot.slane %v1476, %v1538
        %v1540 = vlaneseq
        %v1541 = vshrl.u32 %v1540, 7
        %v1542 = vsub.s32 %v358, %v1541
        %v1543 = vrot.slane %v1477, %v1542
        %v1544 = vsel %vm363, %v1543, %v1539
        %v1545 = vlaneseq
        %v1546 = vshrl.u32 %v1545, 7
        %v1547 = vsub.s32 %v353, %v1546
        %v1548 = vrot.slane %v1478, %v1547
        %v1549 = vlaneseq
        %v1550 = vshrl.u32 %v1549, 7
        %v1551 = vsub.s32 %v358, %v1550
        %v1552 = vrot.slane %v1479, %v1551
        %v1553 = vsel %vm363, %v1552, %v1548
        %v1554 = vlaneseq
        %v1555 = vshrl.u32 %v1554, 7
        %v1556 = vsub.s32 %v353, %v1555
        %v1557 = vrot.slane %v1480, %v1556
        %v1558 = vlaneseq
        %v1559 = vshrl.u32 %v1558, 7
        %v1560 = vsub.s32 %v358, %v1559
        %v1561 = vrot.slane %v1481, %v1560
        %v1562 = vsel %vm363, %v1561, %v1557
        %v1563 = vlaneseq
        %v1564 = vshrl.u32 %v1563, 7
        %v1565 = vsub.s32 %v353, %v1564
        %v1566 = vrot.slane %v1482, %v1565
        %v1567 = vlaneseq
        %v1568 = vshrl.u32 %v1567, 7
        %v1569 = vsub.s32 %v358, %v1568
        %v1570 = vrot.slane %v1483, %v1569
        %v1571 = vsel %vm363, %v1570, %v1566
        %v1572 = vsel %vm445, %v1517, %v1508
        %v1573 = vsel %vm419, %v1526, %v1572
        %v1574 = vsel %vm421, %v1535, %v1573
        %v1575 = vsel %vm423, %v1544, %v1574
        %v1576 = vsel %vm425, %v1553, %v1575
        %v1577 = vsel %vm427, %v1562, %v1576
        %v1578 = vsel %vm429, %v1571, %v1577
        %v1580 = vadd.f32 %v1431, %v1578
        %s1581 = sld [smem:[#allocation8 + $0xb]]
        %v1582 = vstv %s1581
        %v1583 = vmul.f32 %v1582, %v558
        %s1584 = sld [smem:[#allocation8 + $0x5f]]
        %v1585 = vstv %s1584
        %v1586 = vmul.f32 %v1585, %v891
        %v1587 = vmul.f32 %v1585, %v892
        %v1590 = vrot.slane %v1586, 1
        %v1591 = vrot.slane %v1587, 1
        %v1592 = vsel %vm453, %v1590, %v1591
        %v1594 = vadd.f32 %v1583, %v1592
        %v1595 = vadd.f32 %v1580, %v1594
        %s1596 = sld [smem:[#allocation8 + $0xa9]]
        %v1597 = vstv %s1596
        %v1598 = vadd.f32 %v1595, %v1597
        %vm1599 = vcmp.gt.f32.partialorder %v1598, 0.0
        %v1600 = vmul.f32 %v1240, %v1598
        %v1601 = vsel %vm1599, %v1598, %v1600
        %v1602 = vmul.f32 %v1601, %v336
        %v1603 = vsel %vm445, %v486, %v477
        %v1604 = vsel %vm419, %v495, %v1603
        %v1605 = vsel %vm421, %v504, %v1604
        %v1606 = vsel %vm423, %v513, %v1605
        %v1607 = vsel %vm425, %v522, %v1606
        %v1608 = vsel %vm427, %v531, %v1607
        %v1609 = vsel %vm429, %v550, %v1608
        %v1611 = vadd.f32 %v1602, %v1609
        %s1612 = sld [smem:[#allocation8 + $0xb7]]
        %v1614 = vrot.slane %v1252, 7
        %v1616 = vsel %vm432, 0.0, %v1614
        %v1617 = vrot.slane %v1252, 1
        %v1619 = vsel %vm453, %v1617, 0.0
        %v1621 = vrot.slane %v1611, 7
        %v1623 = vsel %vm432, 0.0, %v1621
        %v1624 = vrot.slane %v1611, 1
        %v1626 = vsel %vm453, %v1624, 0.0
        %1627 = vrot.lane.b32.xlu0 %v1252, 1
        %v1628 = vpop.permute.xlu0 %1627
        %v1630 = vsel %vm642, 0.0, %v1628
        %1631 = vrot.lane.b32.xlu0 %v1252, 127
        %v1632 = vpop.permute.xlu0 %1631
        %v1634 = vsel %vm727, %v1632, 0.0
        %1635 = vrot.lane.b32.xlu0 %v1611, 1
        %v1636 = vpop.permute.xlu0 %1635
        %v1638 = vsel %vm642, 0.0, %v1636
        %1639 = vrot.lane.b32.xlu0 %v1611, 127
        %v1640 = vpop.permute.xlu0 %1639
        %v1642 = vsel %vm727, %v1640, 0.0
        %s1643 = sld [smem:[#allocation8 + $0xc]]
        %v1644 = vstv %s1643
        %v1645 = vmul.f32 %v1644, %v1616
        %s1646 = sld [smem:[#allocation8 + $0x60]]
        %v1647 = vstv %s1646
        %v1648 = vmul.f32 %v1647, %v1630
        %v1649 = vadd.f32 %v1645, %v1648
        %s1650 = sld [smem:[#allocation8 + $0xd]]
        %v1651 = vstv %s1650
        %v1652 = vmul.f32 %v1651, %v1252
        %s1653 = sld [smem:[#allocation8 + $0x61]]
        %v1654 = vstv %s1653
        %v1655 = vmul.f32 %v1654, %v1252
        %v1656 = vadd.f32 %v1652, %v1655
        %v1657 = vadd.f32 %v1649, %v1656
        %s1658 = sld [smem:[#allocation8 + $0xe]]
        %v1659 = vstv %s1658
        %v1660 = vmul.f32 %v1659, %v1619
        %s1661 = sld [smem:[#allocation8 + $0x62]]
        %v1662 = vstv %s1661
        %v1663 = vmul.f32 %v1662, %v1634
        %v1664 = vadd.f32 %v1660, %v1663
        %v1665 = vadd.f32 %v1657, %v1664
        %s1666 = sld [smem:[#allocation8 + $0xf]]
        %v1667 = vstv %s1666
        %v1668 = vmul.f32 %v1667, %v1623
        %s1669 = sld [smem:[#allocation8 + $0x63]]
        %v1670 = vstv %s1669
        %v1671 = vmul.f32 %v1670, %v1638
        %v1672 = vadd.f32 %v1668, %v1671
        %v1673 = vadd.f32 %v1665, %v1672
        %s1674 = sld [smem:[#allocation8 + $0x10]]
        %v1675 = vstv %s1674
        %v1676 = vmul.f32 %v1675, %v1611
        %s1677 = sld [smem:[#allocation8 + $0x64]]
        %v1678 = vstv %s1677
        %v1679 = vmul.f32 %v1678, %v1611
        %v1680 = vadd.f32 %v1676, %v1679
        %v1681 = vadd.f32 %v1673, %v1680
        %s1682 = sld [smem:[#allocation8 + $0x11]]
        %v1683 = vstv %s1682
        %v1684 = vmul.f32 %v1683, %v1626
        %s1685 = sld [smem:[#allocation8 + $0x65]]
        %v1686 = vstv %s1685
        %v1687 = vmul.f32 %v1686, %v1642
        %v1688 = vadd.f32 %v1684, %v1687
        %v1689 = vadd.f32 %v1681, %v1688
        %s1690 = sld [smem:[#allocation8 + $0xaa]]
        %v1691 = vstv %s1690
        %v1692 = vadd.f32 %v1689, %v1691
        %vm1693 = vcmp.gt.f32.partialorder %v1692, 0.0
        %v1694 = vstv %s1612
        %v1695 = vmul.f32 %v1694, %v1692
        %v1696 = vsel %vm1693, %v1692, %v1695
        %v1697 = vmul.f32 %v1696, %v336
        %v1698 = vadd.f32 %v1697, %v1252
        %s1699 = sld [smem:[#allocation8 + $0x12]]
        %v1700 = vstv %s1699
        %v1701 = vmul.f32 %v1700, %v1616
        %s1702 = sld [smem:[#allocation8 + $0x66]]
        %v1703 = vstv %s1702
        %v1704 = vmul.f32 %v1703, %v1630
        %v1705 = vadd.f32 %v1701, %v1704
        %s1706 = sld [smem:[#allocation8 + $0x13]]
        %v1707 = vstv %s1706
        %v1708 = vmul.f32 %v1707, %v1252
        %s1709 = sld [smem:[#allocation8 + $0x67]]
        %v1710 = vstv %s1709
        %v1711 = vmul.f32 %v1710, %v1252
        %v1712 = vadd.f32 %v1708, %v1711
        %v1713 = vadd.f32 %v1705, %v1712
        %s1714 = sld [smem:[#allocation8 + $0x14]]
        %v1715 = vstv %s1714
        %v1716 = vmul.f32 %v1715, %v1619
        %s1717 = sld [smem:[#allocation8 + $0x68]]
        %v1718 = vstv %s1717
        %v1719 = vmul.f32 %v1718, %v1634
        %v1720 = vadd.f32 %v1716, %v1719
        %v1721 = vadd.f32 %v1713, %v1720
        %s1722 = sld [smem:[#allocation8 + $0x15]]
        %v1723 = vstv %s1722
        %v1724 = vmul.f32 %v1723, %v1623
        %s1725 = sld [smem:[#allocation8 + $0x69]]
        %v1726 = vstv %s1725
        %v1727 = vmul.f32 %v1726, %v1638
        %v1728 = vadd.f32 %v1724, %v1727
        %v1729 = vadd.f32 %v1721, %v1728
        %s1730 = sld [smem:[#allocation8 + $0x16]]
        %v1731 = vstv %s1730
        %v1732 = vmul.f32 %v1731, %v1611
        %s1733 = sld [smem:[#allocation8 + $0x6a]]
        %v1734 = vstv %s1733
        %v1735 = vmul.f32 %v1734, %v1611
        %v1736 = vadd.f32 %v1732, %v1735
        %v1737 = vadd.f32 %v1729, %v1736
        %s1738 = sld [smem:[#allocation8 + $0x17]]
        %v1739 = vstv %s1738
        %v1740 = vmul.f32 %v1739, %v1626
        %s1741 = sld [smem:[#allocation8 + $0x6b]]
        %v1742 = vstv %s1741
        %v1743 = vmul.f32 %v1742, %v1642
        %v1744 = vadd.f32 %v1740, %v1743
        %v1745 = vadd.f32 %v1737, %v1744
        %s1746 = sld [smem:[#allocation8 + $0xab]]
        %v1747 = vstv %s1746
        %v1748 = vadd.f32 %v1745, %v1747
        %vm1749 = vcmp.gt.f32.partialorder %v1748, 0.0
        %v1750 = vmul.f32 %v1694, %v1748
        %v1751 = vsel %vm1749, %v1748, %v1750
        %v1752 = vmul.f32 %v1751, %v336
        %v1753 = vadd.f32 %v1752, %v1611
        %s1754 = sld [smem:[#allocation8 + $0xb8]]
        %v1756 = vrot.slane %v1698, 7
        %v1758 = vsel %vm432, 0.0, %v1756
        %v1759 = vrot.slane %v1698, 1
        %v1761 = vsel %vm453, %v1759, 0.0
        %v1763 = vrot.slane %v1753, 7
        %v1765 = vsel %vm432, 0.0, %v1763
        %v1766 = vrot.slane %v1753, 1
        %v1768 = vsel %vm453, %v1766, 0.0
        %1769 = vrot.lane.b32.xlu0 %v1698, 1
        %v1770 = vpop.permute.xlu0 %1769
        %v1772 = vsel %vm642, 0.0, %v1770
        %1773 = vrot.lane.b32.xlu0 %v1698, 127
        %v1774 = vpop.permute.xlu0 %1773
        %v1776 = vsel %vm727, %v1774, 0.0
        %1777 = vrot.lane.b32.xlu0 %v1753, 1
        %v1778 = vpop.permute.xlu0 %1777
        %v1780 = vsel %vm642, 0.0, %v1778
        %1781 = vrot.lane.b32.xlu0 %v1753, 127
        %v1782 = vpop.permute.xlu0 %1781
        %v1784 = vsel %vm727, %v1782, 0.0
        %s1785 = sld [smem:[#allocation8 + $0x18]]
        %v1786 = vstv %s1785
        %v1787 = vmul.f32 %v1786, %v1758
        %s1788 = sld [smem:[#allocation8 + $0x6c]]
        %v1789 = vstv %s1788
        %v1790 = vmul.f32 %v1789, %v1772
        %v1791 = vadd.f32 %v1787, %v1790
        %s1792 = sld [smem:[#allocation8 + $0x19]]
        %v1793 = vstv %s1792
        %v1794 = vmul.f32 %v1793, %v1698
        %s1795 = sld [smem:[#allocation8 + $0x6d]]
        %v1796 = vstv %s1795
        %v1797 = vmul.f32 %v1796, %v1698
        %v1798 = vadd.f32 %v1794, %v1797
        %v1799 = vadd.f32 %v1791, %v1798
        %s1800 = sld [smem:[#allocation8 + $0x1a]]
        %v1801 = vstv %s1800
        %v1802 = vmul.f32 %v1801, %v1761
        %s1803 = sld [smem:[#allocation8 + $0x6e]]
        %v1804 = vstv %s1803
        %v1805 = vmul.f32 %v1804, %v1776
        %v1806 = vadd.f32 %v1802, %v1805
        %v1807 = vadd.f32 %v1799, %v1806
        %s1808 = sld [smem:[#allocation8 + $0x1b]]
        %v1809 = vstv %s1808
        %v1810 = vmul.f32 %v1809, %v1765
        %s1811 = sld [smem:[#allocation8 + $0x6f]]
        %v1812 = vstv %s1811
        %v1813 = vmul.f32 %v1812, %v1780
        %v1814 = vadd.f32 %v1810, %v1813
        %v1815 = vadd.f32 %v1807, %v1814
        %s1816 = sld [smem:[#allocation8 + $0x1c]]
        %v1817 = vstv %s1816
        %v1818 = vmul.f32 %v1817, %v1753
        %s1819 = sld [smem:[#allocation8 + $0x70]]
        %v1820 = vstv %s1819
        %v1821 = vmul.f32 %v1820, %v1753
        %v1822 = vadd.f32 %v1818, %v1821
        %v1823 = vadd.f32 %v1815, %v1822
        %s1824 = sld [smem:[#allocation8 + $0x1d]]
        %v1825 = vstv %s1824
        %v1826 = vmul.f32 %v1825, %v1768
        %s1827 = sld [smem:[#allocation8 + $0x71]]
        %v1828 = vstv %s1827
        %v1829 = vmul.f32 %v1828, %v1784
        %v1830 = vadd.f32 %v1826, %v1829
        %v1831 = vadd.f32 %v1823, %v1830
        %s1832 = sld [smem:[#allocation8 + $0xac]]
        %v1833 = vstv %s1832
        %v1834 = vadd.f32 %v1831, %v1833
        %vm1835 = vcmp.gt.f32.partialorder %v1834, 0.0
        %v1836 = vstv %s1754
        %v1837 = vmul.f32 %v1836, %v1834
        %v1838 = vsel %vm1835, %v1834, %v1837
        %v1839 = vmul.f32 %v1838, %v336
        %v1840 = vadd.f32 %v1839, %v1698
        %s1841 = sld [smem:[#allocation8 + $0x1e]]
        %v1842 = vstv %s1841
        %v1843 = vmul.f32 %v1842, %v1758
        %s1844 = sld [smem:[#allocation8 + $0x72]]
        %v1845 = vstv %s1844
        %v1846 = vmul.f32 %v1845, %v1772
        %v1847 = vadd.f32 %v1843, %v1846
        %s1848 = sld [smem:[#allocation8 + $0x1f]]
        %v1849 = vstv %s1848
        %v1850 = vmul.f32 %v1849, %v1698
        %s1851 = sld [smem:[#allocation8 + $0x73]]
        %v1852 = vstv %s1851
        %v1853 = vmul.f32 %v1852, %v1698
        %v1854 = vadd.f32 %v1850, %v1853
        %v1855 = vadd.f32 %v1847, %v1854
        %s1856 = sld [smem:[#allocation8 + $0x20]]
        %v1857 = vstv %s1856
        %v1858 = vmul.f32 %v1857, %v1761
        %s1859 = sld [smem:[#allocation8 + $0x74]]
        %v1860 = vstv %s1859
        %v1861 = vmul.f32 %v1860, %v1776
        %v1862 = vadd.f32 %v1858, %v1861
        %v1863 = vadd.f32 %v1855, %v1862
        %s1864 = sld [smem:[#allocation8 + $0x21]]
        %v1865 = vstv %s1864
        %v1866 = vmul.f32 %v1865, %v1765
        %s1867 = sld [smem:[#allocation8 + $0x75]]
        %v1868 = vstv %s1867
        %v1869 = vmul.f32 %v1868, %v1780
        %v1870 = vadd.f32 %v1866, %v1869
        %v1871 = vadd.f32 %v1863, %v1870
        %s1872 = sld [smem:[#allocation8 + $0x22]]
        %v1873 = vstv %s1872
        %v1874 = vmul.f32 %v1873, %v1753
        %s1875 = sld [smem:[#allocation8 + $0x76]]
        %v1876 = vstv %s1875
        %v1877 = vmul.f32 %v1876, %v1753
        %v1878 = vadd.f32 %v1874, %v1877
        %v1879 = vadd.f32 %v1871, %v1878
        %s1880 = sld [smem:[#allocation8 + $0x23]]
        %v1881 = vstv %s1880
        %v1882 = vmul.f32 %v1881, %v1768
        %s1883 = sld [smem:[#allocation8 + $0x77]]
        %v1884 = vstv %s1883
        %v1885 = vmul.f32 %v1884, %v1784
        %v1886 = vadd.f32 %v1882, %v1885
        %v1887 = vadd.f32 %v1879, %v1886
        %s1888 = sld [smem:[#allocation8 + $0xad]]
        %v1889 = vstv %s1888
        %v1890 = vadd.f32 %v1887, %v1889
        %vm1891 = vcmp.gt.f32.partialorder %v1890, 0.0
        %v1892 = vmul.f32 %v1836, %v1890
        %v1893 = vsel %vm1891, %v1890, %v1892
        %v1894 = vmul.f32 %v1893, %v336
        %v1895 = vadd.f32 %v1894, %v1753
        %s1896 = sld [smem:[#allocation8 + $0xb9]]
        %v1898 = vrot.slane %v1840, 7
        %v1900 = vsel %vm432, 0.0, %v1898
        %v1901 = vrot.slane %v1840, 1
        %v1903 = vsel %vm453, %v1901, 0.0
        %v1905 = vrot.slane %v1895, 7
        %v1907 = vsel %vm432, 0.0, %v1905
        %v1908 = vrot.slane %v1895, 1
        %v1910 = vsel %vm453, %v1908, 0.0
        %1911 = vrot.lane.b32.xlu0 %v1840, 1
        %v1912 = vpop.permute.xlu0 %1911
        %v1914 = vsel %vm642, 0.0, %v1912
        %1915 = vrot.lane.b32.xlu0 %v1840, 127
        %v1916 = vpop.permute.xlu0 %1915
        %v1918 = vsel %vm727, %v1916, 0.0
        %1919 = vrot.lane.b32.xlu0 %v1895, 1
        %v1920 = vpop.permute.xlu0 %1919
        %v1922 = vsel %vm642, 0.0, %v1920
        %1923 = vrot.lane.b32.xlu0 %v1895, 127
        %v1924 = vpop.permute.xlu0 %1923
        %v1926 = vsel %vm727, %v1924, 0.0
        %s1927 = sld [smem:[#allocation8 + $0x24]]
        %v1928 = vstv %s1927
        %v1929 = vmul.f32 %v1928, %v1900
        %s1930 = sld [smem:[#allocation8 + $0x78]]
        %v1931 = vstv %s1930
        %v1932 = vmul.f32 %v1931, %v1914
        %v1933 = vadd.f32 %v1929, %v1932
        %s1934 = sld [smem:[#allocation8 + $0x25]]
        %v1935 = vstv %s1934
        %v1936 = vmul.f32 %v1935, %v1840
        %s1937 = sld [smem:[#allocation8 + $0x79]]
        %v1938 = vstv %s1937
        %v1939 = vmul.f32 %v1938, %v1840
        %v1940 = vadd.f32 %v1936, %v1939
        %v1941 = vadd.f32 %v1933, %v1940
        %s1942 = sld [smem:[#allocation8 + $0x26]]
        %v1943 = vstv %s1942
        %v1944 = vmul.f32 %v1943, %v1903
        %s1945 = sld [smem:[#allocation8 + $0x7a]]
        %v1946 = vstv %s1945
        %v1947 = vmul.f32 %v1946, %v1918
        %v1948 = vadd.f32 %v1944, %v1947
        %v1949 = vadd.f32 %v1941, %v1948
        %s1950 = sld [smem:[#allocation8 + $0x27]]
        %v1951 = vstv %s1950
        %v1952 = vmul.f32 %v1951, %v1907
        %s1953 = sld [smem:[#allocation8 + $0x7b]]
        %v1954 = vstv %s1953
        %v1955 = vmul.f32 %v1954, %v1922
        %v1956 = vadd.f32 %v1952, %v1955
        %v1957 = vadd.f32 %v1949, %v1956
        %s1958 = sld [smem:[#allocation8 + $0x28]]
        %v1959 = vstv %s1958
        %v1960 = vmul.f32 %v1959, %v1895
        %s1961 = sld [smem:[#allocation8 + $0x7c]]
        %v1962 = vstv %s1961
        %v1963 = vmul.f32 %v1962, %v1895
        %v1964 = vadd.f32 %v1960, %v1963
        %v1965 = vadd.f32 %v1957, %v1964
        %s1966 = sld [smem:[#allocation8 + $0x29]]
        %v1967 = vstv %s1966
        %v1968 = vmul.f32 %v1967, %v1910
        %s1969 = sld [smem:[#allocation8 + $0x7d]]
        %v1970 = vstv %s1969
        %v1971 = vmul.f32 %v1970, %v1926
        %v1972 = vadd.f32 %v1968, %v1971
        %v1973 = vadd.f32 %v1965, %v1972
        %s1974 = sld [smem:[#allocation8 + $0xae]]
        %v1975 = vstv %s1974
        %v1976 = vadd.f32 %v1973, %v1975
        %vm1977 = vcmp.gt.f32.partialorder %v1976, 0.0
        %v1978 = vstv %s1896
        %v1979 = vmul.f32 %v1978, %v1976
        %v1980 = vsel %vm1977, %v1976, %v1979
        %v1981 = vmul.f32 %v1980, %v336
        %v1982 = vadd.f32 %v1981, %v1840
        %s1983 = sld [smem:[#allocation8 + $0x2a]]
        %v1984 = vstv %s1983
        %v1985 = vmul.f32 %v1984, %v1900
        %s1986 = sld [smem:[#allocation8 + $0x7e]]
        %v1987 = vstv %s1986
        %v1988 = vmul.f32 %v1987, %v1914
        %v1989 = vadd.f32 %v1985, %v1988
        %s1990 = sld [smem:[#allocation8 + $0x2b]]
        %v1991 = vstv %s1990
        %v1992 = vmul.f32 %v1991, %v1840
        %s1993 = sld [smem:[#allocation8 + $0x7f]]
        %v1994 = vstv %s1993
        %v1995 = vmul.f32 %v1994, %v1840
        %v1996 = vadd.f32 %v1992, %v1995
        %v1997 = vadd.f32 %v1989, %v1996
        %s1998 = sld [smem:[#allocation8 + $0x2c]]
        %v1999 = vstv %s1998
        %v2000 = vmul.f32 %v1999, %v1903
        %s2001 = sld [smem:[#allocation8 + $0x80]]
        %v2002 = vstv %s2001
        %v2003 = vmul.f32 %v2002, %v1918
        %v2004 = vadd.f32 %v2000, %v2003
        %v2005 = vadd.f32 %v1997, %v2004
        %s2006 = sld [smem:[#allocation8 + $0x2d]]
        %v2007 = vstv %s2006
        %v2008 = vmul.f32 %v2007, %v1907
        %s2009 = sld [smem:[#allocation8 + $0x81]]
        %v2010 = vstv %s2009
        %v2011 = vmul.f32 %v2010, %v1922
        %v2012 = vadd.f32 %v2008, %v2011
        %v2013 = vadd.f32 %v2005, %v2012
        %s2014 = sld [smem:[#allocation8 + $0x2e]]
        %v2015 = vstv %s2014
        %v2016 = vmul.f32 %v2015, %v1895
        %s2017 = sld [smem:[#allocation8 + $0x82]]
        %v2018 = vstv %s2017
        %v2019 = vmul.f32 %v2018, %v1895
        %v2020 = vadd.f32 %v2016, %v2019
        %v2021 = vadd.f32 %v2013, %v2020
        %s2022 = sld [smem:[#allocation8 + $0x2f]]
        %v2023 = vstv %s2022
        %v2024 = vmul.f32 %v2023, %v1910
        %s2025 = sld [smem:[#allocation8 + $0x83]]
        %v2026 = vstv %s2025
        %v2027 = vmul.f32 %v2026, %v1926
        %v2028 = vadd.f32 %v2024, %v2027
        %v2029 = vadd.f32 %v2021, %v2028
        %s2030 = sld [smem:[#allocation8 + $0xaf]]
        %v2031 = vstv %s2030
        %v2032 = vadd.f32 %v2029, %v2031
        %vm2033 = vcmp.gt.f32.partialorder %v2032, 0.0
        %v2034 = vmul.f32 %v1978, %v2032
        %v2035 = vsel %vm2033, %v2032, %v2034
        %v2036 = vmul.f32 %v2035, %v336
        %v2037 = vadd.f32 %v2036, %v1895
        %s2038 = sld [smem:[#allocation8 + $0xba]]
        %v2040 = vrot.slane %v1982, 7
        %v2042 = vsel %vm432, 0.0, %v2040
        %v2043 = vrot.slane %v1982, 1
        %v2045 = vsel %vm453, %v2043, 0.0
        %v2047 = vrot.slane %v2037, 7
        %v2049 = vsel %vm432, 0.0, %v2047
        %v2050 = vrot.slane %v2037, 1
        %v2052 = vsel %vm453, %v2050, 0.0
        %2053 = vrot.lane.b32.xlu0 %v1982, 1
        %v2054 = vpop.permute.xlu0 %2053
        %v2056 = vsel %vm642, 0.0, %v2054
        %2057 = vrot.lane.b32.xlu0 %v1982, 127
        %v2058 = vpop.permute.xlu0 %2057
        %v2060 = vsel %vm727, %v2058, 0.0
        %2061 = vrot.lane.b32.xlu0 %v2037, 1
        %v2062 = vpop.permute.xlu0 %2061
        %v2064 = vsel %vm642, 0.0, %v2062
        %2065 = vrot.lane.b32.xlu0 %v2037, 127
        %v2066 = vpop.permute.xlu0 %2065
        %v2068 = vsel %vm727, %v2066, 0.0
        %s2069 = sld [smem:[#allocation8 + $0x30]]
        %v2070 = vstv %s2069
        %v2071 = vmul.f32 %v2070, %v2042
        %s2072 = sld [smem:[#allocation8 + $0x84]]
        %v2073 = vstv %s2072
        %v2074 = vmul.f32 %v2073, %v2056
        %v2075 = vadd.f32 %v2071, %v2074
        %s2076 = sld [smem:[#allocation8 + $0x31]]
        %v2077 = vstv %s2076
        %v2078 = vmul.f32 %v2077, %v1982
        %s2079 = sld [smem:[#allocation8 + $0x85]]
        %v2080 = vstv %s2079
        %v2081 = vmul.f32 %v2080, %v1982
        %v2082 = vadd.f32 %v2078, %v2081
        %v2083 = vadd.f32 %v2075, %v2082
        %s2084 = sld [smem:[#allocation8 + $0x32]]
        %v2085 = vstv %s2084
        %v2086 = vmul.f32 %v2085, %v2045
        %s2087 = sld [smem:[#allocation8 + $0x86]]
        %v2088 = vstv %s2087
        %v2089 = vmul.f32 %v2088, %v2060
        %v2090 = vadd.f32 %v2086, %v2089
        %v2091 = vadd.f32 %v2083, %v2090
        %s2092 = sld [smem:[#allocation8 + $0x33]]
        %v2093 = vstv %s2092
        %v2094 = vmul.f32 %v2093, %v2049
        %s2095 = sld [smem:[#allocation8 + $0x87]]
        %v2096 = vstv %s2095
        %v2097 = vmul.f32 %v2096, %v2064
        %v2098 = vadd.f32 %v2094, %v2097
        %v2099 = vadd.f32 %v2091, %v2098
        %s2100 = sld [smem:[#allocation8 + $0x34]]
        %v2101 = vstv %s2100
        %v2102 = vmul.f32 %v2101, %v2037
        %s2103 = sld [smem:[#allocation8 + $0x88]]
        %v2104 = vstv %s2103
        %v2105 = vmul.f32 %v2104, %v2037
        %v2106 = vadd.f32 %v2102, %v2105
        %v2107 = vadd.f32 %v2099, %v2106
        %s2108 = sld [smem:[#allocation8 + $0x35]]
        %v2109 = vstv %s2108
        %v2110 = vmul.f32 %v2109, %v2052
        %s2111 = sld [smem:[#allocation8 + $0x89]]
        %v2112 = vstv %s2111
        %v2113 = vmul.f32 %v2112, %v2068
        %v2114 = vadd.f32 %v2110, %v2113
        %v2115 = vadd.f32 %v2107, %v2114
        %s2116 = sld [smem:[#allocation8 + $0xb0]]
        %v2117 = vstv %s2116
        %v2118 = vadd.f32 %v2115, %v2117
        %vm2119 = vcmp.gt.f32.partialorder %v2118, 0.0
        %v2120 = vstv %s2038
        %v2121 = vmul.f32 %v2120, %v2118
        %v2122 = vsel %vm2119, %v2118, %v2121
        %v2123 = vmul.f32 %v2122, %v336
        %v2124 = vadd.f32 %v2123, %v1982
        %s2125 = sld [smem:[#allocation8 + $0x36]]
        %v2126 = vstv %s2125
        %v2127 = vmul.f32 %v2126, %v2042
        %s2128 = sld [smem:[#allocation8 + $0x8a]]
        %v2129 = vstv %s2128
        %v2130 = vmul.f32 %v2129, %v2056
        %v2131 = vadd.f32 %v2127, %v2130
        %s2132 = sld [smem:[#allocation8 + $0x37]]
        %v2133 = vstv %s2132
        %v2134 = vmul.f32 %v2133, %v1982
        %s2135 = sld [smem:[#allocation8 + $0x8b]]
        %v2136 = vstv %s2135
        %v2137 = vmul.f32 %v2136, %v1982
        %v2138 = vadd.f32 %v2134, %v2137
        %v2139 = vadd.f32 %v2131, %v2138
        %s2140 = sld [smem:[#allocation8 + $0x38]]
        %v2141 = vstv %s2140
        %v2142 = vmul.f32 %v2141, %v2045
        %s2143 = sld [smem:[#allocation8 + $0x8c]]
        %v2144 = vstv %s2143
        %v2145 = vmul.f32 %v2144, %v2060
        %v2146 = vadd.f32 %v2142, %v2145
        %v2147 = vadd.f32 %v2139, %v2146
        %s2148 = sld [smem:[#allocation8 + $0x39]]
        %v2149 = vstv %s2148
        %v2150 = vmul.f32 %v2149, %v2049
        %s2151 = sld [smem:[#allocation8 + $0x8d]]
        %v2152 = vstv %s2151
        %v2153 = vmul.f32 %v2152, %v2064
        %v2154 = vadd.f32 %v2150, %v2153
        %v2155 = vadd.f32 %v2147, %v2154
        %s2156 = sld [smem:[#allocation8 + $0x3a]]
        %v2157 = vstv %s2156
        %v2158 = vmul.f32 %v2157, %v2037
        %s2159 = sld [smem:[#allocation8 + $0x8e]]
        %v2160 = vstv %s2159
        %v2161 = vmul.f32 %v2160, %v2037
        %v2162 = vadd.f32 %v2158, %v2161
        %v2163 = vadd.f32 %v2155, %v2162
        %s2164 = sld [smem:[#allocation8 + $0x3b]]
        %v2165 = vstv %s2164
        %v2166 = vmul.f32 %v2165, %v2052
        %s2167 = sld [smem:[#allocation8 + $0x8f]]
        %v2168 = vstv %s2167
        %v2169 = vmul.f32 %v2168, %v2068
        %v2170 = vadd.f32 %v2166, %v2169
        %v2171 = vadd.f32 %v2163, %v2170
        %s2172 = sld [smem:[#allocation8 + $0xb1]]
        %v2173 = vstv %s2172
        %v2174 = vadd.f32 %v2171, %v2173
        %vm2175 = vcmp.gt.f32.partialorder %v2174, 0.0
        %v2176 = vmul.f32 %v2120, %v2174
        %v2177 = vsel %vm2175, %v2174, %v2176
        %v2178 = vmul.f32 %v2177, %v336
        %v2179 = vadd.f32 %v2178, %v2037
        %s2180 = sld [smem:[#allocation8 + $0xbb]]
        %v2182 = vrot.slane %v2124, 7
        %v2184 = vsel %vm432, 0.0, %v2182
        %v2185 = vrot.slane %v2124, 1
        %v2187 = vsel %vm453, %v2185, 0.0
        %v2189 = vrot.slane %v2179, 7
        %v2191 = vsel %vm432, 0.0, %v2189
        %v2192 = vrot.slane %v2179, 1
        %v2194 = vsel %vm453, %v2192, 0.0
        %2195 = vrot.lane.b32.xlu0 %v2124, 1
        %v2196 = vpop.permute.xlu0 %2195
        %v2198 = vsel %vm642, 0.0, %v2196
        %2199 = vrot.lane.b32.xlu0 %v2124, 127
        %v2200 = vpop.permute.xlu0 %2199
        %v2202 = vsel %vm727, %v2200, 0.0
        %2203 = vrot.lane.b32.xlu0 %v2179, 1
        %v2204 = vpop.permute.xlu0 %2203
        %v2206 = vsel %vm642, 0.0, %v2204
        %2207 = vrot.lane.b32.xlu0 %v2179, 127
        %v2208 = vpop.permute.xlu0 %2207
        %v2210 = vsel %vm727, %v2208, 0.0
        %s2211 = sld [smem:[#allocation8 + $0x3c]]
        %v2212 = vstv %s2211
        %v2213 = vmul.f32 %v2212, %v2184
        %s2214 = sld [smem:[#allocation8 + $0x90]]
        %v2215 = vstv %s2214
        %v2216 = vmul.f32 %v2215, %v2198
        %v2217 = vadd.f32 %v2213, %v2216
        %s2218 = sld [smem:[#allocation8 + $0x3d]]
        %v2219 = vstv %s2218
        %v2220 = vmul.f32 %v2219, %v2124
        %s2221 = sld [smem:[#allocation8 + $0x91]]
        %v2222 = vstv %s2221
        %v2223 = vmul.f32 %v2222, %v2124
        %v2224 = vadd.f32 %v2220, %v2223
        %v2225 = vadd.f32 %v2217, %v2224
        %s2226 = sld [smem:[#allocation8 + $0x3e]]
        %v2227 = vstv %s2226
        %v2228 = vmul.f32 %v2227, %v2187
        %s2229 = sld [smem:[#allocation8 + $0x92]]
        %v2230 = vstv %s2229
        %v2231 = vmul.f32 %v2230, %v2202
        %v2232 = vadd.f32 %v2228, %v2231
        %v2233 = vadd.f32 %v2225, %v2232
        %s2234 = sld [smem:[#allocation8 + $0x3f]]
        %v2235 = vstv %s2234
        %v2236 = vmul.f32 %v2235, %v2191
        %s2237 = sld [smem:[#allocation8 + $0x93]]
        %v2238 = vstv %s2237
        %v2239 = vmul.f32 %v2238, %v2206
        %v2240 = vadd.f32 %v2236, %v2239
        %v2241 = vadd.f32 %v2233, %v2240
        %s2242 = sld [smem:[#allocation8 + $0x40]]
        %v2243 = vstv %s2242
        %v2244 = vmul.f32 %v2243, %v2179
        %s2245 = sld [smem:[#allocation8 + $0x94]]
        %v2246 = vstv %s2245
        %v2247 = vmul.f32 %v2246, %v2179
        %v2248 = vadd.f32 %v2244, %v2247
        %v2249 = vadd.f32 %v2241, %v2248
        %s2250 = sld [smem:[#allocation8 + $0x41]]
        %v2251 = vstv %s2250
        %v2252 = vmul.f32 %v2251, %v2194
        %s2253 = sld [smem:[#allocation8 + $0x95]]
        %v2254 = vstv %s2253
        %v2255 = vmul.f32 %v2254, %v2210
        %v2256 = vadd.f32 %v2252, %v2255
        %v2257 = vadd.f32 %v2249, %v2256
        %s2258 = sld [smem:[#allocation8 + $0xb2]]
        %v2259 = vstv %s2258
        %v2260 = vadd.f32 %v2257, %v2259
        %vm2261 = vcmp.gt.f32.partialorder %v2260, 0.0
        %v2262 = vstv %s2180
        %v2263 = vmul.f32 %v2262, %v2260
        %v2264 = vsel %vm2261, %v2260, %v2263
        %v2265 = vmul.f32 %v2264, %v336
        %v2266 = vadd.f32 %v2265, %v2124
        %s2267 = sld [smem:[#allocation8 + $0x42]]
        %v2268 = vstv %s2267
        %v2269 = vmul.f32 %v2268, %v2184
        %s2270 = sld [smem:[#allocation8 + $0x96]]
        %v2271 = vstv %s2270
        %v2272 = vmul.f32 %v2271, %v2198
        %v2273 = vadd.f32 %v2269, %v2272
        %s2274 = sld [smem:[#allocation8 + $0x43]]
        %v2275 = vstv %s2274
        %v2276 = vmul.f32 %v2275, %v2124
        %s2277 = sld [smem:[#allocation8 + $0x97]]
        %v2278 = vstv %s2277
        %v2279 = vmul.f32 %v2278, %v2124
        %v2280 = vadd.f32 %v2276, %v2279
        %v2281 = vadd.f32 %v2273, %v2280
        %s2282 = sld [smem:[#allocation8 + $0x44]]
        %v2283 = vstv %s2282
        %v2284 = vmul.f32 %v2283, %v2187
        %s2285 = sld [smem:[#allocation8 + $0x98]]
        %v2286 = vstv %s2285
        %v2287 = vmul.f32 %v2286, %v2202
        %v2288 = vadd.f32 %v2284, %v2287
        %v2289 = vadd.f32 %v2281, %v2288
        %s2290 = sld [smem:[#allocation8 + $0x45]]
        %v2291 = vstv %s2290
        %v2292 = vmul.f32 %v2291, %v2191
        %s2293 = sld [smem:[#allocation8 + $0x99]]
        %v2294 = vstv %s2293
        %v2295 = vmul.f32 %v2294, %v2206
        %v2296 = vadd.f32 %v2292, %v2295
        %v2297 = vadd.f32 %v2289, %v2296
        %s2298 = sld [smem:[#allocation8 + $0x46]]
        %v2299 = vstv %s2298
        %v2300 = vmul.f32 %v2299, %v2179
        %s2301 = sld [smem:[#allocation8 + $0x9a]]
        %v2302 = vstv %s2301
        %v2303 = vmul.f32 %v2302, %v2179
        %v2304 = vadd.f32 %v2300, %v2303
        %v2305 = vadd.f32 %v2297, %v2304
        %s2306 = sld [smem:[#allocation8 + $0x47]]
        %v2307 = vstv %s2306
        %v2308 = vmul.f32 %v2307, %v2194
        %s2309 = sld [smem:[#allocation8 + $0x9b]]
        %v2310 = vstv %s2309
        %v2311 = vmul.f32 %v2310, %v2210
        %v2312 = vadd.f32 %v2308, %v2311
        %v2313 = vadd.f32 %v2305, %v2312
        %s2314 = sld [smem:[#allocation8 + $0xb3]]
        %v2315 = vstv %s2314
        %v2316 = vadd.f32 %v2313, %v2315
        %vm2317 = vcmp.gt.f32.partialorder %v2316, 0.0
        %v2318 = vmul.f32 %v2262, %v2316
        %v2319 = vsel %vm2317, %v2316, %v2318
        %v2320 = vmul.f32 %v2319, %v336
        %v2321 = vadd.f32 %v2320, %v2179
        %s2322 = sld [smem:[#allocation8 + $0xbc]]
        %v2324 = vrot.slane %v2266, 7
        %v2326 = vsel %vm432, 0.0, %v2324
        %v2327 = vrot.slane %v2266, 1
        %v2329 = vsel %vm453, %v2327, 0.0
        %v2331 = vrot.slane %v2321, 7
        %v2333 = vsel %vm432, 0.0, %v2331
        %v2334 = vrot.slane %v2321, 1
        %v2336 = vsel %vm453, %v2334, 0.0
        %2337 = vrot.lane.b32.xlu0 %v2266, 1
        %v2338 = vpop.permute.xlu0 %2337
        %v2340 = vsel %vm642, 0.0, %v2338
        %2341 = vrot.lane.b32.xlu0 %v2266, 127
        %v2342 = vpop.permute.xlu0 %2341
        %v2344 = vsel %vm727, %v2342, 0.0
        %2345 = vrot.lane.b32.xlu0 %v2321, 1
        %v2346 = vpop.permute.xlu0 %2345
        %v2348 = vsel %vm642, 0.0, %v2346
        %2349 = vrot.lane.b32.xlu0 %v2321, 127
        %v2350 = vpop.permute.xlu0 %2349
        %v2352 = vsel %vm727, %v2350, 0.0
        %s2353 = sld [smem:[#allocation8 + $0x48]]
        %v2354 = vstv %s2353
        %v2355 = vmul.f32 %v2354, %v2326
        %s2356 = sld [smem:[#allocation8 + $0x9c]]
        %v2357 = vstv %s2356
        %v2358 = vmul.f32 %v2357, %v2340
        %v2359 = vadd.f32 %v2355, %v2358
        %s2360 = sld [smem:[#allocation8 + $0x49]]
        %v2361 = vstv %s2360
        %v2362 = vmul.f32 %v2361, %v2266
        %s2363 = sld [smem:[#allocation8 + $0x9d]]
        %v2364 = vstv %s2363
        %v2365 = vmul.f32 %v2364, %v2266
        %v2366 = vadd.f32 %v2362, %v2365
        %v2367 = vadd.f32 %v2359, %v2366
        %s2368 = sld [smem:[#allocation8 + $0x4a]]
        %v2369 = vstv %s2368
        %v2370 = vmul.f32 %v2369, %v2329
        %s2371 = sld [smem:[#allocation8 + $0x9e]]
        %v2372 = vstv %s2371
        %v2373 = vmul.f32 %v2372, %v2344
        %v2374 = vadd.f32 %v2370, %v2373
        %v2375 = vadd.f32 %v2367, %v2374
        %s2376 = sld [smem:[#allocation8 + $0x4b]]
        %v2377 = vstv %s2376
        %v2378 = vmul.f32 %v2377, %v2333
        %s2379 = sld [smem:[#allocation8 + $0x9f]]
        %v2380 = vstv %s2379
        %v2381 = vmul.f32 %v2380, %v2348
        %v2382 = vadd.f32 %v2378, %v2381
        %v2383 = vadd.f32 %v2375, %v2382
        %s2384 = sld [smem:[#allocation8 + $0x4c]]
        %v2385 = vstv %s2384
        %v2386 = vmul.f32 %v2385, %v2321
        %s2387 = sld [smem:[#allocation8 + $0xa0]]
        %v2388 = vstv %s2387
        %v2389 = vmul.f32 %v2388, %v2321
        %v2390 = vadd.f32 %v2386, %v2389
        %v2391 = vadd.f32 %v2383, %v2390
        %s2392 = sld [smem:[#allocation8 + $0x4d]]
        %v2393 = vstv %s2392
        %v2394 = vmul.f32 %v2393, %v2336
        %s2395 = sld [smem:[#allocation8 + $0xa1]]
        %v2396 = vstv %s2395
        %v2397 = vmul.f32 %v2396, %v2352
        %v2398 = vadd.f32 %v2394, %v2397
        %v2399 = vadd.f32 %v2391, %v2398
        %s2400 = sld [smem:[#allocation8 + $0xb4]]
        %v2401 = vstv %s2400
        %v2402 = vadd.f32 %v2399, %v2401
        %vm2403 = vcmp.gt.f32.partialorder %v2402, 0.0
        %v2404 = vstv %s2322
        %v2405 = vmul.f32 %v2404, %v2402
        %v2406 = vsel %vm2403, %v2402, %v2405
        %v2407 = vmul.f32 %v2406, %v336
        %v2408 = vadd.f32 %v2407, %v2266
        %s2409 = sld [smem:[#allocation8 + $0x4e]]
        %v2410 = vstv %s2409
        %v2411 = vmul.f32 %v2410, %v2326
        %s2412 = sld [smem:[#allocation8 + $0xa2]]
        %v2413 = vstv %s2412
        %v2414 = vmul.f32 %v2413, %v2340
        %v2415 = vadd.f32 %v2411, %v2414
        %s2416 = sld [smem:[#allocation8 + $0x4f]]
        %v2417 = vstv %s2416
        %v2418 = vmul.f32 %v2417, %v2266
        %s2419 = sld [smem:[#allocation8 + $0xa3]]
        %v2420 = vstv %s2419
        %v2421 = vmul.f32 %v2420, %v2266
        %v2422 = vadd.f32 %v2418, %v2421
        %v2423 = vadd.f32 %v2415, %v2422
        %s2424 = sld [smem:[#allocation8 + $0x50]]
        %v2425 = vstv %s2424
        %v2426 = vmul.f32 %v2425, %v2329
        %s2427 = sld [smem:[#allocation8 + $0xa4]]
        %v2428 = vstv %s2427
        %v2429 = vmul.f32 %v2428, %v2344
        %v2430 = vadd.f32 %v2426, %v2429
        %v2431 = vadd.f32 %v2423, %v2430
        %s2432 = sld [smem:[#allocation8 + $0x51]]
        %v2433 = vstv %s2432
        %v2434 = vmul.f32 %v2433, %v2333
        %s2435 = sld [smem:[#allocation8 + $0xa5]]
        %v2436 = vstv %s2435
        %v2437 = vmul.f32 %v2436, %v2348
        %v2438 = vadd.f32 %v2434, %v2437
        %v2439 = vadd.f32 %v2431, %v2438
        %s2440 = sld [smem:[#allocation8 + $0x52]]
        %v2441 = vstv %s2440
        %v2442 = vmul.f32 %v2441, %v2321
        %s2443 = sld [smem:[#allocation8 + $0xa6]]
        %v2444 = vstv %s2443
        %v2445 = vmul.f32 %v2444, %v2321
        %v2446 = vadd.f32 %v2442, %v2445
        %v2447 = vadd.f32 %v2439, %v2446
        %s2448 = sld [smem:[#allocation8 + $0x53]]
        %v2449 = vstv %s2448
        %v2450 = vmul.f32 %v2449, %v2336
        %s2451 = sld [smem:[#allocation8 + $0xa7]]
        %v2452 = vstv %s2451
        %v2453 = vmul.f32 %v2452, %v2352
        %v2454 = vadd.f32 %v2450, %v2453
        %v2455 = vadd.f32 %v2447, %v2454
        %s2456 = sld [smem:[#allocation8 + $0xb5]]
        %v2457 = vstv %s2456
        %v2458 = vadd.f32 %v2455, %v2457
        %vm2459 = vcmp.gt.f32.partialorder %v2458, 0.0
        %v2460 = vmul.f32 %v2404, %v2458
        %v2461 = vsel %vm2459, %v2458, %v2460
        %v2462 = vmul.f32 %v2461, %v336
        %v2463 = vadd.f32 %v2462, %v2321
        %s2464 = sld [smem:[#allocation8 + $0xca]]
        %v2465 = vstv %s2464
        %v2466 = vmul.f32 %v2465, %v2408
        %s2467 = sld [smem:[#allocation8 + $0xcb]]
        %v2468 = vstv %s2467
        %v2469 = vmul.f32 %v2468, %v2463
        %v2470 = vadd.f32 %v2466, %v2469
        %s2471 = sld [smem:[#allocation8 + $0xcc]]
        %v2473 = vrot.slane %v2408, 7
        %v2475 = vsel %vm432, 0.0, %v2473
        %v2476 = vrot.slane %v2408, 1
        %v2478 = vsel %vm453, %v2476, 0.0
        %v2480 = vrot.slane %v2463, 7
        %v2482 = vsel %vm432, 0.0, %v2480
        %v2483 = vrot.slane %v2463, 1
        %v2485 = vsel %vm453, %v2483, 0.0
        %2486 = vrot.lane.b32.xlu0 %v2408, 1
        %v2487 = vpop.permute.xlu0 %2486
        %v2489 = vsel %vm642, 0.0, %v2487
        %2490 = vrot.lane.b32.xlu0 %v2408, 127
        %v2491 = vpop.permute.xlu0 %2490
        %v2493 = vsel %vm727, %v2491, 0.0
        %2494 = vrot.lane.b32.xlu0 %v2463, 1
        %v2495 = vpop.permute.xlu0 %2494
        %v2497 = vsel %vm642, 0.0, %v2495
        %2498 = vrot.lane.b32.xlu0 %v2463, 127
        %v2499 = vpop.permute.xlu0 %2498
        %v2501 = vsel %vm727, %v2499, 0.0
        %s2502 = sld [smem:[#allocation8 + $0xbd]]
        %v2503 = vstv %s2502
        %v2504 = vmul.f32 %v2503, %v2475
        %s2505 = sld [smem:[#allocation8 + $0xc3]]
        %v2506 = vstv %s2505
        %v2507 = vmul.f32 %v2506, %v2489
        %v2508 = vadd.f32 %v2504, %v2507
        %s2509 = sld [smem:[#allocation8 + $0xbe]]
        %v2510 = vstv %s2509
        %v2511 = vmul.f32 %v2510, %v2408
        %s2512 = sld [smem:[#allocation8 + $0xc4]]
        %v2513 = vstv %s2512
        %v2514 = vmul.f32 %v2513, %v2408
        %v2515 = vadd.f32 %v2511, %v2514
        %v2516 = vadd.f32 %v2508, %v2515
        %s2517 = sld [smem:[#allocation8 + $0xbf]]
        %v2518 = vstv %s2517
        %v2519 = vmul.f32 %v2518, %v2478
        %s2520 = sld [smem:[#allocation8 + $0xc5]]
        %v2521 = vstv %s2520
        %v2522 = vmul.f32 %v2521, %v2493
        %v2523 = vadd.f32 %v2519, %v2522
        %v2524 = vadd.f32 %v2516, %v2523
        %s2525 = sld [smem:[#allocation8 + $0xc0]]
        %v2526 = vstv %s2525
        %v2527 = vmul.f32 %v2526, %v2482
        %s2528 = sld [smem:[#allocation8 + $0xc6]]
        %v2529 = vstv %s2528
        %v2530 = vmul.f32 %v2529, %v2497
        %v2531 = vadd.f32 %v2527, %v2530
        %v2532 = vadd.f32 %v2524, %v2531
        %s2533 = sld [smem:[#allocation8 + $0xc1]]
        %v2534 = vstv %s2533
        %v2535 = vmul.f32 %v2534, %v2463
        %s2536 = sld [smem:[#allocation8 + $0xc7]]
        %v2537 = vstv %s2536
        %v2538 = vmul.f32 %v2537, %v2463
        %v2539 = vadd.f32 %v2535, %v2538
        %v2540 = vadd.f32 %v2532, %v2539
        %s2541 = sld [smem:[#allocation8 + $0xc2]]
        %v2542 = vstv %s2541
        %v2543 = vmul.f32 %v2542, %v2485
        %s2544 = sld [smem:[#allocation8 + $0xc8]]
        %v2545 = vstv %s2544
        %v2546 = vmul.f32 %v2545, %v2501
        %v2547 = vadd.f32 %v2543, %v2546
        %v2548 = vadd.f32 %v2540, %v2547
        %s2549 = sld [smem:[#allocation8 + $0xc9]]
        %v2550 = vstv %s2549
        %v2551 = vadd.f32 %v2548, %v2550
        %vm2552 = vcmp.gt.f32.partialorder %v2551, 0.0
        %v2553 = vstv %s2471
        %v2554 = vmul.f32 %v2553, %v2551
        %v2555 = vsel %vm2552, %v2551, %v2554
        %v2556 = vmul.f32 %v2555, %v336
        %v2557 = vadd.f32 %v2556, %v2470
        %v2558 = vxor.u32 %v2557, 2147483648
        %v2559 = vmul.f32 %v2558, 1.442695
        %v2560 = vpow.pop %v2559
        %v2561 = vadd.f32 %v2560, 1.0
        %v2562 = vrcp.pop %v2561
        %v2563 = vmul.f32 1.0, %v2562
        %v2564 = vlaneseq
        %v2565 = vshrl.u32 %v2564, 7
        %v2566 = vsub.s32 0, %v2565
        %v2567 = vrot.slane %v2563, %v2566
        %2569 = vbcast.lane.b32.xlu0 %v2567, 256
        %v2570 = vpop.permute.xlu0 %2569
        %s2572 = sor.u32 256, 8
        %2573 = vbcast.lane.b32.xlu0 %v2567, %s2572
        %v2574 = vpop.permute.xlu0 %2573
        %v2575 = vlaneseq
        %v2576 = vshrl.u32 %v2575, 7
        %v2577 = vsub.s32 1, %v2576
        %v2578 = vrot.slane %v2563, %v2577
        %2580 = vbcast.lane.b32.xlu0 %v2578, 256
        %v2581 = vpop.permute.xlu0 %2580
        %s2583 = sor.u32 256, 8
        %2584 = vbcast.lane.b32.xlu0 %v2578, %s2583
        %v2585 = vpop.permute.xlu0 %2584
        %v2586 = vlaneseq
        %v2587 = vshrl.u32 %v2586, 7
        %v2588 = vsub.s32 2, %v2587
        %v2589 = vrot.slane %v2563, %v2588
        %2591 = vbcast.lane.b32.xlu0 %v2589, 256
        %v2592 = vpop.permute.xlu0 %2591
        %s2594 = sor.u32 256, 8
        %2595 = vbcast.lane.b32.xlu0 %v2589, %s2594
        %v2596 = vpop.permute.xlu0 %2595
        %v2597 = vlaneseq
        %v2598 = vshrl.u32 %v2597, 7
        %v2599 = vsub.s32 3, %v2598
        %v2600 = vrot.slane %v2563, %v2599
        %2602 = vbcast.lane.b32.xlu0 %v2600, 256
        %v2603 = vpop.permute.xlu0 %2602
        %s2605 = sor.u32 256, 8
        %2606 = vbcast.lane.b32.xlu0 %v2600, %s2605
        %v2607 = vpop.permute.xlu0 %2606
        %v2608 = vlaneseq
        %v2609 = vshrl.u32 %v2608, 7
        %v2610 = vsub.s32 4, %v2609
        %v2611 = vrot.slane %v2563, %v2610
        %2613 = vbcast.lane.b32.xlu0 %v2611, 256
        %v2614 = vpop.permute.xlu0 %2613
        %s2616 = sor.u32 256, 8
        %2617 = vbcast.lane.b32.xlu0 %v2611, %s2616
        %v2618 = vpop.permute.xlu0 %2617
        %v2619 = vlaneseq
        %v2620 = vshrl.u32 %v2619, 7
        %v2621 = vsub.s32 5, %v2620
        %v2622 = vrot.slane %v2563, %v2621
        %2624 = vbcast.lane.b32.xlu0 %v2622, 256
        %v2625 = vpop.permute.xlu0 %2624
        %s2627 = sor.u32 256, 8
        %2628 = vbcast.lane.b32.xlu0 %v2622, %s2627
        %v2629 = vpop.permute.xlu0 %2628
        %v2630 = vlaneseq
        %v2631 = vshrl.u32 %v2630, 7
        %v2632 = vsub.s32 6, %v2631
        %v2633 = vrot.slane %v2563, %v2632
        %2635 = vbcast.lane.b32.xlu0 %v2633, 256
        %v2636 = vpop.permute.xlu0 %2635
        %s2638 = sor.u32 256, 8
        %2639 = vbcast.lane.b32.xlu0 %v2633, %s2638
        %v2640 = vpop.permute.xlu0 %2639
        %v2641 = vlaneseq
        %v2642 = vshrl.u32 %v2641, 7
        %v2643 = vsub.s32 7, %v2642
        %v2644 = vrot.slane %v2563, %v2643
        %2646 = vbcast.lane.b32.xlu0 %v2644, 256
        %v2647 = vpop.permute.xlu0 %2646
        %s2649 = sor.u32 256, 8
        %2650 = vbcast.lane.b32.xlu0 %v2644, %s2649
        %v2651 = vpop.permute.xlu0 %2650
        %v2652 = vmul.f32 %v240, %v2570
        %v2653 = vmul.f32 %v241, %v2574
        %v2654 = vmul.f32 %v242, %v2581
        %v2655 = vmul.f32 %v243, %v2585
        %v2656 = vmul.f32 %v244, %v2592
        %v2657 = vmul.f32 %v245, %v2596
        %v2658 = vmul.f32 %v246, %v2603
        %v2659 = vmul.f32 %v247, %v2607
        %v2660 = vmul.f32 %v248, %v2614
        %v2661 = vmul.f32 %v249, %v2618
        %v2662 = vmul.f32 %v250, %v2625
        %v2663 = vmul.f32 %v251, %v2629
        %v2664 = vmul.f32 %v252, %v2636
        %v2665 = vmul.f32 %v253, %v2640
        %v2666 = vmul.f32 %v254, %v2647
        %v2667 = vmul.f32 %v255, %v2651
        %2668 = vst [vmem:[%s239] sm:$0xff] %v2652
        %2669 = vst [vmem:[%s239 + $0x8] sm:$0xff] %v2653
        %2670 = vst [vmem:[%s239 + $0x10] sm:$0xff] %v2654
        %2671 = vst [vmem:[%s239 + $0x18] sm:$0xff] %v2655
        %2672 = vst [vmem:[%s239 + $0x20] sm:$0xff] %v2656
        %2673 = vst [vmem:[%s239 + $0x28] sm:$0xff] %v2657
        %2674 = vst [vmem:[%s239 + $0x30] sm:$0xff] %v2658
        %2675 = vst [vmem:[%s239 + $0x38] sm:$0xff] %v2659
        %2676 = vst [vmem:[%s239 + $0x40] sm:$0xff] %v2660
        %2677 = vst [vmem:[%s239 + $0x48] sm:$0xff] %v2661
        %2678 = vst [vmem:[%s239 + $0x50] sm:$0xff] %v2662
        %2679 = vst [vmem:[%s239 + $0x58] sm:$0xff] %v2663
        %2680 = vst [vmem:[%s239 + $0x60] sm:$0xff] %v2664
        %2681 = vst [vmem:[%s239 + $0x68] sm:$0xff] %v2665
        %2682 = vst [vmem:[%s239 + $0x70] sm:$0xff] %v2666
        %2683 = vst [vmem:[%s239 + $0x78] sm:$0xff] %v2667
        %s2684 = sand.u32 %s105, 1
        %s2685 = scalar_lea.sflag [#allocation4], %s2684
        %s2686 = sand.u32 %s105, 1
        %s2687 = smul.addr %s2686, 128
        %s2688 = scalar_lea.vmem [#allocation9], %s2687
        // Predicated region
        $region45: #{tpu_custom_call.1} parent=31 // pred_check
          %p2689 = pneg %p115
        $region46: #{tpu_custom_call.1} parent=31 // pred_check_branch
          %2691 = sbr.rel (%p2689) target = $region48
        $region47: #{tpu_custom_call.1} parent=31 // pred_region
          %s2693 = ssub.s32 2048, 2048
          %2694 = vsyncadd %s2685, %s2693
          %s2695 = smul.addr %s24, 16
          %s2696 = smul.addr %s2695, 128
          %s2697 = scalar_lea.hbm %s3, %s2696
          %s2698 = sshll.u32 %s2688, 4
          %s2699 = int_to_ptr.vmem [resolvable:$true] %s2698
          %2704 = dma.vmem_to_hbm [thread:$0]  %s2699, 2048, %s2697, %s2685, 128, 128, 8
        $region48: #{tpu_custom_call.1} parent=31 // pred_fallthru
          _
      $region32: #{tpu_custom_call.1} parent=5 // pred_fallthru
        _
      %p2705 = scmp.le.s32.totalorder 2, %s19
      // Predicated region
      $region49: #{tpu_custom_call.1} parent=5 // pred_check
        %p2706 = pneg %p2705
      $region50: #{tpu_custom_call.1} parent=5 // pred_check_branch
        %2708 = sbr.rel (%p2706) target = $region52
      $region51: #{tpu_custom_call.1} parent=5 // pred_region
        %s2709 = ssub.s32 %s19, 2
        // Predicated region
        $region53: #{tpu_custom_call.1} parent=51 // pred_check
          %p2710 = pneg %p121
        $region54: #{tpu_custom_call.1} parent=51 // pred_check_branch
          %2712 = sbr.rel (%p2710) target = $region56
        $region55: #{tpu_custom_call.1} parent=51 // pred_region
          %s2713 = sand.u32 %s106, 1
          %s2714 = scalar_lea.sflag [#allocation4], %s2713
          %s2715 = sand.u32 %s106, 1
          %s2716 = smul.addr %s2715, 128
          %s2717 = scalar_lea.vmem [#allocation9], %s2716
          %2718 = dma.done %s2714, 2048
        $region56: #{tpu_custom_call.1} parent=51 // pred_fallthru
          _
      $region52: #{tpu_custom_call.1} parent=5 // pred_fallthru
        _
    $region6: #{tpu_custom_call.1} parent=1 // loop_footer
      %s23 = sadd.s32 1, %s19
    $region7: #{tpu_custom_call.1} parent=1 // loop_footer_branch
      %18 = sbr.rel target = $region3
    $region8: #{tpu_custom_call.1} parent=1 // loop_exit
      _
    %2719 = vsyncpa [#allocation3], 1
    %s2720 = scalar_lea.sflag [#allocation3], 1
    %2721 = vsyncpa %s2720, 1
    %2722 = vsyncpa [#allocation7], 1
    %s2723 = scalar_lea.sflag [#allocation7], 1
    %2724 = vsyncpa %s2723, 1
    %2725 = vsyncpa [#allocation4], 1
    %s2726 = scalar_lea.sflag [#allocation4], 1
    %2727 = vsyncpa %s2726, 1
    %2728 = vsyncpa [#allocation5], 1
    %s2729 = scalar_lea.sflag [#allocation5], 1
    %2730 = vsyncpa %s2729, 1

</llo_original>
